<compile_context>
chip_gen: v7x
topology: tpu7x:2x2x1
jax: 0.10.0
libtpu: 0.0.40
codegen_flags: <defaults>
</compile_context>

<pallas_src>
import jax
import jax.numpy as jnp
from jax import lax
from jax.experimental import pallas as pl
from jax.experimental.pallas import tpu as pltpu

EMBED_DIM = 200
EMBED_PAD = 256   # zero-pad K dim to a multiple of 128 lanes
HIDDEN_DIM = 256


# ---------------------------------------------------------------------------
# Fused LSTM encoder + relu + max-over-time.  One grid step = one side (L/R).
# PyTorch gate order in weight_ih_l0 / weight_hh_l0 is [i, f, g, o].
# ---------------------------------------------------------------------------
def lstm_maxpool_kernel(x_ref, wih_ref, whh_ref, b_ref, out_ref, gx_sc):
    """
    x_ref   : (1, S*B, Ep) bf16   embedded tokens, seq-major rows (t*B + b)
    wih_ref : (Ep, 4H)     bf16
    whh_ref : (H, 4H)      bf16
    b_ref   : (1, 4H)      f32    b_ih + b_hh
    out_ref : (1, B, H)    f32    max_t relu(h_t)
    gx_sc   : (S*B, 4H)    f32    hoisted input projection (scratch)
    """
    B = out_ref.shape[1]
    H = out_ref.shape[2]
    SB = x_ref.shape[1]
    S = SB // B

    # Prologue: hoist the input projection out of the recurrence — one large,
    # MXU-friendly GEMM over all timesteps, bias added once.
    gx_sc[...] = (
        jnp.dot(x_ref[0], wih_ref[...], preferred_element_type=jnp.float32)
        + b_ref[...]
    )

    def step(t, carry):
        h, c, mx = carry                                   # (B, H) f32 each
        gates = gx_sc[pl.ds(t * B, B), :] + jnp.dot(
            h.astype(jnp.bfloat16), whh_ref[...],
            preferred_element_type=jnp.float32)            # (B, 4H) f32
        i_g = jax.nn.sigmoid(gates[:, 0 * H:1 * H])
        f_g = jax.nn.sigmoid(gates[:, 1 * H:2 * H])
        g_g = jnp.tanh(gates[:, 2 * H:3 * H])
        o_g = jax.nn.sigmoid(gates[:, 3 * H:4 * H])
        c = f_g * c + i_g * g_g
        h = o_g * jnp.tanh(c)
        # relu followed by max over t == running max with a 0-initialized acc.
        mx = jnp.maximum(mx, h)
        return h, c, mx

    zeros = jnp.zeros((B, H), jnp.float32)
    _, _, mx = lax.fori_loop(0, S, step, (zeros, zeros, zeros), unroll=True)
    out_ref[0] = mx


def lstm_encode_maxpool_pair(x_pair, w_ih_t, w_hh_t, bias, *, batch):
    """x_pair: (2, S*B, Ep) bf16 -> (2, B, H) f32 (per-side max_t relu(LSTM))."""
    n_side, SB, Ep = x_pair.shape
    H = w_hh_t.shape[0]
    return pl.pallas_call(
        lstm_maxpool_kernel,
        out_shape=jax.ShapeDtypeStruct((n_side, batch, H), jnp.float32),
        grid_spec=pltpu.PrefetchScalarGridSpec(
            num_scalar_prefetch=0,
            grid=(n_side,),
            in_specs=[
                pl.BlockSpec((1, SB, Ep), lambda s: (s, 0, 0)),
                pl.BlockSpec((Ep, 4 * H), lambda s: (0, 0)),
                pl.BlockSpec((H, 4 * H), lambda s: (0, 0)),
                pl.BlockSpec((1, 4 * H), lambda s: (0, 0)),
            ],
            out_specs=pl.BlockSpec((1, batch, H), lambda s: (s, 0, 0)),
            scratch_shapes=[pltpu.VMEM((SB, 4 * H), jnp.float32)],
        ),
        compiler_params=pltpu.CompilerParams(
            # Left/right recurrences are independent -> shard across TCs on v7x.
            dimension_semantics=("parallel",),
        ),
    )(x_pair, w_ih_t, w_hh_t, bias)


# ---------------------------------------------------------------------------
# Head: |l - r| -> dense_hidden (256->512) + relu -> dense_out (512->1).
# ---------------------------------------------------------------------------
def head_kernel(enc_ref, w1_ref, b1_ref, w2_ref, b2_ref, out_ref):
    diff = jnp.abs(enc_ref[0] - enc_ref[1])                       # (B, 256) f32
    hidden = jnp.maximum(
        jnp.dot(diff.astype(jnp.bfloat16), w1_ref[...],
                preferred_element_type=jnp.float32) + b1_ref[...],
        0.0,
    )                                                             # (B, 512) f32
    # 512 -> 1 projection as a VPU multiply + lane reduction (avoids N=1 matmul).
    out_ref[...] = (
        jnp.sum(hidden * w2_ref[...], axis=-1, keepdims=True) + b2_ref[...]
    )                                                             # (B, 1)


def siamese_head(enc_pair, w1_t, b1, w2, b2):
    B = enc_pair.shape[1]
    vmem = pl.BlockSpec(memory_space=pltpu.MemorySpace.VMEM)
    return pl.pallas_call(
        head_kernel,
        out_shape=jax.ShapeDtypeStruct((B, 1), jnp.float32),
        in_specs=[vmem, vmem, vmem, vmem, vmem],
        out_specs=vmem,
    )(enc_pair, w1_t, b1, w2, b2)


# ---------------------------------------------------------------------------
# Full forward (eval-mode: dropouts are identity).
# ---------------------------------------------------------------------------
def siamese_forward(x_left, x_right, params):
    B, S = x_left.shape
    pad = EMBED_PAD - EMBED_DIM

    # --- parameter prep (plain JAX glue; done once under jit) ---
    embed_p = jnp.pad(params["embed"], ((0, 0), (0, pad)))                  # (V, Ep)
    w_ih_t = jnp.pad(params["w_ih"].T, ((0, pad), (0, 0))).astype(jnp.bfloat16)  # (Ep,4H)
    w_hh_t = params["w_hh"].T.astype(jnp.bfloat16)                          # (H, 4H)
    bias = (params["b_ih"] + params["b_hh"])[None]                          # (1, 4H) f32

    # Embedding lookup gathered directly in seq-major order (no permuted copy),
    # left/right stacked so one pallas_call handles both sides.
    # TODO(synk): embed_dropout / dense_dropout are identity (inference semantics).
    xl = embed_p[x_left.T].reshape(S * B, EMBED_PAD)
    xr = embed_p[x_right.T].reshape(S * B, EMBED_PAD)
    x_pair = jnp.stack([xl, xr], axis=0).astype(jnp.bfloat16)               # (2,S*B,Ep)

    enc_pair = lstm_encode_maxpool_pair(x_pair, w_ih_t, w_hh_t, bias, batch=B)  # (2,B,H)

    return siamese_head(
        enc_pair,
        params["w1"].T.astype(jnp.bfloat16),  # (256, 512)
        params["b1"][None],                   # (1, 512)
        params["w2"],                         # (1, 512)  row for VPU reduce
        params["b2"][None],                   # (1, 1)
    )


def make_params(key, vocab_size):
    H, E = HIDDEN_DIM, EMBED_DIM
    ks = jax.random.split(key, 9)
    return {
        "embed": jax.random.normal(ks[0], (vocab_size, E), jnp.float32) * 0.1,
        "w_ih": jax.random.normal(ks[1], (4 * H, E), jnp.float32) * 0.05,
        "w_hh": jax.random.normal(ks[2], (4 * H, H), jnp.float32) * 0.05,
        "b_ih": jax.random.normal(ks[3], (4 * H,), jnp.float32) * 0.05,
        "b_hh": jax.random.normal(ks[4], (4 * H,), jnp.float32) * 0.05,
        "w1": jax.random.normal(ks[5], (512, H), jnp.float32) * 0.05,   # dense_hidden
        "b1": jax.random.normal(ks[6], (512,), jnp.float32) * 0.05,
        "w2": jax.random.normal(ks[7], (1, 512), jnp.float32) * 0.05,   # dense_out
        "b2": jax.random.normal(ks[8], (1,), jnp.float32) * 0.05,
    }


if __name__ == "__main__":
    key = jax.random.PRNGKey(0)
    k_params, k_l, k_r = jax.random.split(key, 3)

    vocab_size, batch, seq = 50, 2, 8
    params = make_params(k_params, vocab_size)

    x_left = jax.random.randint(k_l, (batch, seq), 0, vocab_size, dtype=jnp.int32)
    x_right = jax.random.randint(k_r, (batch, seq), 0, vocab_size, dtype=jnp.int32)

    logits = jax.jit(siamese_forward)(x_left, x_right, params)
    jax.block_until_ready(logits)
    assert logits.shape == (batch, 1)
    print("KERNEL_OK")
</pallas_src>

<mosaic_0001>
module attributes {stable_mosaic.version = 11 : i64} {
  func.func @lstm_maxpool_kernel(%arg0: i32, %arg1: memref<1x16x256xbf16, #tpu.memory_space<vmem>>, %arg2: memref<256x1024xbf16, #tpu.memory_space<vmem>>, %arg3: memref<256x1024xbf16, #tpu.memory_space<vmem>>, %arg4: memref<1x1024xf32, #tpu.memory_space<vmem>>, %arg5: memref<1x2x256xf32, #tpu.memory_space<vmem>>, %arg6: memref<16x1024xf32, #tpu.memory_space<vmem>>) attributes {dimension_semantics = [#tpu.dimension_semantics<parallel>], iteration_bounds = array<i64: 2>, scalar_prefetch = 0 : i64, scratch_operands = 1 : i64, tpu.core_type = #tpu.core_type<tc>, window_params = [{transform_indices = @transform_0, window_bounds = array<i64: 1, 16, 256>}, {pipeline_mode = #tpu.pipeline_mode<synchronous>, transform_indices = @transform_1, window_bounds = array<i64: 256, 1024>}, {pipeline_mode = #tpu.pipeline_mode<synchronous>, transform_indices = @transform_2, window_bounds = array<i64: 256, 1024>}, {pipeline_mode = #tpu.pipeline_mode<synchronous>, transform_indices = @transform_3, window_bounds = array<i64: 1, 1024>}, {transform_indices = @transform_4, window_bounds = array<i64: 1, 2, 256>}]} {
    %c0 = arith.constant 0 : index
    %c0_0 = arith.constant 0 : index
    %c0_1 = arith.constant 0 : index
    %0 = vector.load %arg1[%c0, %c0_0, %c0_1] : memref<1x16x256xbf16, #tpu.memory_space<vmem>>, vector<1x16x256xbf16>
    %1 = vector.shape_cast %0 : vector<1x16x256xbf16> to vector<16x256xbf16>
    %c0_2 = arith.constant 0 : index
    %c0_3 = arith.constant 0 : index
    %2 = vector.load %arg2[%c0_2, %c0_3] : memref<256x1024xbf16, #tpu.memory_space<vmem>>, vector<256x1024xbf16>
    %cst = arith.constant dense<0.000000e+00> : vector<16x1024xf32>
    %3 = tpu.matmul %1, %2, %cst {dimension_numbers = #tpu.dot_dimension_numbers<[1], [0], [0], [1], [0, 0, 1, 1], [], []>} : vector<16x256xbf16>, vector<256x1024xbf16>, vector<16x1024xf32> -> vector<16x1024xf32>
    %c0_4 = arith.constant 0 : index
    %c0_5 = arith.constant 0 : index
    %4 = vector.load %arg4[%c0_4, %c0_5] : memref<1x1024xf32, #tpu.memory_space<vmem>>, vector<1x1024xf32>
    %5 = vector.broadcast %4 : vector<1x1024xf32> to vector<16x1024xf32>
    %6 = arith.addf %3, %5 : vector<16x1024xf32>
    %c0_6 = arith.constant 0 : index
    %c0_7 = arith.constant 0 : index
    %7 = vector.load %arg6[%c0_6, %c0_7] : memref<16x1024xf32, #tpu.memory_space<vmem>>, vector<16x1024xf32>
    tpu.vector_store %arg6[%c0_6, %c0_7], %6 {strides = array<i32>} : memref<16x1024xf32, #tpu.memory_space<vmem>>, vector<16x1024xf32>,
    %cst_8 = arith.constant 0.000000e+00 : f32
    %8 = vector.broadcast %cst_8 : f32 to vector<2x256xf32>
    %c0_i32 = arith.constant 0 : i32
    %c2_i32 = arith.constant 2 : i32
    %9 = arith.muli %c0_i32, %c2_i32 : i32
    %10 = arith.index_cast %9 : i32 to index
    %c0_9 = arith.constant 0 : index
    %11 = vector.load %arg6[%10, %c0_9] : memref<16x1024xf32, #tpu.memory_space<vmem>>, vector<2x1024xf32>
    %12 = arith.truncf %8 : vector<2x256xf32> to vector<2x256xbf16>
    %c0_10 = arith.constant 0 : index
    %c0_11 = arith.constant 0 : index
    %13 = vector.load %arg3[%c0_10, %c0_11] : memref<256x1024xbf16, #tpu.memory_space<vmem>>, vector<256x1024xbf16>
    %cst_12 = arith.constant dense<0.000000e+00> : vector<2x1024xf32>
    %14 = tpu.matmul %12, %13, %cst_12 {dimension_numbers = #tpu.dot_dimension_numbers<[1], [0], [0], [1], [0, 0, 1, 1], [], []>} : vector<2x256xbf16>, vector<256x1024xbf16>, vector<2x1024xf32> -> vector<2x1024xf32>
    %15 = arith.addf %11, %14 : vector<2x1024xf32>
    %16 = vector.extract_strided_slice %15 {offsets = [0, 0], sizes = [2, 256], strides = [1, 1]} : vector<2x1024xf32> to vector<2x256xf32>
    %17 = arith.negf %16 : vector<2x256xf32>
    %18 = math.exp %17 : vector<2x256xf32>
    %cst_13 = arith.constant 1.000000e+00 : f32
    %19 = vector.broadcast %cst_13 : f32 to vector<2x256xf32>
    %20 = arith.addf %19, %18 : vector<2x256xf32>
    %21 = arith.divf %19, %20 : vector<2x256xf32>
    %22 = vector.extract_strided_slice %15 {offsets = [0, 256], sizes = [2, 256], strides = [1, 1]} : vector<2x1024xf32> to vector<2x256xf32>
    %23 = arith.negf %22 : vector<2x256xf32>
    %24 = math.exp %23 : vector<2x256xf32>
    %cst_14 = arith.constant 1.000000e+00 : f32
    %25 = vector.broadcast %cst_14 : f32 to vector<2x256xf32>
    %26 = arith.addf %25, %24 : vector<2x256xf32>
    %27 = arith.divf %25, %26 : vector<2x256xf32>
    %28 = vector.extract_strided_slice %15 {offsets = [0, 512], sizes = [2, 256], strides = [1, 1]} : vector<2x1024xf32> to vector<2x256xf32>
    %29 = math.tanh %28 : vector<2x256xf32>
    %30 = vector.extract_strided_slice %15 {offsets = [0, 768], sizes = [2, 256], strides = [1, 1]} : vector<2x1024xf32> to vector<2x256xf32>
    %31 = arith.negf %30 : vector<2x256xf32>
    %32 = math.exp %31 : vector<2x256xf32>
    %cst_15 = arith.constant 1.000000e+00 : f32
    %33 = vector.broadcast %cst_15 : f32 to vector<2x256xf32>
    %34 = arith.addf %33, %32 : vector<2x256xf32>
    %35 = arith.divf %33, %34 : vector<2x256xf32>
    %36 = arith.mulf %27, %8 : vector<2x256xf32>
    %37 = arith.mulf %21, %29 : vector<2x256xf32>
    %38 = arith.addf %36, %37 : vector<2x256xf32>
    %39 = math.tanh %38 : vector<2x256xf32>
    %40 = arith.mulf %35, %39 : vector<2x256xf32>
    %41 = arith.maximumf %8, %40 : vector<2x256xf32>
    %c1_i32 = arith.constant 1 : i32
    %c2_i32_16 = arith.constant 2 : i32
    %42 = arith.muli %c1_i32, %c2_i32_16 : i32
    %43 = arith.index_cast %42 : i32 to index
    %c0_17 = arith.constant 0 : index
    %44 = vector.load %arg6[%43, %c0_17] : memref<16x1024xf32, #tpu.memory_space<vmem>>, vector<2x1024xf32>
    %45 = arith.truncf %40 : vector<2x256xf32> to vector<2x256xbf16>
    %c0_18 = arith.constant 0 : index
    %c0_19 = arith.constant 0 : index
    %46 = vector.load %arg3[%c0_18, %c0_19] : memref<256x1024xbf16, #tpu.memory_space<vmem>>, vector<256x1024xbf16>
    %cst_20 = arith.constant dense<0.000000e+00> : vector<2x1024xf32>
    %47 = tpu.matmul %45, %46, %cst_20 {dimension_numbers = #tpu.dot_dimension_numbers<[1], [0], [0], [1], [0, 0, 1, 1], [], []>} : vector<2x256xbf16>, vector<256x1024xbf16>, vector<2x1024xf32> -> vector<2x1024xf32>
    %48 = arith.addf %44, %47 : vector<2x1024xf32>
    %49 = vector.extract_strided_slice %48 {offsets = [0, 0], sizes = [2, 256], strides = [1, 1]} : vector<2x1024xf32> to vector<2x256xf32>
    %50 = arith.negf %49 : vector<2x256xf32>
    %51 = math.exp %50 : vector<2x256xf32>
    %cst_21 = arith.constant 1.000000e+00 : f32
    %52 = vector.broadcast %cst_21 : f32 to vector<2x256xf32>
    %53 = arith.addf %52, %51 : vector<2x256xf32>
    %54 = arith.divf %52, %53 : vector<2x256xf32>
    %55 = vector.extract_strided_slice %48 {offsets = [0, 256], sizes = [2, 256], strides = [1, 1]} : vector<2x1024xf32> to vector<2x256xf32>
    %56 = arith.negf %55 : vector<2x256xf32>
    %57 = math.exp %56 : vector<2x256xf32>
    %cst_22 = arith.constant 1.000000e+00 : f32
    %58 = vector.broadcast %cst_22 : f32 to vector<2x256xf32>
    %59 = arith.addf %58, %57 : vector<2x256xf32>
    %60 = arith.divf %58, %59 : vector<2x256xf32>
    %61 = vector.extract_strided_slice %48 {offsets = [0, 512], sizes = [2, 256], strides = [1, 1]} : vector<2x1024xf32> to vector<2x256xf32>
    %62 = math.tanh %61 : vector<2x256xf32>
    %63 = vector.extract_strided_slice %48 {offsets = [0, 768], sizes = [2, 256], strides = [1, 1]} : vector<2x1024xf32> to vector<2x256xf32>
    %64 = arith.negf %63 : vector<2x256xf32>
    %65 = math.exp %64 : vector<2x256xf32>
    %cst_23 = arith.constant 1.000000e+00 : f32
    %66 = vector.broadcast %cst_23 : f32 to vector<2x256xf32>
    %67 = arith.addf %66, %65 : vector<2x256xf32>
    %68 = arith.divf %66, %67 : vector<2x256xf32>
    %69 = arith.mulf %60, %38 : vector<2x256xf32>
    %70 = arith.mulf %54, %62 : vector<2x256xf32>
    %71 = arith.addf %69, %70 : vector<2x256xf32>
    %72 = math.tanh %71 : vector<2x256xf32>
    %73 = arith.mulf %68, %72 : vector<2x256xf32>
    %74 = arith.maximumf %41, %73 : vector<2x256xf32>
    %c2_i32_24 = arith.constant 2 : i32
    %c2_i32_25 = arith.constant 2 : i32
    %75 = arith.muli %c2_i32_24, %c2_i32_25 : i32
    %76 = arith.index_cast %75 : i32 to index
    %c0_26 = arith.constant 0 : index
    %77 = vector.load %arg6[%76, %c0_26] : memref<16x1024xf32, #tpu.memory_space<vmem>>, vector<2x1024xf32>
    %78 = arith.truncf %73 : vector<2x256xf32> to vector<2x256xbf16>
    %c0_27 = arith.constant 0 : index
    %c0_28 = arith.constant 0 : index
    %79 = vector.load %arg3[%c0_27, %c0_28] : memref<256x1024xbf16, #tpu.memory_space<vmem>>, vector<256x1024xbf16>
    %cst_29 = arith.constant dense<0.000000e+00> : vector<2x1024xf32>
    %80 = tpu.matmul %78, %79, %cst_29 {dimension_numbers = #tpu.dot_dimension_numbers<[1], [0], [0], [1], [0, 0, 1, 1], [], []>} : vector<2x256xbf16>, vector<256x1024xbf16>, vector<2x1024xf32> -> vector<2x1024xf32>
    %81 = arith.addf %77, %80 : vector<2x1024xf32>
    %82 = vector.extract_strided_slice %81 {offsets = [0, 0], sizes = [2, 256], strides = [1, 1]} : vector<2x1024xf32> to vector<2x256xf32>
    %83 = arith.negf %82 : vector<2x256xf32>
    %84 = math.exp %83 : vector<2x256xf32>
    %cst_30 = arith.constant 1.000000e+00 : f32
    %85 = vector.broadcast %cst_30 : f32 to vector<2x256xf32>
    %86 = arith.addf %85, %84 : vector<2x256xf32>
    %87 = arith.divf %85, %86 : vector<2x256xf32>
    %88 = vector.extract_strided_slice %81 {offsets = [0, 256], sizes = [2, 256], strides = [1, 1]} : vector<2x1024xf32> to vector<2x256xf32>
    %89 = arith.negf %88 : vector<2x256xf32>
    %90 = math.exp %89 : vector<2x256xf32>
    %cst_31 = arith.constant 1.000000e+00 : f32
    %91 = vector.broadcast %cst_31 : f32 to vector<2x256xf32>
    %92 = arith.addf %91, %90 : vector<2x256xf32>
    %93 = arith.divf %91, %92 : vector<2x256xf32>
    %94 = vector.extract_strided_slice %81 {offsets = [0, 512], sizes = [2, 256], strides = [1, 1]} : vector<2x1024xf32> to vector<2x256xf32>
    %95 = math.tanh %94 : vector<2x256xf32>
    %96 = vector.extract_strided_slice %81 {offsets = [0, 768], sizes = [2, 256], strides = [1, 1]} : vector<2x1024xf32> to vector<2x256xf32>
    %97 = arith.negf %96 : vector<2x256xf32>
    %98 = math.exp %97 : vector<2x256xf32>
    %cst_32 = arith.constant 1.000000e+00 : f32
    %99 = vector.broadcast %cst_32 : f32 to vector<2x256xf32>
    %100 = arith.addf %99, %98 : vector<2x256xf32>
    %101 = arith.divf %99, %100 : vector<2x256xf32>
    %102 = arith.mulf %93, %71 : vector<2x256xf32>
    %103 = arith.mulf %87, %95 : vector<2x256xf32>
    %104 = arith.addf %102, %103 : vector<2x256xf32>
    %105 = math.tanh %104 : vector<2x256xf32>
    %106 = arith.mulf %101, %105 : vector<2x256xf32>
    %107 = arith.maximumf %74, %106 : vector<2x256xf32>
    %c3_i32 = arith.constant 3 : i32
    %c2_i32_33 = arith.constant 2 : i32
    %108 = arith.muli %c3_i32, %c2_i32_33 : i32
    %109 = arith.index_cast %108 : i32 to index
    %c0_34 = arith.constant 0 : index
    %110 = vector.load %arg6[%109, %c0_34] : memref<16x1024xf32, #tpu.memory_space<vmem>>, vector<2x1024xf32>
    %111 = arith.truncf %106 : vector<2x256xf32> to vector<2x256xbf16>
    %c0_35 = arith.constant 0 : index
    %c0_36 = arith.constant 0 : index
    %112 = vector.load %arg3[%c0_35, %c0_36] : memref<256x1024xbf16, #tpu.memory_space<vmem>>, vector<256x1024xbf16>
    %cst_37 = arith.constant dense<0.000000e+00> : vector<2x1024xf32>
    %113 = tpu.matmul %111, %112, %cst_37 {dimension_numbers = #tpu.dot_dimension_numbers<[1], [0], [0], [1], [0, 0, 1, 1], [], []>} : vector<2x256xbf16>, vector<256x1024xbf16>, vector<2x1024xf32> -> vector<2x1024xf32>
    %114 = arith.addf %110, %113 : vector<2x1024xf32>
    %115 = vector.extract_strided_slice %114 {offsets = [0, 0], sizes = [2, 256], strides = [1, 1]} : vector<2x1024xf32> to vector<2x256xf32>
    %116 = arith.negf %115 : vector<2x256xf32>
    %117 = math.exp %116 : vector<2x256xf32>
    %cst_38 = arith.constant 1.000000e+00 : f32
    %118 = vector.broadcast %cst_38 : f32 to vector<2x256xf32>
    %119 = arith.addf %118, %117 : vector<2x256xf32>
    %120 = arith.divf %118, %119 : vector<2x256xf32>
    %121 = vector.extract_strided_slice %114 {offsets = [0, 256], sizes = [2, 256], strides = [1, 1]} : vector<2x1024xf32> to vector<2x256xf32>
    %122 = arith.negf %121 : vector<2x256xf32>
    %123 = math.exp %122 : vector<2x256xf32>
    %cst_39 = arith.constant 1.000000e+00 : f32
    %124 = vector.broadcast %cst_39 : f32 to vector<2x256xf32>
    %125 = arith.addf %124, %123 : vector<2x256xf32>
    %126 = arith.divf %124, %125 : vector<2x256xf32>
    %127 = vector.extract_strided_slice %114 {offsets = [0, 512], sizes = [2, 256], strides = [1, 1]} : vector<2x1024xf32> to vector<2x256xf32>
    %128 = math.tanh %127 : vector<2x256xf32>
    %129 = vector.extract_strided_slice %114 {offsets = [0, 768], sizes = [2, 256], strides = [1, 1]} : vector<2x1024xf32> to vector<2x256xf32>
    %130 = arith.negf %129 : vector<2x256xf32>
    %131 = math.exp %130 : vector<2x256xf32>
    %cst_40 = arith.constant 1.000000e+00 : f32
    %132 = vector.broadcast %cst_40 : f32 to vector<2x256xf32>
    %133 = arith.addf %132, %131 : vector<2x256xf32>
    %134 = arith.divf %132, %133 : vector<2x256xf32>
    %135 = arith.mulf %126, %104 : vector<2x256xf32>
    %136 = arith.mulf %120, %128 : vector<2x256xf32>
    %137 = arith.addf %135, %136 : vector<2x256xf32>
    %138 = math.tanh %137 : vector<2x256xf32>
    %139 = arith.mulf %134, %138 : vector<2x256xf32>
    %140 = arith.maximumf %107, %139 : vector<2x256xf32>
    %c4_i32 = arith.constant 4 : i32
    %c2_i32_41 = arith.constant 2 : i32
    %141 = arith.muli %c4_i32, %c2_i32_41 : i32
    %142 = arith.index_cast %141 : i32 to index
    %c0_42 = arith.constant 0 : index
    %143 = vector.load %arg6[%142, %c0_42] : memref<16x1024xf32, #tpu.memory_space<vmem>>, vector<2x1024xf32>
    %144 = arith.truncf %139 : vector<2x256xf32> to vector<2x256xbf16>
    %c0_43 = arith.constant 0 : index
    %c0_44 = arith.constant 0 : index
    %145 = vector.load %arg3[%c0_43, %c0_44] : memref<256x1024xbf16, #tpu.memory_space<vmem>>, vector<256x1024xbf16>
    %cst_45 = arith.constant dense<0.000000e+00> : vector<2x1024xf32>
    %146 = tpu.matmul %144, %145, %cst_45 {dimension_numbers = #tpu.dot_dimension_numbers<[1], [0], [0], [1], [0, 0, 1, 1], [], []>} : vector<2x256xbf16>, vector<256x1024xbf16>, vector<2x1024xf32> -> vector<2x1024xf32>
    %147 = arith.addf %143, %146 : vector<2x1024xf32>
    %148 = vector.extract_strided_slice %147 {offsets = [0, 0], sizes = [2, 256], strides = [1, 1]} : vector<2x1024xf32> to vector<2x256xf32>
    %149 = arith.negf %148 : vector<2x256xf32>
    %150 = math.exp %149 : vector<2x256xf32>
    %cst_46 = arith.constant 1.000000e+00 : f32
    %151 = vector.broadcast %cst_46 : f32 to vector<2x256xf32>
    %152 = arith.addf %151, %150 : vector<2x256xf32>
    %153 = arith.divf %151, %152 : vector<2x256xf32>
    %154 = vector.extract_strided_slice %147 {offsets = [0, 256], sizes = [2, 256], strides = [1, 1]} : vector<2x1024xf32> to vector<2x256xf32>
    %155 = arith.negf %154 : vector<2x256xf32>
    %156 = math.exp %155 : vector<2x256xf32>
    %cst_47 = arith.constant 1.000000e+00 : f32
    %157 = vector.broadcast %cst_47 : f32 to vector<2x256xf32>
    %158 = arith.addf %157, %156 : vector<2x256xf32>
    %159 = arith.divf %157, %158 : vector<2x256xf32>
    %160 = vector.extract_strided_slice %147 {offsets = [0, 512], sizes = [2, 256], strides = [1, 1]} : vector<2x1024xf32> to vector<2x256xf32>
    %161 = math.tanh %160 : vector<2x256xf32>
    %162 = vector.extract_strided_slice %147 {offsets = [0, 768], sizes = [2, 256], strides = [1, 1]} : vector<2x1024xf32> to vector<2x256xf32>
    %163 = arith.negf %162 : vector<2x256xf32>
    %164 = math.exp %163 : vector<2x256xf32>
    %cst_48 = arith.constant 1.000000e+00 : f32
    %165 = vector.broadcast %cst_48 : f32 to vector<2x256xf32>
    %166 = arith.addf %165, %164 : vector<2x256xf32>
    %167 = arith.divf %165, %166 : vector<2x256xf32>
    %168 = arith.mulf %159, %137 : vector<2x256xf32>
    %169 = arith.mulf %153, %161 : vector<2x256xf32>
    %170 = arith.addf %168, %169 : vector<2x256xf32>
    %171 = math.tanh %170 : vector<2x256xf32>
    %172 = arith.mulf %167, %171 : vector<2x256xf32>
    %173 = arith.maximumf %140, %172 : vector<2x256xf32>
    %c5_i32 = arith.constant 5 : i32
    %c2_i32_49 = arith.constant 2 : i32
    %174 = arith.muli %c5_i32, %c2_i32_49 : i32
    %175 = arith.index_cast %174 : i32 to index
    %c0_50 = arith.constant 0 : index
    %176 = vector.load %arg6[%175, %c0_50] : memref<16x1024xf32, #tpu.memory_space<vmem>>, vector<2x1024xf32>
    %177 = arith.truncf %172 : vector<2x256xf32> to vector<2x256xbf16>
    %c0_51 = arith.constant 0 : index
    %c0_52 = arith.constant 0 : index
    %178 = vector.load %arg3[%c0_51, %c0_52] : memref<256x1024xbf16, #tpu.memory_space<vmem>>, vector<256x1024xbf16>
    %cst_53 = arith.constant dense<0.000000e+00> : vector<2x1024xf32>
    %179 = tpu.matmul %177, %178, %cst_53 {dimension_numbers = #tpu.dot_dimension_numbers<[1], [0], [0], [1], [0, 0, 1, 1], [], []>} : vector<2x256xbf16>, vector<256x1024xbf16>, vector<2x1024xf32> -> vector<2x1024xf32>
    %180 = arith.addf %176, %179 : vector<2x1024xf32>
    %181 = vector.extract_strided_slice %180 {offsets = [0, 0], sizes = [2, 256], strides = [1, 1]} : vector<2x1024xf32> to vector<2x256xf32>
    %182 = arith.negf %181 : vector<2x256xf32>
    %183 = math.exp %182 : vector<2x256xf32>
    %cst_54 = arith.constant 1.000000e+00 : f32
    %184 = vector.broadcast %cst_54 : f32 to vector<2x256xf32>
    %185 = arith.addf %184, %183 : vector<2x256xf32>
    %186 = arith.divf %184, %185 : vector<2x256xf32>
    %187 = vector.extract_strided_slice %180 {offsets = [0, 256], sizes = [2, 256], strides = [1, 1]} : vector<2x1024xf32> to vector<2x256xf32>
    %188 = arith.negf %187 : vector<2x256xf32>
    %189 = math.exp %188 : vector<2x256xf32>
    %cst_55 = arith.constant 1.000000e+00 : f32
    %190 = vector.broadcast %cst_55 : f32 to vector<2x256xf32>
    %191 = arith.addf %190, %189 : vector<2x256xf32>
    %192 = arith.divf %190, %191 : vector<2x256xf32>
    %193 = vector.extract_strided_slice %180 {offsets = [0, 512], sizes = [2, 256], strides = [1, 1]} : vector<2x1024xf32> to vector<2x256xf32>
    %194 = math.tanh %193 : vector<2x256xf32>
    %195 = vector.extract_strided_slice %180 {offsets = [0, 768], sizes = [2, 256], strides = [1, 1]} : vector<2x1024xf32> to vector<2x256xf32>
    %196 = arith.negf %195 : vector<2x256xf32>
    %197 = math.exp %196 : vector<2x256xf32>
    %cst_56 = arith.constant 1.000000e+00 : f32
    %198 = vector.broadcast %cst_56 : f32 to vector<2x256xf32>
    %199 = arith.addf %198, %197 : vector<2x256xf32>
    %200 = arith.divf %198, %199 : vector<2x256xf32>
    %201 = arith.mulf %192, %170 : vector<2x256xf32>
    %202 = arith.mulf %186, %194 : vector<2x256xf32>
    %203 = arith.addf %201, %202 : vector<2x256xf32>
    %204 = math.tanh %203 : vector<2x256xf32>
    %205 = arith.mulf %200, %204 : vector<2x256xf32>
    %206 = arith.maximumf %173, %205 : vector<2x256xf32>
    %c6_i32 = arith.constant 6 : i32
    %c2_i32_57 = arith.constant 2 : i32
    %207 = arith.muli %c6_i32, %c2_i32_57 : i32
    %208 = arith.index_cast %207 : i32 to index
    %c0_58 = arith.constant 0 : index
    %209 = vector.load %arg6[%208, %c0_58] : memref<16x1024xf32, #tpu.memory_space<vmem>>, vector<2x1024xf32>
    %210 = arith.truncf %205 : vector<2x256xf32> to vector<2x256xbf16>
    %c0_59 = arith.constant 0 : index
    %c0_60 = arith.constant 0 : index
    %211 = vector.load %arg3[%c0_59, %c0_60] : memref<256x1024xbf16, #tpu.memory_space<vmem>>, vector<256x1024xbf16>
    %cst_61 = arith.constant dense<0.000000e+00> : vector<2x1024xf32>
    %212 = tpu.matmul %210, %211, %cst_61 {dimension_numbers = #tpu.dot_dimension_numbers<[1], [0], [0], [1], [0, 0, 1, 1], [], []>} : vector<2x256xbf16>, vector<256x1024xbf16>, vector<2x1024xf32> -> vector<2x1024xf32>
    %213 = arith.addf %209, %212 : vector<2x1024xf32>
    %214 = vector.extract_strided_slice %213 {offsets = [0, 0], sizes = [2, 256], strides = [1, 1]} : vector<2x1024xf32> to vector<2x256xf32>
    %215 = arith.negf %214 : vector<2x256xf32>
    %216 = math.exp %215 : vector<2x256xf32>
    %cst_62 = arith.constant 1.000000e+00 : f32
    %217 = vector.broadcast %cst_62 : f32 to vector<2x256xf32>
    %218 = arith.addf %217, %216 : vector<2x256xf32>
    %219 = arith.divf %217, %218 : vector<2x256xf32>
    %220 = vector.extract_strided_slice %213 {offsets = [0, 256], sizes = [2, 256], strides = [1, 1]} : vector<2x1024xf32> to vector<2x256xf32>
    %221 = arith.negf %220 : vector<2x256xf32>
    %222 = math.exp %221 : vector<2x256xf32>
    %cst_63 = arith.constant 1.000000e+00 : f32
    %223 = vector.broadcast %cst_63 : f32 to vector<2x256xf32>
    %224 = arith.addf %223, %222 : vector<2x256xf32>
    %225 = arith.divf %223, %224 : vector<2x256xf32>
    %226 = vector.extract_strided_slice %213 {offsets = [0, 512], sizes = [2, 256], strides = [1, 1]} : vector<2x1024xf32> to vector<2x256xf32>
    %227 = math.tanh %226 : vector<2x256xf32>
    %228 = vector.extract_strided_slice %213 {offsets = [0, 768], sizes = [2, 256], strides = [1, 1]} : vector<2x1024xf32> to vector<2x256xf32>
    %229 = arith.negf %228 : vector<2x256xf32>
    %230 = math.exp %229 : vector<2x256xf32>
    %cst_64 = arith.constant 1.000000e+00 : f32
    %231 = vector.broadcast %cst_64 : f32 to vector<2x256xf32>
    %232 = arith.addf %231, %230 : vector<2x256xf32>
    %233 = arith.divf %231, %232 : vector<2x256xf32>
    %234 = arith.mulf %225, %203 : vector<2x256xf32>
    %235 = arith.mulf %219, %227 : vector<2x256xf32>
    %236 = arith.addf %234, %235 : vector<2x256xf32>
    %237 = math.tanh %236 : vector<2x256xf32>
    %238 = arith.mulf %233, %237 : vector<2x256xf32>
    %239 = arith.maximumf %206, %238 : vector<2x256xf32>
    %c7_i32 = arith.constant 7 : i32
    %c2_i32_65 = arith.constant 2 : i32
    %240 = arith.muli %c7_i32, %c2_i32_65 : i32
    %241 = arith.index_cast %240 : i32 to index
    %c0_66 = arith.constant 0 : index
    %242 = vector.load %arg6[%241, %c0_66] : memref<16x1024xf32, #tpu.memory_space<vmem>>, vector<2x1024xf32>
    %243 = arith.truncf %238 : vector<2x256xf32> to vector<2x256xbf16>
    %c0_67 = arith.constant 0 : index
    %c0_68 = arith.constant 0 : index
    %244 = vector.load %arg3[%c0_67, %c0_68] : memref<256x1024xbf16, #tpu.memory_space<vmem>>, vector<256x1024xbf16>
    %cst_69 = arith.constant dense<0.000000e+00> : vector<2x1024xf32>
    %245 = tpu.matmul %243, %244, %cst_69 {dimension_numbers = #tpu.dot_dimension_numbers<[1], [0], [0], [1], [0, 0, 1, 1], [], []>} : vector<2x256xbf16>, vector<256x1024xbf16>, vector<2x1024xf32> -> vector<2x1024xf32>
    %246 = arith.addf %242, %245 : vector<2x1024xf32>
    %247 = vector.extract_strided_slice %246 {offsets = [0, 0], sizes = [2, 256], strides = [1, 1]} : vector<2x1024xf32> to vector<2x256xf32>
    %248 = arith.negf %247 : vector<2x256xf32>
    %249 = math.exp %248 : vector<2x256xf32>
    %cst_70 = arith.constant 1.000000e+00 : f32
    %250 = vector.broadcast %cst_70 : f32 to vector<2x256xf32>
    %251 = arith.addf %250, %249 : vector<2x256xf32>
    %252 = arith.divf %250, %251 : vector<2x256xf32>
    %253 = vector.extract_strided_slice %246 {offsets = [0, 256], sizes = [2, 256], strides = [1, 1]} : vector<2x1024xf32> to vector<2x256xf32>
    %254 = arith.negf %253 : vector<2x256xf32>
    %255 = math.exp %254 : vector<2x256xf32>
    %cst_71 = arith.constant 1.000000e+00 : f32
    %256 = vector.broadcast %cst_71 : f32 to vector<2x256xf32>
    %257 = arith.addf %256, %255 : vector<2x256xf32>
    %258 = arith.divf %256, %257 : vector<2x256xf32>
    %259 = vector.extract_strided_slice %246 {offsets = [0, 512], sizes = [2, 256], strides = [1, 1]} : vector<2x1024xf32> to vector<2x256xf32>
    %260 = math.tanh %259 : vector<2x256xf32>
    %261 = vector.extract_strided_slice %246 {offsets = [0, 768], sizes = [2, 256], strides = [1, 1]} : vector<2x1024xf32> to vector<2x256xf32>
    %262 = arith.negf %261 : vector<2x256xf32>
    %263 = math.exp %262 : vector<2x256xf32>
    %cst_72 = arith.constant 1.000000e+00 : f32
    %264 = vector.broadcast %cst_72 : f32 to vector<2x256xf32>
    %265 = arith.addf %264, %263 : vector<2x256xf32>
    %266 = arith.divf %264, %265 : vector<2x256xf32>
    %267 = arith.mulf %258, %236 : vector<2x256xf32>
    %268 = arith.mulf %252, %260 : vector<2x256xf32>
    %269 = arith.addf %267, %268 : vector<2x256xf32>
    %270 = math.tanh %269 : vector<2x256xf32>
    %271 = arith.mulf %266, %270 : vector<2x256xf32>
    %272 = arith.maximumf %239, %271 : vector<2x256xf32>
    %c8_i32 = arith.constant 8 : i32
    %c0_73 = arith.constant 0 : index
    %c0_74 = arith.constant 0 : index
    %c0_75 = arith.constant 0 : index
    %273 = vector.load %arg5[%c0_73, %c0_74, %c0_75] : memref<1x2x256xf32, #tpu.memory_space<vmem>>, vector<1x2x256xf32>
    %274 = vector.shape_cast %273 : vector<1x2x256xf32> to vector<2x256xf32>
    %275 = vector.shape_cast %272 : vector<2x256xf32> to vector<1x2x256xf32>
    tpu.vector_store %arg5[%c0_73, %c0_74, %c0_75], %275 {strides = array<i32>} : memref<1x2x256xf32, #tpu.memory_space<vmem>>, vector<1x2x256xf32>,
    return
  }
  func.func @transform_0(%arg0: i32) -> (i32, i32, i32) {
    %c0_i32 = arith.constant 0 : i32
    %c0_i32_0 = arith.constant 0 : i32
    %c0_i32_1 = arith.constant 0 : i32
    return %arg0, %c0_i32, %c0_i32_0 : i32, i32, i32
  }
  func.func @transform_1(%arg0: i32) -> (i32, i32) {
    %c0_i32 = arith.constant 0 : i32
    %c0_i32_0 = arith.constant 0 : i32
    %c0_i32_1 = arith.constant 0 : i32
    return %c0_i32, %c0_i32_0 : i32, i32
  }
  func.func @transform_2(%arg0: i32) -> (i32, i32) {
    %c0_i32 = arith.constant 0 : i32
    %c0_i32_0 = arith.constant 0 : i32
    %c0_i32_1 = arith.constant 0 : i32
    return %c0_i32, %c0_i32_0 : i32, i32
  }
  func.func @transform_3(%arg0: i32) -> (i32, i32) {
    %c0_i32 = arith.constant 0 : i32
    %c0_i32_0 = arith.constant 0 : i32
    %c0_i32_1 = arith.constant 0 : i32
    return %c0_i32, %c0_i32_0 : i32, i32
  }
  func.func @transform_4(%arg0: i32) -> (i32, i32, i32) {
    %c0_i32 = arith.constant 0 : i32
    %c0_i32_0 = arith.constant 0 : i32
    %c0_i32_1 = arith.constant 0 : i32
    return %arg0, %c0_i32, %c0_i32_0 : i32, i32, i32
  }
}

module attributes {stable_mosaic.version = 11 : i64} {
  func.func @head_kernel(%arg0: memref<2x2x256xf32, #tpu.memory_space<vmem>>, %arg1: memref<256x512xbf16, #tpu.memory_space<vmem>>, %arg2: memref<1x512xf32, #tpu.memory_space<vmem>>, %arg3: memref<1x512xf32, #tpu.memory_space<vmem>>, %arg4: memref<1x1xf32, #tpu.memory_space<vmem>>, %arg5: memref<2x1xf32, #tpu.memory_space<vmem>>) attributes {dimension_semantics = [], scalar_prefetch = 0 : i64, scratch_operands = 0 : i64, tpu.core_type = #tpu.core_type<tc>} {
    %c0 = arith.constant 0 : index
    %c0_0 = arith.constant 0 : index
    %c0_1 = arith.constant 0 : index
    %0 = vector.load %arg0[%c0, %c0_0, %c0_1] : memref<2x2x256xf32, #tpu.memory_space<vmem>>, vector<1x2x256xf32>
    %1 = vector.shape_cast %0 : vector<1x2x256xf32> to vector<2x256xf32>
    %c1 = arith.constant 1 : index
    %c0_2 = arith.constant 0 : index
    %c0_3 = arith.constant 0 : index
    %2 = vector.load %arg0[%c1, %c0_2, %c0_3] : memref<2x2x256xf32, #tpu.memory_space<vmem>>, vector<1x2x256xf32>
    %3 = vector.shape_cast %2 : vector<1x2x256xf32> to vector<2x256xf32>
    %4 = arith.subf %1, %3 : vector<2x256xf32>
    %5 = math.absf %4 : vector<2x256xf32>
    %6 = arith.truncf %5 : vector<2x256xf32> to vector<2x256xbf16>
    %c0_4 = arith.constant 0 : index
    %c0_5 = arith.constant 0 : index
    %7 = vector.load %arg1[%c0_4, %c0_5] : memref<256x512xbf16, #tpu.memory_space<vmem>>, vector<256x512xbf16>
    %cst = arith.constant dense<0.000000e+00> : vector<2x512xf32>
    %8 = tpu.matmul %6, %7, %cst {dimension_numbers = #tpu.dot_dimension_numbers<[1], [0], [0], [1], [0, 0, 1, 1], [], []>} : vector<2x256xbf16>, vector<256x512xbf16>, vector<2x512xf32> -> vector<2x512xf32>
    %c0_6 = arith.constant 0 : index
    %c0_7 = arith.constant 0 : index
    %9 = vector.load %arg2[%c0_6, %c0_7] : memref<1x512xf32, #tpu.memory_space<vmem>>, vector<1x512xf32>
    %10 = vector.broadcast %9 : vector<1x512xf32> to vector<2x512xf32>
    %11 = arith.addf %8, %10 : vector<2x512xf32>
    %cst_8 = arith.constant 0.000000e+00 : f32
    %12 = vector.broadcast %cst_8 : f32 to vector<2x512xf32>
    %13 = arith.maximumf %11, %12 : vector<2x512xf32>
    %c0_9 = arith.constant 0 : index
    %c0_10 = arith.constant 0 : index
    %14 = vector.load %arg3[%c0_9, %c0_10] : memref<1x512xf32, #tpu.memory_space<vmem>>, vector<1x512xf32>
    %15 = vector.broadcast %14 : vector<1x512xf32> to vector<2x512xf32>
    %16 = arith.mulf %13, %15 : vector<2x512xf32>
    %cst_11 = arith.constant dense<0.000000e+00> : vector<2xf32>
    %17 = vector.multi_reduction <add>, %16, %cst_11 [1] : vector<2x512xf32> to vector<2xf32>
    %18 = vector.shape_cast %17 : vector<2xf32> to vector<2x1xf32>
    %c0_12 = arith.constant 0 : index
    %c0_13 = arith.constant 0 : index
    %19 = vector.load %arg4[%c0_12, %c0_13] : memref<1x1xf32, #tpu.memory_space<vmem>>, vector<1x1xf32>
    %20 = vector.broadcast %19 : vector<1x1xf32> to vector<2x1xf32>
    %21 = arith.addf %18, %20 : vector<2x1xf32>
    %c0_14 = arith.constant 0 : index
    %c0_15 = arith.constant 0 : index
    %22 = vector.load %arg5[%c0_14, %c0_15] : memref<2x1xf32, #tpu.memory_space<vmem>>, vector<2x1xf32>
    tpu.vector_store %arg5[%c0_14, %c0_15], %21 {strides = array<i32>} : memref<2x1xf32, #tpu.memory_space<vmem>>, vector<2x1xf32>,
    return
  }
}

</mosaic_0001>

<llo_original>
// kernel: siamese_forward.3
$region0: #{siamese_forward.3}
  #allocation0 [shape = 'u32[]', space=smem, size = 0x4, offset = 0x4, fixed_abs, tag = 'smem constant byte address 0x4 - core index']
  #allocation1 [shape = 'u32[144,128]{1,0:T(1,128)}', space=vmem, size = 0x12000, scoped, tag = 'internal scratch']
  #allocation2 [shape = 'f32[1,1]{1,0:T(1,128)S(1)}', space=vmem, size = 0x200, scoped, tag = 'scoped memory for siamese_forward.3']
  %s0 = inlined_call_operand.vmem [shape: f32[2,2,256], index: 0, kind: input, shape index: {}]
  %s1 = inlined_call_operand.vmem [shape: bf16[256,512], index: 1, kind: input, shape index: {}]
  %s2 = inlined_call_operand.vmem [shape: f32[1,512], index: 2, kind: input, shape index: {}]
  %s3 = inlined_call_operand.vmem [shape: f32[1,512], index: 3, kind: input, shape index: {}]
  %s4 = inlined_call_operand.<no memory space> [shape: f32[1,1], index: 4, kind: input, shape index: {}]
  %s5 = inlined_call_operand.vmem [shape: f32[2,1], index: 5, kind: output, shape index: {}]
  %s6 = sld [smem:[#allocation0]]
  $region30: #{siamese_forward.3} parent=0
    _
  %s8 = ssub.s32 1, %s6
  %s9 = scalar_select 0, %s8, %s6
  %v10 = vstv %s4
  %11 = vst [vmem:[#allocation2] sm:$0x1] %v10
  // Predicated region
  $region2: #{siamese_forward.3} parent=0 // pred_check
    _
  $region3: #{siamese_forward.3} parent=0 // pred_check_branch
    %13 = sbr.rel (0) target = $region5
  $region4: #{siamese_forward.3} parent=0 // pred_region
    _
  $region5: #{siamese_forward.3} parent=0 // pred_fallthru
    _
  // Predicated region
  $region6: #{siamese_forward.3} parent=0 // pred_check
    _
  $region7: #{siamese_forward.3} parent=0 // pred_check_branch
    %15 = sbr.rel (0) target = $region9
  $region8: #{siamese_forward.3} parent=0 // pred_region
    _
  $region9: #{siamese_forward.3} parent=0 // pred_fallthru
    _
  // Predicated region
  $region10: #{siamese_forward.3} parent=0 // pred_check
    _
  $region11: #{siamese_forward.3} parent=0 // pred_check_branch
    %17 = sbr.rel (0) target = $region13
  $region12: #{siamese_forward.3} parent=0 // pred_region
    _
  $region13: #{siamese_forward.3} parent=0 // pred_fallthru
    _
  // Predicated region
  $region14: #{siamese_forward.3} parent=0 // pred_check
    _
  $region15: #{siamese_forward.3} parent=0 // pred_check_branch
    %19 = sbr.rel (0) target = $region17
  $region16: #{siamese_forward.3} parent=0 // pred_region
    _
  $region17: #{siamese_forward.3} parent=0 // pred_fallthru
    _
  // Predicated region
  $region18: #{siamese_forward.3} parent=0 // pred_check
    _
  $region19: #{siamese_forward.3} parent=0 // pred_check_branch
    %21 = sbr.rel (0) target = $region21
  $region20: #{siamese_forward.3} parent=0 // pred_region
    _
  $region21: #{siamese_forward.3} parent=0 // pred_fallthru
    _
  %v22 = vld [vmem:[%s0] sm:$0xf]
  %s23 = scalar_lea.vmem %s0, 4
  %v24 = vld [vmem:[%s23] sm:$0xf]
  %v25 = vsub.f32 %v22, %v24
  %v26 = vand.u32 2147483647, %v25
  %v29 = vunpack.c.l.s4 1983009808
  %v30 = vunpack.c.0.s8 %v29
  %v31 = vlaneseq
  %v32 = vshrl.u32 %v31, 7
  %v33 = vsub.s32 %v30, %v32
  %v34 = vrot.slane %v26, %v33
  %v35 = vcombine.high %v34, %v34
  %v38 = vpack.c.bf16 %v34, %v34
  %v39 = vpack.c.bf16 %v35, %v35
  %v40 = vld [vmem:[%s1] sm:$0xff]
  %v41 = vld [vmem:[%s1 + $0x8] sm:$0xff]
  %v42 = vld [vmem:[%s1 + $0x10] sm:$0xff]
  %v43 = vld [vmem:[%s1 + $0x18] sm:$0xff]
  %v44 = vld [vmem:[%s1 + $0x20] sm:$0xff]
  %v45 = vld [vmem:[%s1 + $0x28] sm:$0xff]
  %v46 = vld [vmem:[%s1 + $0x30] sm:$0xff]
  %v47 = vld [vmem:[%s1 + $0x38] sm:$0xff]
  %v48 = vld [vmem:[%s1 + $0x40] sm:$0xff]
  %v49 = vld [vmem:[%s1 + $0x48] sm:$0xff]
  %v50 = vld [vmem:[%s1 + $0x50] sm:$0xff]
  %v51 = vld [vmem:[%s1 + $0x58] sm:$0xff]
  %v52 = vld [vmem:[%s1 + $0x60] sm:$0xff]
  %v53 = vld [vmem:[%s1 + $0x68] sm:$0xff]
  %v54 = vld [vmem:[%s1 + $0x70] sm:$0xff]
  %v55 = vld [vmem:[%s1 + $0x78] sm:$0xff]
  %v56 = vld [vmem:[%s1 + $0x80] sm:$0xff]
  %v57 = vld [vmem:[%s1 + $0x88] sm:$0xff]
  %v58 = vld [vmem:[%s1 + $0x90] sm:$0xff]
  %v59 = vld [vmem:[%s1 + $0x98] sm:$0xff]
  %v60 = vld [vmem:[%s1 + $0xa0] sm:$0xff]
  %v61 = vld [vmem:[%s1 + $0xa8] sm:$0xff]
  %v62 = vld [vmem:[%s1 + $0xb0] sm:$0xff]
  %v63 = vld [vmem:[%s1 + $0xb8] sm:$0xff]
  %v64 = vld [vmem:[%s1 + $0xc0] sm:$0xff]
  %v65 = vld [vmem:[%s1 + $0xc8] sm:$0xff]
  %v66 = vld [vmem:[%s1 + $0xd0] sm:$0xff]
  %v67 = vld [vmem:[%s1 + $0xd8] sm:$0xff]
  %v68 = vld [vmem:[%s1 + $0xe0] sm:$0xff]
  %v69 = vld [vmem:[%s1 + $0xe8] sm:$0xff]
  %v70 = vld [vmem:[%s1 + $0xf0] sm:$0xff]
  %v71 = vld [vmem:[%s1 + $0xf8] sm:$0xff]
  %v72 = vld [vmem:[%s1 + $0x100] sm:$0xff]
  %v73 = vld [vmem:[%s1 + $0x108] sm:$0xff]
  %v74 = vld [vmem:[%s1 + $0x110] sm:$0xff]
  %v75 = vld [vmem:[%s1 + $0x118] sm:$0xff]
  %v76 = vld [vmem:[%s1 + $0x120] sm:$0xff]
  %v77 = vld [vmem:[%s1 + $0x128] sm:$0xff]
  %v78 = vld [vmem:[%s1 + $0x130] sm:$0xff]
  %v79 = vld [vmem:[%s1 + $0x138] sm:$0xff]
  %v80 = vld [vmem:[%s1 + $0x140] sm:$0xff]
  %v81 = vld [vmem:[%s1 + $0x148] sm:$0xff]
  %v82 = vld [vmem:[%s1 + $0x150] sm:$0xff]
  %v83 = vld [vmem:[%s1 + $0x158] sm:$0xff]
  %v84 = vld [vmem:[%s1 + $0x160] sm:$0xff]
  %v85 = vld [vmem:[%s1 + $0x168] sm:$0xff]
  %v86 = vld [vmem:[%s1 + $0x170] sm:$0xff]
  %v87 = vld [vmem:[%s1 + $0x178] sm:$0xff]
  %v88 = vld [vmem:[%s1 + $0x180] sm:$0xff]
  %v89 = vld [vmem:[%s1 + $0x188] sm:$0xff]
  %v90 = vld [vmem:[%s1 + $0x190] sm:$0xff]
  %v91 = vld [vmem:[%s1 + $0x198] sm:$0xff]
  %v92 = vld [vmem:[%s1 + $0x1a0] sm:$0xff]
  %v93 = vld [vmem:[%s1 + $0x1a8] sm:$0xff]
  %v94 = vld [vmem:[%s1 + $0x1b0] sm:$0xff]
  %v95 = vld [vmem:[%s1 + $0x1b8] sm:$0xff]
  %v96 = vld [vmem:[%s1 + $0x1c0] sm:$0xff]
  %v97 = vld [vmem:[%s1 + $0x1c8] sm:$0xff]
  %v98 = vld [vmem:[%s1 + $0x1d0] sm:$0xff]
  %v99 = vld [vmem:[%s1 + $0x1d8] sm:$0xff]
  %v100 = vld [vmem:[%s1 + $0x1e0] sm:$0xff]
  %v101 = vld [vmem:[%s1 + $0x1e8] sm:$0xff]
  %v102 = vld [vmem:[%s1 + $0x1f0] sm:$0xff]
  %v103 = vld [vmem:[%s1 + $0x1f8] sm:$0xff]
  %v104 = vld [vmem:[%s2] sm:$0xf]
  %v106 = vlaneseq
  %v107 = vshrl.u32 %v106, 7
  %v108 = vsub.s32 0, %v107
  %v109 = vrot.slane %v104, %v108
  %v110 = vlaneseq
  %v111 = vshrl.u32 %v110, 7
  %v112 = vsub.s32 1, %v111
  %v113 = vrot.slane %v104, %v112
  %v114 = vlaneseq
  %v115 = vshrl.u32 %v114, 7
  %v116 = vsub.s32 2, %v115
  %v117 = vrot.slane %v104, %v116
  %v118 = vlaneseq
  %v119 = vshrl.u32 %v118, 7
  %v120 = vsub.s32 3, %v119
  %v121 = vrot.slane %v104, %v120
  %v190 = vunpack.c.l.b16 %v40
  %v191 = vunpack.c.h.b16 %v40
  %v192 = vunpack.c.l.b16 %v41
  %v193 = vunpack.c.h.b16 %v41
  %v194 = vunpack.c.l.b16 %v42
  %v195 = vunpack.c.h.b16 %v42
  %v196 = vunpack.c.l.b16 %v43
  %v197 = vunpack.c.h.b16 %v43
  %v198 = vunpack.c.l.b16 %v44
  %v199 = vunpack.c.h.b16 %v44
  %v200 = vunpack.c.l.b16 %v45
  %v201 = vunpack.c.h.b16 %v45
  %v202 = vunpack.c.l.b16 %v46
  %v203 = vunpack.c.h.b16 %v46
  %v204 = vunpack.c.l.b16 %v47
  %v205 = vunpack.c.h.b16 %v47
  %v206 = vunpack.c.l.b16 %v48
  %v207 = vunpack.c.h.b16 %v48
  %v208 = vunpack.c.l.b16 %v49
  %v209 = vunpack.c.h.b16 %v49
  %v210 = vunpack.c.l.b16 %v50
  %v211 = vunpack.c.h.b16 %v50
  %v212 = vunpack.c.l.b16 %v51
  %v213 = vunpack.c.h.b16 %v51
  %v214 = vunpack.c.l.b16 %v52
  %v215 = vunpack.c.h.b16 %v52
  %v216 = vunpack.c.l.b16 %v53
  %v217 = vunpack.c.h.b16 %v53
  %v218 = vunpack.c.l.b16 %v54
  %v219 = vunpack.c.h.b16 %v54
  %v220 = vunpack.c.l.b16 %v55
  %v221 = vunpack.c.h.b16 %v55
  %v222 = vunpack.c.l.b16 %v56
  %v223 = vunpack.c.h.b16 %v56
  %v224 = vunpack.c.l.b16 %v57
  %v225 = vunpack.c.h.b16 %v57
  %v226 = vunpack.c.l.b16 %v58
  %v227 = vunpack.c.h.b16 %v58
  %v228 = vunpack.c.l.b16 %v59
  %v229 = vunpack.c.h.b16 %v59
  %v230 = vunpack.c.l.b16 %v60
  %v231 = vunpack.c.h.b16 %v60
  %v232 = vunpack.c.l.b16 %v61
  %v233 = vunpack.c.h.b16 %v61
  %v234 = vunpack.c.l.b16 %v62
  %v235 = vunpack.c.h.b16 %v62
  %v236 = vunpack.c.l.b16 %v63
  %v237 = vunpack.c.h.b16 %v63
  %v238 = vunpack.c.l.b16 %v64
  %v239 = vunpack.c.h.b16 %v64
  %v240 = vunpack.c.l.b16 %v65
  %v241 = vunpack.c.h.b16 %v65
  %v242 = vunpack.c.l.b16 %v66
  %v243 = vunpack.c.h.b16 %v66
  %v244 = vunpack.c.l.b16 %v67
  %v245 = vunpack.c.h.b16 %v67
  %v246 = vunpack.c.l.b16 %v68
  %v247 = vunpack.c.h.b16 %v68
  %v248 = vunpack.c.l.b16 %v69
  %v249 = vunpack.c.h.b16 %v69
  %v250 = vunpack.c.l.b16 %v70
  %v251 = vunpack.c.h.b16 %v70
  %v252 = vunpack.c.l.b16 %v71
  %v253 = vunpack.c.h.b16 %v71
  %v254 = vunpack.c.l.b16 %v72
  %v255 = vunpack.c.h.b16 %v72
  %v256 = vunpack.c.l.b16 %v73
  %v257 = vunpack.c.h.b16 %v73
  %v258 = vunpack.c.l.b16 %v74
  %v259 = vunpack.c.h.b16 %v74
  %v260 = vunpack.c.l.b16 %v75
  %v261 = vunpack.c.h.b16 %v75
  %v262 = vunpack.c.l.b16 %v76
  %v263 = vunpack.c.h.b16 %v76
  %v264 = vunpack.c.l.b16 %v77
  %v265 = vunpack.c.h.b16 %v77
  %v266 = vunpack.c.l.b16 %v78
  %v267 = vunpack.c.h.b16 %v78
  %v268 = vunpack.c.l.b16 %v79
  %v269 = vunpack.c.h.b16 %v79
  %v270 = vunpack.c.l.b16 %v80
  %v271 = vunpack.c.h.b16 %v80
  %v272 = vunpack.c.l.b16 %v81
  %v273 = vunpack.c.h.b16 %v81
  %v274 = vunpack.c.l.b16 %v82
  %v275 = vunpack.c.h.b16 %v82
  %v276 = vunpack.c.l.b16 %v83
  %v277 = vunpack.c.h.b16 %v83
  %v278 = vunpack.c.l.b16 %v84
  %v279 = vunpack.c.h.b16 %v84
  %v280 = vunpack.c.l.b16 %v85
  %v281 = vunpack.c.h.b16 %v85
  %v282 = vunpack.c.l.b16 %v86
  %v283 = vunpack.c.h.b16 %v86
  %v284 = vunpack.c.l.b16 %v87
  %v285 = vunpack.c.h.b16 %v87
  %v286 = vunpack.c.l.b16 %v88
  %v287 = vunpack.c.h.b16 %v88
  %v288 = vunpack.c.l.b16 %v89
  %v289 = vunpack.c.h.b16 %v89
  %v290 = vunpack.c.l.b16 %v90
  %v291 = vunpack.c.h.b16 %v90
  %v292 = vunpack.c.l.b16 %v91
  %v293 = vunpack.c.h.b16 %v91
  %v294 = vunpack.c.l.b16 %v92
  %v295 = vunpack.c.h.b16 %v92
  %v296 = vunpack.c.l.b16 %v93
  %v297 = vunpack.c.h.b16 %v93
  %v298 = vunpack.c.l.b16 %v94
  %v299 = vunpack.c.h.b16 %v94
  %v300 = vunpack.c.l.b16 %v95
  %v301 = vunpack.c.h.b16 %v95
  %v302 = vunpack.c.l.b16 %v96
  %v303 = vunpack.c.h.b16 %v96
  %v304 = vunpack.c.l.b16 %v97
  %v305 = vunpack.c.h.b16 %v97
  %v306 = vunpack.c.l.b16 %v98
  %v307 = vunpack.c.h.b16 %v98
  %v308 = vunpack.c.l.b16 %v99
  %v309 = vunpack.c.h.b16 %v99
  %v310 = vunpack.c.l.b16 %v100
  %v311 = vunpack.c.h.b16 %v100
  %v312 = vunpack.c.l.b16 %v101
  %v313 = vunpack.c.h.b16 %v101
  %v314 = vunpack.c.l.b16 %v102
  %v315 = vunpack.c.h.b16 %v102
  %v316 = vunpack.c.l.b16 %v103
  %v317 = vunpack.c.h.b16 %v103
  %v318 = vpack.c.b16 %v194, %v190
  %v319 = vpack.c.b16 %v195, %v191
  %v320 = vpack.c.b16 %v196, %v192
  %v321 = vpack.c.b16 %v197, %v193
  %v322 = vpack.c.b16 %v202, %v198
  %v323 = vpack.c.b16 %v203, %v199
  %v324 = vpack.c.b16 %v204, %v200
  %v325 = vpack.c.b16 %v205, %v201
  %v326 = vpack.c.b16 %v210, %v206
  %v327 = vpack.c.b16 %v211, %v207
  %v328 = vpack.c.b16 %v212, %v208
  %v329 = vpack.c.b16 %v213, %v209
  %v330 = vpack.c.b16 %v218, %v214
  %v331 = vpack.c.b16 %v219, %v215
  %v332 = vpack.c.b16 %v220, %v216
  %v333 = vpack.c.b16 %v221, %v217
  %v334 = vpack.c.b16 %v226, %v222
  %v335 = vpack.c.b16 %v227, %v223
  %v336 = vpack.c.b16 %v228, %v224
  %v337 = vpack.c.b16 %v229, %v225
  %v338 = vpack.c.b16 %v234, %v230
  %v339 = vpack.c.b16 %v235, %v231
  %v340 = vpack.c.b16 %v236, %v232
  %v341 = vpack.c.b16 %v237, %v233
  %v342 = vpack.c.b16 %v242, %v238
  %v343 = vpack.c.b16 %v243, %v239
  %v344 = vpack.c.b16 %v244, %v240
  %v345 = vpack.c.b16 %v245, %v241
  %v346 = vpack.c.b16 %v250, %v246
  %v347 = vpack.c.b16 %v251, %v247
  %v348 = vpack.c.b16 %v252, %v248
  %v349 = vpack.c.b16 %v253, %v249
  %v350 = vpack.c.b16 %v258, %v254
  %v351 = vpack.c.b16 %v259, %v255
  %v352 = vpack.c.b16 %v260, %v256
  %v353 = vpack.c.b16 %v261, %v257
  %v354 = vpack.c.b16 %v266, %v262
  %v355 = vpack.c.b16 %v267, %v263
  %v356 = vpack.c.b16 %v268, %v264
  %v357 = vpack.c.b16 %v269, %v265
  %v358 = vpack.c.b16 %v274, %v270
  %v359 = vpack.c.b16 %v275, %v271
  %v360 = vpack.c.b16 %v276, %v272
  %v361 = vpack.c.b16 %v277, %v273
  %v362 = vpack.c.b16 %v282, %v278
  %v363 = vpack.c.b16 %v283, %v279
  %v364 = vpack.c.b16 %v284, %v280
  %v365 = vpack.c.b16 %v285, %v281
  %v366 = vpack.c.b16 %v290, %v286
  %v367 = vpack.c.b16 %v291, %v287
  %v368 = vpack.c.b16 %v292, %v288
  %v369 = vpack.c.b16 %v293, %v289
  %v370 = vpack.c.b16 %v298, %v294
  %v371 = vpack.c.b16 %v299, %v295
  %v372 = vpack.c.b16 %v300, %v296
  %v373 = vpack.c.b16 %v301, %v297
  %v374 = vpack.c.b16 %v306, %v302
  %v375 = vpack.c.b16 %v307, %v303
  %v376 = vpack.c.b16 %v308, %v304
  %v377 = vpack.c.b16 %v309, %v305
  %v378 = vpack.c.b16 %v314, %v310
  %v379 = vpack.c.b16 %v315, %v311
  %v380 = vpack.c.b16 %v316, %v312
  %v381 = vpack.c.b16 %v317, %v313
  %446 = vmatprep.subr.bf16.mxu0 %v319
  %447 = vmatpush1.bf16.msra.mxu0 %v318
  %448 = vmatprep.subr.bf16.mxu0 %v323
  %449 = vmatpush1.bf16.msra.mxu0 %v322
  %450 = vmatprep.subr.bf16.mxu0 %v327
  %451 = vmatpush1.bf16.msra.mxu0 %v326
  %452 = vmatprep.subr.bf16.mxu0 %v331
  %453 = vmatpush1.bf16.msra.mxu0 %v330
  %454 = vmatprep.subr.bf16.mxu0 %v335
  %455 = vmatpush1.bf16.msra.mxu0 %v334
  %456 = vmatprep.subr.bf16.mxu0 %v339
  %457 = vmatpush1.bf16.msra.mxu0 %v338
  %458 = vmatprep.subr.bf16.mxu0 %v343
  %459 = vmatpush1.bf16.msra.mxu0 %v342
  %460 = vmatprep.subr.bf16.mxu0 %v347
  %461 = vmatpush1.bf16.msra.mxu0 %v346
  %462 = vmatprep.subr.bf16.mxu0 %v351
  %463 = vmatpush1.bf16.msra.mxu0 %v350
  %464 = vmatprep.subr.bf16.mxu0 %v355
  %465 = vmatpush1.bf16.msra.mxu0 %v354
  %466 = vmatprep.subr.bf16.mxu0 %v359
  %467 = vmatpush1.bf16.msra.mxu0 %v358
  %468 = vmatprep.subr.bf16.mxu0 %v363
  %469 = vmatpush1.bf16.msra.mxu0 %v362
  %470 = vmatprep.subr.bf16.mxu0 %v367
  %471 = vmatpush1.bf16.msra.mxu0 %v366
  %472 = vmatprep.subr.bf16.mxu0 %v371
  %473 = vmatpush1.bf16.msra.mxu0 %v370
  %474 = vmatprep.subr.bf16.mxu0 %v375
  %475 = vmatpush1.bf16.msra.mxu0 %v374
  %476 = vmatprep.subr.bf16.mxu0 %v379
  %477 = vmatpush1.bf16.msra.mxu0 %v378
  %478 = vmatprep.mubr.bf16.mxu0 %v39
  %479 = vmatmul.mubr.bf16.gmra.mrb[0].mxu0 %v38
  %v480 = vpop.f32.mrb[0].mxu0
  %v481 = vadd.f32 %v109, %v480
  %v482 = vpop.f32.mrb[0].mxu0
  %v483 = vadd.f32 %v113, %v482
  %v484 = vpop.f32.mrb[0].mxu0
  %v485 = vpop.f32.mrb[0].mxu0
  %486 = vdwg.mxu0
  %487 = vmatprep.subr.bf16.mxu0 %v321
  %488 = vmatpush1.bf16.msra.mxu0 %v320
  %489 = vmatprep.subr.bf16.mxu0 %v325
  %490 = vmatpush1.bf16.msra.mxu0 %v324
  %491 = vmatprep.subr.bf16.mxu0 %v329
  %492 = vmatpush1.bf16.msra.mxu0 %v328
  %493 = vmatprep.subr.bf16.mxu0 %v333
  %494 = vmatpush1.bf16.msra.mxu0 %v332
  %495 = vmatprep.subr.bf16.mxu0 %v337
  %496 = vmatpush1.bf16.msra.mxu0 %v336
  %497 = vmatprep.subr.bf16.mxu0 %v341
  %498 = vmatpush1.bf16.msra.mxu0 %v340
  %499 = vmatprep.subr.bf16.mxu0 %v345
  %500 = vmatpush1.bf16.msra.mxu0 %v344
  %501 = vmatprep.subr.bf16.mxu0 %v349
  %502 = vmatpush1.bf16.msra.mxu0 %v348
  %503 = vmatprep.subr.bf16.mxu0 %v353
  %504 = vmatpush1.bf16.msra.mxu0 %v352
  %505 = vmatprep.subr.bf16.mxu0 %v357
  %506 = vmatpush1.bf16.msra.mxu0 %v356
  %507 = vmatprep.subr.bf16.mxu0 %v361
  %508 = vmatpush1.bf16.msra.mxu0 %v360
  %509 = vmatprep.subr.bf16.mxu0 %v365
  %510 = vmatpush1.bf16.msra.mxu0 %v364
  %511 = vmatprep.subr.bf16.mxu0 %v369
  %512 = vmatpush1.bf16.msra.mxu0 %v368
  %513 = vmatprep.subr.bf16.mxu0 %v373
  %514 = vmatpush1.bf16.msra.mxu0 %v372
  %515 = vmatprep.subr.bf16.mxu0 %v377
  %516 = vmatpush1.bf16.msra.mxu0 %v376
  %517 = vmatprep.subr.bf16.mxu0 %v381
  %518 = vmatpush1.bf16.msra.mxu0 %v380
  %519 = vmatprep.mubr.bf16.mxu0 %v39
  %520 = vmatmul.mubr.bf16.gmra.mrb[0].mxu0 %v38
  %v521 = vpop.f32.mrb[0].mxu0
  %v522 = vadd.f32 %v117, %v521
  %v523 = vpop.f32.mrb[0].mxu0
  %v524 = vadd.f32 %v121, %v523
  %v525 = vpop.f32.mrb[0].mxu0
  %v526 = vpop.f32.mrb[0].mxu0
  %527 = vdwg.mxu0
  %v528 = vmax.f32 %v481, 0.0
  %v529 = vmax.f32 %v483, 0.0
  %v530 = vmax.f32 %v522, 0.0
  %v531 = vmax.f32 %v524, 0.0
  %v532 = vld [vmem:[%s3] sm:$0xf]
  %v534 = vlaneseq
  %v535 = vshrl.u32 %v534, 7
  %v536 = vsub.s32 0, %v535
  %v537 = vrot.slane %v532, %v536
  %v538 = vlaneseq
  %v539 = vshrl.u32 %v538, 7
  %v540 = vsub.s32 1, %v539
  %v541 = vrot.slane %v532, %v540
  %v542 = vlaneseq
  %v543 = vshrl.u32 %v542, 7
  %v544 = vsub.s32 2, %v543
  %v545 = vrot.slane %v532, %v544
  %v546 = vlaneseq
  %v547 = vshrl.u32 %v546, 7
  %v548 = vsub.s32 3, %v547
  %v549 = vrot.slane %v532, %v548
  %v554 = vmul.f32 %v528, %v537
  %v555 = vmul.f32 %v529, %v541
  %v556 = vmul.f32 %v530, %v545
  %v557 = vmul.f32 %v531, %v549
  %vm558 = vcmask 1041408
  %v559 = vsel %vm558, %v554, 0.0
  %v560 = vsel %vm558, %v555, 0.0
  %v561 = vadd.f32 %v559, %v560
  %v562 = vsel %vm558, %v556, 0.0
  %v563 = vadd.f32 %v561, %v562
  %v564 = vsel %vm558, %v557, 0.0
  %v565 = vadd.f32 %v563, %v564
  %566 = vadd.xlane.f32.xlu0 %v565
  %v567 = vpop.xlane.xlu0 %566
  %v568 = vld [vmem:[#allocation2] sm:$0x1]
  %v570 = vlaneseq
  %v571 = vshrl.u32 %v570, 7
  %v572 = vsub.s32 0, %v571
  %v573 = vrot.slane %v568, %v572
  %v575 = vadd.f32 %v567, %v573
  %vm576 = vcmask 1024
  %577 = vst.msk [vmem:[%s5] sm:$0x3] %vm576, %v575
  // Predicated region
  $region22: #{siamese_forward.3} parent=0 // pred_check
    _
  $region23: #{siamese_forward.3} parent=0 // pred_check_branch
    %579 = sbr.rel (0) target = $region25
  $region24: #{siamese_forward.3} parent=0 // pred_region
    _
  $region25: #{siamese_forward.3} parent=0 // pred_fallthru
    _
  // Predicated region
  $region26: #{siamese_forward.3} parent=0 // pred_check
    _
  $region27: #{siamese_forward.3} parent=0 // pred_check_branch
    %581 = sbr.rel (0) target = $region29
  $region28: #{siamese_forward.3} parent=0 // pred_region
    _
  $region29: #{siamese_forward.3} parent=0 // pred_fallthru
    _

// kernel: siamese_forward.2
$region0: #{siamese_forward.2}
  #allocation0 [shape = 'u32[]', space=smem, size = 0x4, offset = 0x4, fixed_abs, tag = 'smem constant byte address 0x4 - core index']
  #allocation1 [shape = 'u32[144,128]{1,0:T(1,128)}', space=vmem, size = 0x12000, scoped, tag = 'internal scratch']
  #allocation2 [shape = 'f32[16,1024]{1,0:T(8,128)}', space=vmem, size = 0x10000, scoped, tag = 'scratch operand']
  %s0 = inlined_call_operand.vmem [shape: bf16[2,16,256], index: 0, kind: input, shape index: {}]
  %s1 = inlined_call_operand.vmem [shape: bf16[256,1024], index: 1, kind: input, shape index: {}]
  %s2 = inlined_call_operand.vmem [shape: bf16[256,1024], index: 2, kind: input, shape index: {}]
  %s3 = inlined_call_operand.vmem [shape: f32[1,1024], index: 3, kind: input, shape index: {}]
  %s4 = inlined_call_operand.vmem [shape: f32[2,2,256], index: 4, kind: output, shape index: {}]
  %s5 = sld [smem:[#allocation0]]
  $region49: #{siamese_forward.2} parent=0
    _
  %s7 = ssub.s32 1, %s5
  %s8 = scalar_select 0, %s7, %s5
  loop: start=0, step=1, limit=4
  $region2: #{siamese_forward.2} parent=0 // loop_pre_header
    _
  $region3: #{siamese_forward.2} parent=0 // loop_header
    %s10 = sphi 0, %s14
    %p11 = scmp.ge.s32.totalorder %s10, 4
    %s20 = sphi 0, %s22
    %s23 = sphi 0, %s20
    %s24 = sphi 0, %s23
    %s40 = sphi 0, %s24
    %s44 = sphi 0, %s44
    %s46 = sphi 0, %s44
    %s47 = sphi 0, %s46
    %s61 = sphi 0, %s47
    %s65 = sphi 0, %s65
    %s67 = sphi 0, %s65
    %s68 = sphi 0, %s67
    %s82 = sphi 0, %s68
    %s86 = sphi 0, %s86
    %s88 = sphi 0, %s86
    %s89 = sphi 0, %s88
    %s103 = sphi 0, %s89
    %s109 = sphi 0, %s111
    %s112 = sphi 0, %s109
    %s113 = sphi 0, %s112
    %s129 = sphi 0, %s113
  $region4: #{siamese_forward.2} parent=0 // loop_header_branch
    %13 = sbr.rel (%p11) target = $region8
  $region5: #{siamese_forward.2} parent=0 // loop_body
    %s15 = ssub.s32 %s10, 1
    %s16 = ssub.s32 %s10, 2
    %s17 = sadd.s32 %s10, 1
    %s18 = ssub.s32 %s10, %s17
    %p19 = scmp.eq.s32.totalorder %s18, 0
    %s21 = sadd.s32 %s20, 1
    %s22 = scalar_select %p19, %s20, %s21
    %p25 = pneg %p19
    %p26 = scmp.eq.s32.totalorder %s10, 1
    %p27 = por %p25, %p26
    %p28 = scmp.ne.s32.totalorder %s20, %s23
    %p29 = scmp.eq.s32.totalorder %s10, 0
    %p30 = por %p28, %p29
    %p31 = scmp.ne.s32.totalorder %s20, %s23
    %p32 = scmp.eq.s32.totalorder %s15, 1
    %p33 = por %p31, %p32
    %p34 = scmp.ne.s32.totalorder %s23, %s24
    %p35 = scmp.eq.s32.totalorder %s15, 0
    %p36 = por %p34, %p35
    %p37 = scmp.ne.s32.totalorder %s23, %s24
    %p38 = scmp.eq.s32.totalorder %s16, 1
    %p39 = por %p37, %p38
    %p41 = scmp.ne.s32.totalorder %s24, %s40
    %p42 = scmp.eq.s32.totalorder %s16, 0
    %p43 = por %p41, %p42
    %s45 = sadd.s32 %s44, 1
    %p48 = scmp.eq.s32.totalorder %s10, 1
    %p49 = scmp.ne.s32.totalorder %s44, %s46
    %p50 = scmp.eq.s32.totalorder %s10, 0
    %p51 = por %p49, %p50
    %p52 = scmp.ne.s32.totalorder %s44, %s46
    %p53 = scmp.eq.s32.totalorder %s15, 1
    %p54 = por %p52, %p53
    %p55 = scmp.ne.s32.totalorder %s46, %s47
    %p56 = scmp.eq.s32.totalorder %s15, 0
    %p57 = por %p55, %p56
    %p58 = scmp.ne.s32.totalorder %s46, %s47
    %p59 = scmp.eq.s32.totalorder %s16, 1
    %p60 = por %p58, %p59
    %p62 = scmp.ne.s32.totalorder %s47, %s61
    %p63 = scmp.eq.s32.totalorder %s16, 0
    %p64 = por %p62, %p63
    %s66 = sadd.s32 %s65, 1
    %p69 = scmp.eq.s32.totalorder %s10, 1
    %p70 = scmp.ne.s32.totalorder %s65, %s67
    %p71 = scmp.eq.s32.totalorder %s10, 0
    %p72 = por %p70, %p71
    %p73 = scmp.ne.s32.totalorder %s65, %s67
    %p74 = scmp.eq.s32.totalorder %s15, 1
    %p75 = por %p73, %p74
    %p76 = scmp.ne.s32.totalorder %s67, %s68
    %p77 = scmp.eq.s32.totalorder %s15, 0
    %p78 = por %p76, %p77
    %p79 = scmp.ne.s32.totalorder %s67, %s68
    %p80 = scmp.eq.s32.totalorder %s16, 1
    %p81 = por %p79, %p80
    %p83 = scmp.ne.s32.totalorder %s68, %s82
    %p84 = scmp.eq.s32.totalorder %s16, 0
    %p85 = por %p83, %p84
    %s87 = sadd.s32 %s86, 1
    %p90 = scmp.eq.s32.totalorder %s10, 1
    %p91 = scmp.ne.s32.totalorder %s86, %s88
    %p92 = scmp.eq.s32.totalorder %s10, 0
    %p93 = por %p91, %p92
    %p94 = scmp.ne.s32.totalorder %s86, %s88
    %p95 = scmp.eq.s32.totalorder %s15, 1
    %p96 = por %p94, %p95
    %p97 = scmp.ne.s32.totalorder %s88, %s89
    %p98 = scmp.eq.s32.totalorder %s15, 0
    %p99 = por %p97, %p98
    %p100 = scmp.ne.s32.totalorder %s88, %s89
    %p101 = scmp.eq.s32.totalorder %s16, 1
    %p102 = por %p100, %p101
    %p104 = scmp.ne.s32.totalorder %s89, %s103
    %p105 = scmp.eq.s32.totalorder %s16, 0
    %p106 = por %p104, %p105
    %s107 = ssub.s32 %s10, %s17
    %p108 = scmp.eq.s32.totalorder %s107, 0
    %s110 = sadd.s32 %s109, 1
    %s111 = scalar_select %p108, %s109, %s110
    %p114 = pneg %p108
    %p115 = scmp.eq.s32.totalorder %s10, 1
    %p116 = por %p114, %p115
    %p117 = scmp.ne.s32.totalorder %s109, %s112
    %p118 = scmp.eq.s32.totalorder %s10, 0
    %p119 = por %p117, %p118
    %p120 = scmp.ne.s32.totalorder %s109, %s112
    %p121 = scmp.eq.s32.totalorder %s15, 1
    %p122 = por %p120, %p121
    %p123 = scmp.ne.s32.totalorder %s112, %s113
    %p124 = scmp.eq.s32.totalorder %s15, 0
    %p125 = por %p123, %p124
    %p126 = scmp.ne.s32.totalorder %s112, %s113
    %p127 = scmp.eq.s32.totalorder %s16, 1
    %p128 = por %p126, %p127
    %p130 = scmp.ne.s32.totalorder %s113, %s129
    %p131 = scmp.eq.s32.totalorder %s16, 0
    %p132 = por %p130, %p131
    %p133 = scmp.le.s32.totalorder 1, %s10
    %p134 = scmp.lt.s32.totalorder %s10, 3
    %p135 = pnand %p133, %p134
    %p136 = pneg %p135
    // Predicated region
    $region9: #{siamese_forward.2} parent=5 // pred_check
      _
    $region10: #{siamese_forward.2} parent=5 // pred_check_branch
      %138 = sbr.rel (%p135) target = $region12
    $region11: #{siamese_forward.2} parent=5 // pred_region
      %s139 = ssub.s32 %s10, 1
      // Predicated region
      $region13: #{siamese_forward.2} parent=11 // pred_check
        %p140 = pneg %p57
      $region14: #{siamese_forward.2} parent=11 // pred_check_branch
        %142 = sbr.rel (%p140) target = $region16
      $region15: #{siamese_forward.2} parent=11 // pred_region
        _
      $region16: #{siamese_forward.2} parent=11 // pred_fallthru
        _
      // Predicated region
      $region17: #{siamese_forward.2} parent=11 // pred_check
        %p143 = pneg %p78
      $region18: #{siamese_forward.2} parent=11 // pred_check_branch
        %145 = sbr.rel (%p143) target = $region20
      $region19: #{siamese_forward.2} parent=11 // pred_region
        _
      $region20: #{siamese_forward.2} parent=11 // pred_fallthru
        _
      // Predicated region
      $region21: #{siamese_forward.2} parent=11 // pred_check
        %p146 = pneg %p99
      $region22: #{siamese_forward.2} parent=11 // pred_check_branch
        %148 = sbr.rel (%p146) target = $region24
      $region23: #{siamese_forward.2} parent=11 // pred_region
        _
      $region24: #{siamese_forward.2} parent=11 // pred_fallthru
        _
    $region12: #{siamese_forward.2} parent=5 // pred_fallthru
      _
    %p149 = scmp.lt.s32.totalorder %s10, 2
    // Predicated region
    $region25: #{siamese_forward.2} parent=5 // pred_check
      %p150 = pneg %p149
    $region26: #{siamese_forward.2} parent=5 // pred_check_branch
      %152 = sbr.rel (%p150) target = $region28
    $region27: #{siamese_forward.2} parent=5 // pred_region
      // Predicated region
      $region29: #{siamese_forward.2} parent=27 // pred_check
        %p153 = pneg %p30
      $region30: #{siamese_forward.2} parent=27 // pred_check_branch
        %155 = sbr.rel (%p153) target = $region32
      $region31: #{siamese_forward.2} parent=27 // pred_region
        %p156 = scmp.lt.s32.totalorder %s10, 1
        %s157 = scalar_select %p156, %s10, 1
        %s158 = smul.addr %s157, 4
        %s159 = smul.addr %s158, 4
        %s160 = scalar_lea.vmem %s0, %s159
      $region32: #{siamese_forward.2} parent=27 // pred_fallthru
        _
    $region28: #{siamese_forward.2} parent=5 // pred_fallthru
      _
    %p161 = scmp.le.s32.totalorder 1, %s10
    %p162 = scmp.lt.s32.totalorder %s10, 3
    %p163 = pnand %p161, %p162
    %p164 = pneg %p163
    // Predicated region
    $region33: #{siamese_forward.2} parent=5 // pred_check
      _
    $region34: #{siamese_forward.2} parent=5 // pred_check_branch
      %166 = sbr.rel (%p163) target = $region36
    $region35: #{siamese_forward.2} parent=5 // pred_region
      %s167 = ssub.s32 %s10, 1
      %p168 = scmp.lt.s32.totalorder %s15, 1
      %s169 = scalar_select %p168, %s15, 1
      %s170 = smul.addr %s169, 4
      %s171 = smul.addr %s170, 4
      %s172 = scalar_lea.vmem %s0, %s171
      %p173 = pneg %p36
      %p174 = pneg %p33
      %p175 = pneg %p57
      %p176 = pneg %p54
      %p177 = pneg %p78
      %p178 = pneg %p75
      %p179 = pneg %p99
      %p180 = pneg %p96
      %p181 = pneg %p125
      %p182 = pneg %p122
      %p183 = scmp.lt.s32.totalorder %s15, 1
      %s184 = scalar_select %p183, %s15, 1
      %s185 = smul.addr %s184, 2
      %s186 = smul.addr %s185, 2
      %s187 = scalar_lea.vmem %s4, %s186
      %p188 = scmp.lt.s32.totalorder %s15, 1
      %s189 = scalar_select %p188, %s15, 1
      %s190 = smul.addr %s189, 4
      %s191 = smul.addr %s190, 4
      %s192 = scalar_lea.vmem %s0, %s191
      %p193 = scmp.lt.s32.totalorder %s15, 1
      %s194 = scalar_select %p193, %s15, 1
      %s195 = smul.addr %s194, 2
      %s196 = smul.addr %s195, 2
      %s197 = scalar_lea.vmem %s4, %s196
      %v199 = vld [vmem:[%s192] sm:$0xff]
      %v200 = vld [vmem:[%s192 + $0x8] sm:$0xff]
      %v201 = vld [vmem:[%s1] sm:$0xff]
      %v202 = vld [vmem:[%s1 + $0x8] sm:$0xff]
      %v203 = vld [vmem:[%s1 + $0x10] sm:$0xff]
      %v204 = vld [vmem:[%s1 + $0x18] sm:$0xff]
      %v205 = vld [vmem:[%s1 + $0x20] sm:$0xff]
      %v206 = vld [vmem:[%s1 + $0x28] sm:$0xff]
      %v207 = vld [vmem:[%s1 + $0x30] sm:$0xff]
      %v208 = vld [vmem:[%s1 + $0x38] sm:$0xff]
      %v209 = vld [vmem:[%s1 + $0x40] sm:$0xff]
      %v210 = vld [vmem:[%s1 + $0x48] sm:$0xff]
      %v211 = vld [vmem:[%s1 + $0x50] sm:$0xff]
      %v212 = vld [vmem:[%s1 + $0x58] sm:$0xff]
      %v213 = vld [vmem:[%s1 + $0x60] sm:$0xff]
      %v214 = vld [vmem:[%s1 + $0x68] sm:$0xff]
      %v215 = vld [vmem:[%s1 + $0x70] sm:$0xff]
      %v216 = vld [vmem:[%s1 + $0x78] sm:$0xff]
      %v217 = vld [vmem:[%s1 + $0x80] sm:$0xff]
      %v218 = vld [vmem:[%s1 + $0x88] sm:$0xff]
      %v219 = vld [vmem:[%s1 + $0x90] sm:$0xff]
      %v220 = vld [vmem:[%s1 + $0x98] sm:$0xff]
      %v221 = vld [vmem:[%s1 + $0xa0] sm:$0xff]
      %v222 = vld [vmem:[%s1 + $0xa8] sm:$0xff]
      %v223 = vld [vmem:[%s1 + $0xb0] sm:$0xff]
      %v224 = vld [vmem:[%s1 + $0xb8] sm:$0xff]
      %v225 = vld [vmem:[%s1 + $0xc0] sm:$0xff]
      %v226 = vld [vmem:[%s1 + $0xc8] sm:$0xff]
      %v227 = vld [vmem:[%s1 + $0xd0] sm:$0xff]
      %v228 = vld [vmem:[%s1 + $0xd8] sm:$0xff]
      %v229 = vld [vmem:[%s1 + $0xe0] sm:$0xff]
      %v230 = vld [vmem:[%s1 + $0xe8] sm:$0xff]
      %v231 = vld [vmem:[%s1 + $0xf0] sm:$0xff]
      %v232 = vld [vmem:[%s1 + $0xf8] sm:$0xff]
      %v233 = vld [vmem:[%s1 + $0x100] sm:$0xff]
      %v234 = vld [vmem:[%s1 + $0x108] sm:$0xff]
      %v235 = vld [vmem:[%s1 + $0x110] sm:$0xff]
      %v236 = vld [vmem:[%s1 + $0x118] sm:$0xff]
      %v237 = vld [vmem:[%s1 + $0x120] sm:$0xff]
      %v238 = vld [vmem:[%s1 + $0x128] sm:$0xff]
      %v239 = vld [vmem:[%s1 + $0x130] sm:$0xff]
      %v240 = vld [vmem:[%s1 + $0x138] sm:$0xff]
      %v241 = vld [vmem:[%s1 + $0x140] sm:$0xff]
      %v242 = vld [vmem:[%s1 + $0x148] sm:$0xff]
      %v243 = vld [vmem:[%s1 + $0x150] sm:$0xff]
      %v244 = vld [vmem:[%s1 + $0x158] sm:$0xff]
      %v245 = vld [vmem:[%s1 + $0x160] sm:$0xff]
      %v246 = vld [vmem:[%s1 + $0x168] sm:$0xff]
      %v247 = vld [vmem:[%s1 + $0x170] sm:$0xff]
      %v248 = vld [vmem:[%s1 + $0x178] sm:$0xff]
      %v249 = vld [vmem:[%s1 + $0x180] sm:$0xff]
      %v250 = vld [vmem:[%s1 + $0x188] sm:$0xff]
      %v251 = vld [vmem:[%s1 + $0x190] sm:$0xff]
      %v252 = vld [vmem:[%s1 + $0x198] sm:$0xff]
      %v253 = vld [vmem:[%s1 + $0x1a0] sm:$0xff]
      %v254 = vld [vmem:[%s1 + $0x1a8] sm:$0xff]
      %v255 = vld [vmem:[%s1 + $0x1b0] sm:$0xff]
      %v256 = vld [vmem:[%s1 + $0x1b8] sm:$0xff]
      %v257 = vld [vmem:[%s1 + $0x1c0] sm:$0xff]
      %v258 = vld [vmem:[%s1 + $0x1c8] sm:$0xff]
      %v259 = vld [vmem:[%s1 + $0x1d0] sm:$0xff]
      %v260 = vld [vmem:[%s1 + $0x1d8] sm:$0xff]
      %v261 = vld [vmem:[%s1 + $0x1e0] sm:$0xff]
      %v262 = vld [vmem:[%s1 + $0x1e8] sm:$0xff]
      %v263 = vld [vmem:[%s1 + $0x1f0] sm:$0xff]
      %v264 = vld [vmem:[%s1 + $0x1f8] sm:$0xff]
      %v265 = vld [vmem:[%s1 + $0x200] sm:$0xff]
      %v266 = vld [vmem:[%s1 + $0x208] sm:$0xff]
      %v267 = vld [vmem:[%s1 + $0x210] sm:$0xff]
      %v268 = vld [vmem:[%s1 + $0x218] sm:$0xff]
      %v269 = vld [vmem:[%s1 + $0x220] sm:$0xff]
      %v270 = vld [vmem:[%s1 + $0x228] sm:$0xff]
      %v271 = vld [vmem:[%s1 + $0x230] sm:$0xff]
      %v272 = vld [vmem:[%s1 + $0x238] sm:$0xff]
      %v273 = vld [vmem:[%s1 + $0x240] sm:$0xff]
      %v274 = vld [vmem:[%s1 + $0x248] sm:$0xff]
      %v275 = vld [vmem:[%s1 + $0x250] sm:$0xff]
      %v276 = vld [vmem:[%s1 + $0x258] sm:$0xff]
      %v277 = vld [vmem:[%s1 + $0x260] sm:$0xff]
      %v278 = vld [vmem:[%s1 + $0x268] sm:$0xff]
      %v279 = vld [vmem:[%s1 + $0x270] sm:$0xff]
      %v280 = vld [vmem:[%s1 + $0x278] sm:$0xff]
      %v281 = vld [vmem:[%s1 + $0x280] sm:$0xff]
      %v282 = vld [vmem:[%s1 + $0x288] sm:$0xff]
      %v283 = vld [vmem:[%s1 + $0x290] sm:$0xff]
      %v284 = vld [vmem:[%s1 + $0x298] sm:$0xff]
      %v285 = vld [vmem:[%s1 + $0x2a0] sm:$0xff]
      %v286 = vld [vmem:[%s1 + $0x2a8] sm:$0xff]
      %v287 = vld [vmem:[%s1 + $0x2b0] sm:$0xff]
      %v288 = vld [vmem:[%s1 + $0x2b8] sm:$0xff]
      %v289 = vld [vmem:[%s1 + $0x2c0] sm:$0xff]
      %v290 = vld [vmem:[%s1 + $0x2c8] sm:$0xff]
      %v291 = vld [vmem:[%s1 + $0x2d0] sm:$0xff]
      %v292 = vld [vmem:[%s1 + $0x2d8] sm:$0xff]
      %v293 = vld [vmem:[%s1 + $0x2e0] sm:$0xff]
      %v294 = vld [vmem:[%s1 + $0x2e8] sm:$0xff]
      %v295 = vld [vmem:[%s1 + $0x2f0] sm:$0xff]
      %v296 = vld [vmem:[%s1 + $0x2f8] sm:$0xff]
      %v297 = vld [vmem:[%s1 + $0x300] sm:$0xff]
      %v298 = vld [vmem:[%s1 + $0x308] sm:$0xff]
      %v299 = vld [vmem:[%s1 + $0x310] sm:$0xff]
      %v300 = vld [vmem:[%s1 + $0x318] sm:$0xff]
      %v301 = vld [vmem:[%s1 + $0x320] sm:$0xff]
      %v302 = vld [vmem:[%s1 + $0x328] sm:$0xff]
      %v303 = vld [vmem:[%s1 + $0x330] sm:$0xff]
      %v304 = vld [vmem:[%s1 + $0x338] sm:$0xff]
      %v305 = vld [vmem:[%s1 + $0x340] sm:$0xff]
      %v306 = vld [vmem:[%s1 + $0x348] sm:$0xff]
      %v307 = vld [vmem:[%s1 + $0x350] sm:$0xff]
      %v308 = vld [vmem:[%s1 + $0x358] sm:$0xff]
      %v309 = vld [vmem:[%s1 + $0x360] sm:$0xff]
      %v310 = vld [vmem:[%s1 + $0x368] sm:$0xff]
      %v311 = vld [vmem:[%s1 + $0x370] sm:$0xff]
      %v312 = vld [vmem:[%s1 + $0x378] sm:$0xff]
      %v313 = vld [vmem:[%s1 + $0x380] sm:$0xff]
      %v314 = vld [vmem:[%s1 + $0x388] sm:$0xff]
      %v315 = vld [vmem:[%s1 + $0x390] sm:$0xff]
      %v316 = vld [vmem:[%s1 + $0x398] sm:$0xff]
      %v317 = vld [vmem:[%s1 + $0x3a0] sm:$0xff]
      %v318 = vld [vmem:[%s1 + $0x3a8] sm:$0xff]
      %v319 = vld [vmem:[%s1 + $0x3b0] sm:$0xff]
      %v320 = vld [vmem:[%s1 + $0x3b8] sm:$0xff]
      %v321 = vld [vmem:[%s1 + $0x3c0] sm:$0xff]
      %v322 = vld [vmem:[%s1 + $0x3c8] sm:$0xff]
      %v323 = vld [vmem:[%s1 + $0x3d0] sm:$0xff]
      %v324 = vld [vmem:[%s1 + $0x3d8] sm:$0xff]
      %v325 = vld [vmem:[%s1 + $0x3e0] sm:$0xff]
      %v326 = vld [vmem:[%s1 + $0x3e8] sm:$0xff]
      %v327 = vld [vmem:[%s1 + $0x3f0] sm:$0xff]
      %v328 = vld [vmem:[%s1 + $0x3f8] sm:$0xff]
      %v329 = vld [vmem:[%s3] sm:$0xff]
      %v331 = vlaneseq
      %v332 = vshrl.u32 %v331, 7
      %v333 = vsub.s32 0, %v332
      %v334 = vrot.slane %v329, %v333
      %v335 = vlaneseq
      %v336 = vshrl.u32 %v335, 7
      %v337 = vsub.s32 1, %v336
      %v338 = vrot.slane %v329, %v337
      %v339 = vlaneseq
      %v340 = vshrl.u32 %v339, 7
      %v341 = vsub.s32 2, %v340
      %v342 = vrot.slane %v329, %v341
      %v343 = vlaneseq
      %v344 = vshrl.u32 %v343, 7
      %v345 = vsub.s32 3, %v344
      %v346 = vrot.slane %v329, %v345
      %v347 = vlaneseq
      %v348 = vshrl.u32 %v347, 7
      %v349 = vsub.s32 4, %v348
      %v350 = vrot.slane %v329, %v349
      %v351 = vlaneseq
      %v352 = vshrl.u32 %v351, 7
      %v353 = vsub.s32 5, %v352
      %v354 = vrot.slane %v329, %v353
      %v355 = vlaneseq
      %v356 = vshrl.u32 %v355, 7
      %v357 = vsub.s32 6, %v356
      %v358 = vrot.slane %v329, %v357
      %v359 = vlaneseq
      %v360 = vshrl.u32 %v359, 7
      %v361 = vsub.s32 7, %v360
      %v362 = vrot.slane %v329, %v361
      %v373 = vunpack.c.l.b16 %v199
      %v374 = vunpack.c.h.b16 %v199
      %v375 = vunpack.c.l.b16 %v200
      %v376 = vunpack.c.h.b16 %v200
      %v377 = vpack.c.b16 %v375, %v373
      %v378 = vpack.c.b16 %v376, %v374
      %v509 = vunpack.c.l.b16 %v201
      %v510 = vunpack.c.h.b16 %v201
      %v511 = vunpack.c.l.b16 %v202
      %v512 = vunpack.c.h.b16 %v202
      %v513 = vunpack.c.l.b16 %v203
      %v514 = vunpack.c.h.b16 %v203
      %v515 = vunpack.c.l.b16 %v204
      %v516 = vunpack.c.h.b16 %v204
      %v517 = vunpack.c.l.b16 %v205
      %v518 = vunpack.c.h.b16 %v205
      %v519 = vunpack.c.l.b16 %v206
      %v520 = vunpack.c.h.b16 %v206
      %v521 = vunpack.c.l.b16 %v207
      %v522 = vunpack.c.h.b16 %v207
      %v523 = vunpack.c.l.b16 %v208
      %v524 = vunpack.c.h.b16 %v208
      %v525 = vunpack.c.l.b16 %v209
      %v526 = vunpack.c.h.b16 %v209
      %v527 = vunpack.c.l.b16 %v210
      %v528 = vunpack.c.h.b16 %v210
      %v529 = vunpack.c.l.b16 %v211
      %v530 = vunpack.c.h.b16 %v211
      %v531 = vunpack.c.l.b16 %v212
      %v532 = vunpack.c.h.b16 %v212
      %v533 = vunpack.c.l.b16 %v213
      %v534 = vunpack.c.h.b16 %v213
      %v535 = vunpack.c.l.b16 %v214
      %v536 = vunpack.c.h.b16 %v214
      %v537 = vunpack.c.l.b16 %v215
      %v538 = vunpack.c.h.b16 %v215
      %v539 = vunpack.c.l.b16 %v216
      %v540 = vunpack.c.h.b16 %v216
      %v541 = vunpack.c.l.b16 %v217
      %v542 = vunpack.c.h.b16 %v217
      %v543 = vunpack.c.l.b16 %v218
      %v544 = vunpack.c.h.b16 %v218
      %v545 = vunpack.c.l.b16 %v219
      %v546 = vunpack.c.h.b16 %v219
      %v547 = vunpack.c.l.b16 %v220
      %v548 = vunpack.c.h.b16 %v220
      %v549 = vunpack.c.l.b16 %v221
      %v550 = vunpack.c.h.b16 %v221
      %v551 = vunpack.c.l.b16 %v222
      %v552 = vunpack.c.h.b16 %v222
      %v553 = vunpack.c.l.b16 %v223
      %v554 = vunpack.c.h.b16 %v223
      %v555 = vunpack.c.l.b16 %v224
      %v556 = vunpack.c.h.b16 %v224
      %v557 = vunpack.c.l.b16 %v225
      %v558 = vunpack.c.h.b16 %v225
      %v559 = vunpack.c.l.b16 %v226
      %v560 = vunpack.c.h.b16 %v226
      %v561 = vunpack.c.l.b16 %v227
      %v562 = vunpack.c.h.b16 %v227
      %v563 = vunpack.c.l.b16 %v228
      %v564 = vunpack.c.h.b16 %v228
      %v565 = vunpack.c.l.b16 %v229
      %v566 = vunpack.c.h.b16 %v229
      %v567 = vunpack.c.l.b16 %v230
      %v568 = vunpack.c.h.b16 %v230
      %v569 = vunpack.c.l.b16 %v231
      %v570 = vunpack.c.h.b16 %v231
      %v571 = vunpack.c.l.b16 %v232
      %v572 = vunpack.c.h.b16 %v232
      %v573 = vunpack.c.l.b16 %v233
      %v574 = vunpack.c.h.b16 %v233
      %v575 = vunpack.c.l.b16 %v234
      %v576 = vunpack.c.h.b16 %v234
      %v577 = vunpack.c.l.b16 %v235
      %v578 = vunpack.c.h.b16 %v235
      %v579 = vunpack.c.l.b16 %v236
      %v580 = vunpack.c.h.b16 %v236
      %v581 = vunpack.c.l.b16 %v237
      %v582 = vunpack.c.h.b16 %v237
      %v583 = vunpack.c.l.b16 %v238
      %v584 = vunpack.c.h.b16 %v238
      %v585 = vunpack.c.l.b16 %v239
      %v586 = vunpack.c.h.b16 %v239
      %v587 = vunpack.c.l.b16 %v240
      %v588 = vunpack.c.h.b16 %v240
      %v589 = vunpack.c.l.b16 %v241
      %v590 = vunpack.c.h.b16 %v241
      %v591 = vunpack.c.l.b16 %v242
      %v592 = vunpack.c.h.b16 %v242
      %v593 = vunpack.c.l.b16 %v243
      %v594 = vunpack.c.h.b16 %v243
      %v595 = vunpack.c.l.b16 %v244
      %v596 = vunpack.c.h.b16 %v244
      %v597 = vunpack.c.l.b16 %v245
      %v598 = vunpack.c.h.b16 %v245
      %v599 = vunpack.c.l.b16 %v246
      %v600 = vunpack.c.h.b16 %v246
      %v601 = vunpack.c.l.b16 %v247
      %v602 = vunpack.c.h.b16 %v247
      %v603 = vunpack.c.l.b16 %v248
      %v604 = vunpack.c.h.b16 %v248
      %v605 = vunpack.c.l.b16 %v249
      %v606 = vunpack.c.h.b16 %v249
      %v607 = vunpack.c.l.b16 %v250
      %v608 = vunpack.c.h.b16 %v250
      %v609 = vunpack.c.l.b16 %v251
      %v610 = vunpack.c.h.b16 %v251
      %v611 = vunpack.c.l.b16 %v252
      %v612 = vunpack.c.h.b16 %v252
      %v613 = vunpack.c.l.b16 %v253
      %v614 = vunpack.c.h.b16 %v253
      %v615 = vunpack.c.l.b16 %v254
      %v616 = vunpack.c.h.b16 %v254
      %v617 = vunpack.c.l.b16 %v255
      %v618 = vunpack.c.h.b16 %v255
      %v619 = vunpack.c.l.b16 %v256
      %v620 = vunpack.c.h.b16 %v256
      %v621 = vunpack.c.l.b16 %v257
      %v622 = vunpack.c.h.b16 %v257
      %v623 = vunpack.c.l.b16 %v258
      %v624 = vunpack.c.h.b16 %v258
      %v625 = vunpack.c.l.b16 %v259
      %v626 = vunpack.c.h.b16 %v259
      %v627 = vunpack.c.l.b16 %v260
      %v628 = vunpack.c.h.b16 %v260
      %v629 = vunpack.c.l.b16 %v261
      %v630 = vunpack.c.h.b16 %v261
      %v631 = vunpack.c.l.b16 %v262
      %v632 = vunpack.c.h.b16 %v262
      %v633 = vunpack.c.l.b16 %v263
      %v634 = vunpack.c.h.b16 %v263
      %v635 = vunpack.c.l.b16 %v264
      %v636 = vunpack.c.h.b16 %v264
      %v637 = vunpack.c.l.b16 %v265
      %v638 = vunpack.c.h.b16 %v265
      %v639 = vunpack.c.l.b16 %v266
      %v640 = vunpack.c.h.b16 %v266
      %v641 = vunpack.c.l.b16 %v267
      %v642 = vunpack.c.h.b16 %v267
      %v643 = vunpack.c.l.b16 %v268
      %v644 = vunpack.c.h.b16 %v268
      %v645 = vunpack.c.l.b16 %v269
      %v646 = vunpack.c.h.b16 %v269
      %v647 = vunpack.c.l.b16 %v270
      %v648 = vunpack.c.h.b16 %v270
      %v649 = vunpack.c.l.b16 %v271
      %v650 = vunpack.c.h.b16 %v271
      %v651 = vunpack.c.l.b16 %v272
      %v652 = vunpack.c.h.b16 %v272
      %v653 = vunpack.c.l.b16 %v273
      %v654 = vunpack.c.h.b16 %v273
      %v655 = vunpack.c.l.b16 %v274
      %v656 = vunpack.c.h.b16 %v274
      %v657 = vunpack.c.l.b16 %v275
      %v658 = vunpack.c.h.b16 %v275
      %v659 = vunpack.c.l.b16 %v276
      %v660 = vunpack.c.h.b16 %v276
      %v661 = vunpack.c.l.b16 %v277
      %v662 = vunpack.c.h.b16 %v277
      %v663 = vunpack.c.l.b16 %v278
      %v664 = vunpack.c.h.b16 %v278
      %v665 = vunpack.c.l.b16 %v279
      %v666 = vunpack.c.h.b16 %v279
      %v667 = vunpack.c.l.b16 %v280
      %v668 = vunpack.c.h.b16 %v280
      %v669 = vunpack.c.l.b16 %v281
      %v670 = vunpack.c.h.b16 %v281
      %v671 = vunpack.c.l.b16 %v282
      %v672 = vunpack.c.h.b16 %v282
      %v673 = vunpack.c.l.b16 %v283
      %v674 = vunpack.c.h.b16 %v283
      %v675 = vunpack.c.l.b16 %v284
      %v676 = vunpack.c.h.b16 %v284
      %v677 = vunpack.c.l.b16 %v285
      %v678 = vunpack.c.h.b16 %v285
      %v679 = vunpack.c.l.b16 %v286
      %v680 = vunpack.c.h.b16 %v286
      %v681 = vunpack.c.l.b16 %v287
      %v682 = vunpack.c.h.b16 %v287
      %v683 = vunpack.c.l.b16 %v288
      %v684 = vunpack.c.h.b16 %v288
      %v685 = vunpack.c.l.b16 %v289
      %v686 = vunpack.c.h.b16 %v289
      %v687 = vunpack.c.l.b16 %v290
      %v688 = vunpack.c.h.b16 %v290
      %v689 = vunpack.c.l.b16 %v291
      %v690 = vunpack.c.h.b16 %v291
      %v691 = vunpack.c.l.b16 %v292
      %v692 = vunpack.c.h.b16 %v292
      %v693 = vunpack.c.l.b16 %v293
      %v694 = vunpack.c.h.b16 %v293
      %v695 = vunpack.c.l.b16 %v294
      %v696 = vunpack.c.h.b16 %v294
      %v697 = vunpack.c.l.b16 %v295
      %v698 = vunpack.c.h.b16 %v295
      %v699 = vunpack.c.l.b16 %v296
      %v700 = vunpack.c.h.b16 %v296
      %v701 = vunpack.c.l.b16 %v297
      %v702 = vunpack.c.h.b16 %v297
      %v703 = vunpack.c.l.b16 %v298
      %v704 = vunpack.c.h.b16 %v298
      %v705 = vunpack.c.l.b16 %v299
      %v706 = vunpack.c.h.b16 %v299
      %v707 = vunpack.c.l.b16 %v300
      %v708 = vunpack.c.h.b16 %v300
      %v709 = vunpack.c.l.b16 %v301
      %v710 = vunpack.c.h.b16 %v301
      %v711 = vunpack.c.l.b16 %v302
      %v712 = vunpack.c.h.b16 %v302
      %v713 = vunpack.c.l.b16 %v303
      %v714 = vunpack.c.h.b16 %v303
      %v715 = vunpack.c.l.b16 %v304
      %v716 = vunpack.c.h.b16 %v304
      %v717 = vunpack.c.l.b16 %v305
      %v718 = vunpack.c.h.b16 %v305
      %v719 = vunpack.c.l.b16 %v306
      %v720 = vunpack.c.h.b16 %v306
      %v721 = vunpack.c.l.b16 %v307
      %v722 = vunpack.c.h.b16 %v307
      %v723 = vunpack.c.l.b16 %v308
      %v724 = vunpack.c.h.b16 %v308
      %v725 = vunpack.c.l.b16 %v309
      %v726 = vunpack.c.h.b16 %v309
      %v727 = vunpack.c.l.b16 %v310
      %v728 = vunpack.c.h.b16 %v310
      %v729 = vunpack.c.l.b16 %v311
      %v730 = vunpack.c.h.b16 %v311
      %v731 = vunpack.c.l.b16 %v312
      %v732 = vunpack.c.h.b16 %v312
      %v733 = vunpack.c.l.b16 %v313
      %v734 = vunpack.c.h.b16 %v313
      %v735 = vunpack.c.l.b16 %v314
      %v736 = vunpack.c.h.b16 %v314
      %v737 = vunpack.c.l.b16 %v315
      %v738 = vunpack.c.h.b16 %v315
      %v739 = vunpack.c.l.b16 %v316
      %v740 = vunpack.c.h.b16 %v316
      %v741 = vunpack.c.l.b16 %v317
      %v742 = vunpack.c.h.b16 %v317
      %v743 = vunpack.c.l.b16 %v318
      %v744 = vunpack.c.h.b16 %v318
      %v745 = vunpack.c.l.b16 %v319
      %v746 = vunpack.c.h.b16 %v319
      %v747 = vunpack.c.l.b16 %v320
      %v748 = vunpack.c.h.b16 %v320
      %v749 = vunpack.c.l.b16 %v321
      %v750 = vunpack.c.h.b16 %v321
      %v751 = vunpack.c.l.b16 %v322
      %v752 = vunpack.c.h.b16 %v322
      %v753 = vunpack.c.l.b16 %v323
      %v754 = vunpack.c.h.b16 %v323
      %v755 = vunpack.c.l.b16 %v324
      %v756 = vunpack.c.h.b16 %v324
      %v757 = vunpack.c.l.b16 %v325
      %v758 = vunpack.c.h.b16 %v325
      %v759 = vunpack.c.l.b16 %v326
      %v760 = vunpack.c.h.b16 %v326
      %v761 = vunpack.c.l.b16 %v327
      %v762 = vunpack.c.h.b16 %v327
      %v763 = vunpack.c.l.b16 %v328
      %v764 = vunpack.c.h.b16 %v328
      %v765 = vpack.c.b16 %v517, %v509
      %v766 = vpack.c.b16 %v518, %v510
      %v767 = vpack.c.b16 %v519, %v511
      %v768 = vpack.c.b16 %v520, %v512
      %v769 = vpack.c.b16 %v521, %v513
      %v770 = vpack.c.b16 %v522, %v514
      %v771 = vpack.c.b16 %v523, %v515
      %v772 = vpack.c.b16 %v524, %v516
      %v773 = vpack.c.b16 %v533, %v525
      %v774 = vpack.c.b16 %v534, %v526
      %v775 = vpack.c.b16 %v535, %v527
      %v776 = vpack.c.b16 %v536, %v528
      %v777 = vpack.c.b16 %v537, %v529
      %v778 = vpack.c.b16 %v538, %v530
      %v779 = vpack.c.b16 %v539, %v531
      %v780 = vpack.c.b16 %v540, %v532
      %v781 = vpack.c.b16 %v549, %v541
      %v782 = vpack.c.b16 %v550, %v542
      %v783 = vpack.c.b16 %v551, %v543
      %v784 = vpack.c.b16 %v552, %v544
      %v785 = vpack.c.b16 %v553, %v545
      %v786 = vpack.c.b16 %v554, %v546
      %v787 = vpack.c.b16 %v555, %v547
      %v788 = vpack.c.b16 %v556, %v548
      %v789 = vpack.c.b16 %v565, %v557
      %v790 = vpack.c.b16 %v566, %v558
      %v791 = vpack.c.b16 %v567, %v559
      %v792 = vpack.c.b16 %v568, %v560
      %v793 = vpack.c.b16 %v569, %v561
      %v794 = vpack.c.b16 %v570, %v562
      %v795 = vpack.c.b16 %v571, %v563
      %v796 = vpack.c.b16 %v572, %v564
      %v797 = vpack.c.b16 %v581, %v573
      %v798 = vpack.c.b16 %v582, %v574
      %v799 = vpack.c.b16 %v583, %v575
      %v800 = vpack.c.b16 %v584, %v576
      %v801 = vpack.c.b16 %v585, %v577
      %v802 = vpack.c.b16 %v586, %v578
      %v803 = vpack.c.b16 %v587, %v579
      %v804 = vpack.c.b16 %v588, %v580
      %v805 = vpack.c.b16 %v597, %v589
      %v806 = vpack.c.b16 %v598, %v590
      %v807 = vpack.c.b16 %v599, %v591
      %v808 = vpack.c.b16 %v600, %v592
      %v809 = vpack.c.b16 %v601, %v593
      %v810 = vpack.c.b16 %v602, %v594
      %v811 = vpack.c.b16 %v603, %v595
      %v812 = vpack.c.b16 %v604, %v596
      %v813 = vpack.c.b16 %v613, %v605
      %v814 = vpack.c.b16 %v614, %v606
      %v815 = vpack.c.b16 %v615, %v607
      %v816 = vpack.c.b16 %v616, %v608
      %v817 = vpack.c.b16 %v617, %v609
      %v818 = vpack.c.b16 %v618, %v610
      %v819 = vpack.c.b16 %v619, %v611
      %v820 = vpack.c.b16 %v620, %v612
      %v821 = vpack.c.b16 %v629, %v621
      %v822 = vpack.c.b16 %v630, %v622
      %v823 = vpack.c.b16 %v631, %v623
      %v824 = vpack.c.b16 %v632, %v624
      %v825 = vpack.c.b16 %v633, %v625
      %v826 = vpack.c.b16 %v634, %v626
      %v827 = vpack.c.b16 %v635, %v627
      %v828 = vpack.c.b16 %v636, %v628
      %v829 = vpack.c.b16 %v645, %v637
      %v830 = vpack.c.b16 %v646, %v638
      %v831 = vpack.c.b16 %v647, %v639
      %v832 = vpack.c.b16 %v648, %v640
      %v833 = vpack.c.b16 %v649, %v641
      %v834 = vpack.c.b16 %v650, %v642
      %v835 = vpack.c.b16 %v651, %v643
      %v836 = vpack.c.b16 %v652, %v644
      %v837 = vpack.c.b16 %v661, %v653
      %v838 = vpack.c.b16 %v662, %v654
      %v839 = vpack.c.b16 %v663, %v655
      %v840 = vpack.c.b16 %v664, %v656
      %v841 = vpack.c.b16 %v665, %v657
      %v842 = vpack.c.b16 %v666, %v658
      %v843 = vpack.c.b16 %v667, %v659
      %v844 = vpack.c.b16 %v668, %v660
      %v845 = vpack.c.b16 %v677, %v669
      %v846 = vpack.c.b16 %v678, %v670
      %v847 = vpack.c.b16 %v679, %v671
      %v848 = vpack.c.b16 %v680, %v672
      %v849 = vpack.c.b16 %v681, %v673
      %v850 = vpack.c.b16 %v682, %v674
      %v851 = vpack.c.b16 %v683, %v675
      %v852 = vpack.c.b16 %v684, %v676
      %v853 = vpack.c.b16 %v693, %v685
      %v854 = vpack.c.b16 %v694, %v686
      %v855 = vpack.c.b16 %v695, %v687
      %v856 = vpack.c.b16 %v696, %v688
      %v857 = vpack.c.b16 %v697, %v689
      %v858 = vpack.c.b16 %v698, %v690
      %v859 = vpack.c.b16 %v699, %v691
      %v860 = vpack.c.b16 %v700, %v692
      %v861 = vpack.c.b16 %v709, %v701
      %v862 = vpack.c.b16 %v710, %v702
      %v863 = vpack.c.b16 %v711, %v703
      %v864 = vpack.c.b16 %v712, %v704
      %v865 = vpack.c.b16 %v713, %v705
      %v866 = vpack.c.b16 %v714, %v706
      %v867 = vpack.c.b16 %v715, %v707
      %v868 = vpack.c.b16 %v716, %v708
      %v869 = vpack.c.b16 %v725, %v717
      %v870 = vpack.c.b16 %v726, %v718
      %v871 = vpack.c.b16 %v727, %v719
      %v872 = vpack.c.b16 %v728, %v720
      %v873 = vpack.c.b16 %v729, %v721
      %v874 = vpack.c.b16 %v730, %v722
      %v875 = vpack.c.b16 %v731, %v723
      %v876 = vpack.c.b16 %v732, %v724
      %v877 = vpack.c.b16 %v741, %v733
      %v878 = vpack.c.b16 %v742, %v734
      %v879 = vpack.c.b16 %v743, %v735
      %v880 = vpack.c.b16 %v744, %v736
      %v881 = vpack.c.b16 %v745, %v737
      %v882 = vpack.c.b16 %v746, %v738
      %v883 = vpack.c.b16 %v747, %v739
      %v884 = vpack.c.b16 %v748, %v740
      %v885 = vpack.c.b16 %v757, %v749
      %v886 = vpack.c.b16 %v758, %v750
      %v887 = vpack.c.b16 %v759, %v751
      %v888 = vpack.c.b16 %v760, %v752
      %v889 = vpack.c.b16 %v761, %v753
      %v890 = vpack.c.b16 %v762, %v754
      %v891 = vpack.c.b16 %v763, %v755
      %v892 = vpack.c.b16 %v764, %v756
      %1021 = vmatprep.subr.bf16.mxu0 %v766
      %1022 = vmatpush1.bf16.msra.mxu0 %v765
      %1023 = vmatprep.subr.bf16.mxu0 %v774
      %1024 = vmatpush1.bf16.msra.mxu0 %v773
      %1025 = vmatprep.subr.bf16.mxu0 %v782
      %1026 = vmatpush1.bf16.msra.mxu0 %v781
      %1027 = vmatprep.subr.bf16.mxu0 %v790
      %1028 = vmatpush1.bf16.msra.mxu0 %v789
      %1029 = vmatprep.subr.bf16.mxu0 %v798
      %1030 = vmatpush1.bf16.msra.mxu0 %v797
      %1031 = vmatprep.subr.bf16.mxu0 %v806
      %1032 = vmatpush1.bf16.msra.mxu0 %v805
      %1033 = vmatprep.subr.bf16.mxu0 %v814
      %1034 = vmatpush1.bf16.msra.mxu0 %v813
      %1035 = vmatprep.subr.bf16.mxu0 %v822
      %1036 = vmatpush1.bf16.msra.mxu0 %v821
      %1037 = vmatprep.subr.bf16.mxu0 %v830
      %1038 = vmatpush1.bf16.msra.mxu0 %v829
      %1039 = vmatprep.subr.bf16.mxu0 %v838
      %1040 = vmatpush1.bf16.msra.mxu0 %v837
      %1041 = vmatprep.subr.bf16.mxu0 %v846
      %1042 = vmatpush1.bf16.msra.mxu0 %v845
      %1043 = vmatprep.subr.bf16.mxu0 %v854
      %1044 = vmatpush1.bf16.msra.mxu0 %v853
      %1045 = vmatprep.subr.bf16.mxu0 %v862
      %1046 = vmatpush1.bf16.msra.mxu0 %v861
      %1047 = vmatprep.subr.bf16.mxu0 %v870
      %1048 = vmatpush1.bf16.msra.mxu0 %v869
      %1049 = vmatprep.subr.bf16.mxu0 %v878
      %1050 = vmatpush1.bf16.msra.mxu0 %v877
      %1051 = vmatprep.subr.bf16.mxu0 %v886
      %1052 = vmatpush1.bf16.msra.mxu0 %v885
      %1053 = vmatprep.mubr.bf16.mxu0 %v378
      %1054 = vmatmul.mubr.bf16.gmra.mrb[0].mxu0 %v377
      %v1055 = vpop.f32.mrb[0].mxu0
      %v1056 = vadd.f32 %v334, %v1055
      %v1057 = vpop.f32.mrb[0].mxu0
      %v1058 = vadd.f32 %v338, %v1057
      %v1059 = vpop.f32.mrb[0].mxu0
      %v1060 = vadd.f32 %v334, %v1059
      %v1061 = vpop.f32.mrb[0].mxu0
      %v1062 = vadd.f32 %v338, %v1061
      %1063 = vdwg.mxu0
      %1064 = vmatprep.subr.bf16.mxu0 %v768
      %1065 = vmatpush1.bf16.msra.mxu0 %v767
      %1066 = vmatprep.subr.bf16.mxu0 %v776
      %1067 = vmatpush1.bf16.msra.mxu0 %v775
      %1068 = vmatprep.subr.bf16.mxu0 %v784
      %1069 = vmatpush1.bf16.msra.mxu0 %v783
      %1070 = vmatprep.subr.bf16.mxu0 %v792
      %1071 = vmatpush1.bf16.msra.mxu0 %v791
      %1072 = vmatprep.subr.bf16.mxu0 %v800
      %1073 = vmatpush1.bf16.msra.mxu0 %v799
      %1074 = vmatprep.subr.bf16.mxu0 %v808
      %1075 = vmatpush1.bf16.msra.mxu0 %v807
      %1076 = vmatprep.subr.bf16.mxu0 %v816
      %1077 = vmatpush1.bf16.msra.mxu0 %v815
      %1078 = vmatprep.subr.bf16.mxu0 %v824
      %1079 = vmatpush1.bf16.msra.mxu0 %v823
      %1080 = vmatprep.subr.bf16.mxu0 %v832
      %1081 = vmatpush1.bf16.msra.mxu0 %v831
      %1082 = vmatprep.subr.bf16.mxu0 %v840
      %1083 = vmatpush1.bf16.msra.mxu0 %v839
      %1084 = vmatprep.subr.bf16.mxu0 %v848
      %1085 = vmatpush1.bf16.msra.mxu0 %v847
      %1086 = vmatprep.subr.bf16.mxu0 %v856
      %1087 = vmatpush1.bf16.msra.mxu0 %v855
      %1088 = vmatprep.subr.bf16.mxu0 %v864
      %1089 = vmatpush1.bf16.msra.mxu0 %v863
      %1090 = vmatprep.subr.bf16.mxu0 %v872
      %1091 = vmatpush1.bf16.msra.mxu0 %v871
      %1092 = vmatprep.subr.bf16.mxu0 %v880
      %1093 = vmatpush1.bf16.msra.mxu0 %v879
      %1094 = vmatprep.subr.bf16.mxu0 %v888
      %1095 = vmatpush1.bf16.msra.mxu0 %v887
      %1096 = vmatprep.mubr.bf16.mxu0 %v378
      %1097 = vmatmul.mubr.bf16.gmra.mrb[0].mxu0 %v377
      %v1098 = vpop.f32.mrb[0].mxu0
      %v1099 = vadd.f32 %v342, %v1098
      %v1100 = vpop.f32.mrb[0].mxu0
      %v1101 = vadd.f32 %v346, %v1100
      %v1102 = vpop.f32.mrb[0].mxu0
      %v1103 = vadd.f32 %v342, %v1102
      %v1104 = vpop.f32.mrb[0].mxu0
      %v1105 = vadd.f32 %v346, %v1104
      %1106 = vdwg.mxu0
      %1107 = vmatprep.subr.bf16.mxu0 %v770
      %1108 = vmatpush1.bf16.msra.mxu0 %v769
      %1109 = vmatprep.subr.bf16.mxu0 %v778
      %1110 = vmatpush1.bf16.msra.mxu0 %v777
      %1111 = vmatprep.subr.bf16.mxu0 %v786
      %1112 = vmatpush1.bf16.msra.mxu0 %v785
      %1113 = vmatprep.subr.bf16.mxu0 %v794
      %1114 = vmatpush1.bf16.msra.mxu0 %v793
      %1115 = vmatprep.subr.bf16.mxu0 %v802
      %1116 = vmatpush1.bf16.msra.mxu0 %v801
      %1117 = vmatprep.subr.bf16.mxu0 %v810
      %1118 = vmatpush1.bf16.msra.mxu0 %v809
      %1119 = vmatprep.subr.bf16.mxu0 %v818
      %1120 = vmatpush1.bf16.msra.mxu0 %v817
      %1121 = vmatprep.subr.bf16.mxu0 %v826
      %1122 = vmatpush1.bf16.msra.mxu0 %v825
      %1123 = vmatprep.subr.bf16.mxu0 %v834
      %1124 = vmatpush1.bf16.msra.mxu0 %v833
      %1125 = vmatprep.subr.bf16.mxu0 %v842
      %1126 = vmatpush1.bf16.msra.mxu0 %v841
      %1127 = vmatprep.subr.bf16.mxu0 %v850
      %1128 = vmatpush1.bf16.msra.mxu0 %v849
      %1129 = vmatprep.subr.bf16.mxu0 %v858
      %1130 = vmatpush1.bf16.msra.mxu0 %v857
      %1131 = vmatprep.subr.bf16.mxu0 %v866
      %1132 = vmatpush1.bf16.msra.mxu0 %v865
      %1133 = vmatprep.subr.bf16.mxu0 %v874
      %1134 = vmatpush1.bf16.msra.mxu0 %v873
      %1135 = vmatprep.subr.bf16.mxu0 %v882
      %1136 = vmatpush1.bf16.msra.mxu0 %v881
      %1137 = vmatprep.subr.bf16.mxu0 %v890
      %1138 = vmatpush1.bf16.msra.mxu0 %v889
      %1139 = vmatprep.mubr.bf16.mxu0 %v378
      %1140 = vmatmul.mubr.bf16.gmra.mrb[0].mxu0 %v377
      %v1141 = vpop.f32.mrb[0].mxu0
      %v1142 = vadd.f32 %v350, %v1141
      %v1143 = vpop.f32.mrb[0].mxu0
      %v1144 = vadd.f32 %v354, %v1143
      %v1145 = vpop.f32.mrb[0].mxu0
      %v1146 = vadd.f32 %v350, %v1145
      %v1147 = vpop.f32.mrb[0].mxu0
      %v1148 = vadd.f32 %v354, %v1147
      %1149 = vdwg.mxu0
      %1150 = vmatprep.subr.bf16.mxu0 %v772
      %1151 = vmatpush1.bf16.msra.mxu0 %v771
      %1152 = vmatprep.subr.bf16.mxu0 %v780
      %1153 = vmatpush1.bf16.msra.mxu0 %v779
      %1154 = vmatprep.subr.bf16.mxu0 %v788
      %1155 = vmatpush1.bf16.msra.mxu0 %v787
      %1156 = vmatprep.subr.bf16.mxu0 %v796
      %1157 = vmatpush1.bf16.msra.mxu0 %v795
      %1158 = vmatprep.subr.bf16.mxu0 %v804
      %1159 = vmatpush1.bf16.msra.mxu0 %v803
      %1160 = vmatprep.subr.bf16.mxu0 %v812
      %1161 = vmatpush1.bf16.msra.mxu0 %v811
      %1162 = vmatprep.subr.bf16.mxu0 %v820
      %1163 = vmatpush1.bf16.msra.mxu0 %v819
      %1164 = vmatprep.subr.bf16.mxu0 %v828
      %1165 = vmatpush1.bf16.msra.mxu0 %v827
      %1166 = vmatprep.subr.bf16.mxu0 %v836
      %1167 = vmatpush1.bf16.msra.mxu0 %v835
      %1168 = vmatprep.subr.bf16.mxu0 %v844
      %1169 = vmatpush1.bf16.msra.mxu0 %v843
      %1170 = vmatprep.subr.bf16.mxu0 %v852
      %1171 = vmatpush1.bf16.msra.mxu0 %v851
      %1172 = vmatprep.subr.bf16.mxu0 %v860
      %1173 = vmatpush1.bf16.msra.mxu0 %v859
      %1174 = vmatprep.subr.bf16.mxu0 %v868
      %1175 = vmatpush1.bf16.msra.mxu0 %v867
      %1176 = vmatprep.subr.bf16.mxu0 %v876
      %1177 = vmatpush1.bf16.msra.mxu0 %v875
      %1178 = vmatprep.subr.bf16.mxu0 %v884
      %1179 = vmatpush1.bf16.msra.mxu0 %v883
      %1180 = vmatprep.subr.bf16.mxu0 %v892
      %1181 = vmatpush1.bf16.msra.mxu0 %v891
      %1182 = vmatprep.mubr.bf16.mxu0 %v378
      %1183 = vmatmul.mubr.bf16.gmra.mrb[0].mxu0 %v377
      %v1184 = vpop.f32.mrb[0].mxu0
      %v1185 = vadd.f32 %v358, %v1184
      %v1186 = vpop.f32.mrb[0].mxu0
      %v1187 = vadd.f32 %v362, %v1186
      %v1188 = vpop.f32.mrb[0].mxu0
      %v1189 = vadd.f32 %v358, %v1188
      %v1190 = vpop.f32.mrb[0].mxu0
      %v1191 = vadd.f32 %v362, %v1190
      %1192 = vdwg.mxu0
      %1193 = vst [vmem:[#allocation2] sm:$0xff] %v1056
      %1194 = vst [vmem:[#allocation2 + $0x8] sm:$0xff] %v1058
      %1195 = vst [vmem:[#allocation2 + $0x10] sm:$0xff] %v1099
      %1196 = vst [vmem:[#allocation2 + $0x18] sm:$0xff] %v1101
      %1197 = vst [vmem:[#allocation2 + $0x20] sm:$0xff] %v1142
      %1198 = vst [vmem:[#allocation2 + $0x28] sm:$0xff] %v1144
      %1199 = vst [vmem:[#allocation2 + $0x30] sm:$0xff] %v1185
      %1200 = vst [vmem:[#allocation2 + $0x38] sm:$0xff] %v1187
      %1201 = vst [vmem:[#allocation2 + $0x40] sm:$0xff] %v1060
      %1202 = vst [vmem:[#allocation2 + $0x48] sm:$0xff] %v1062
      %1203 = vst [vmem:[#allocation2 + $0x50] sm:$0xff] %v1103
      %1204 = vst [vmem:[#allocation2 + $0x58] sm:$0xff] %v1105
      %1205 = vst [vmem:[#allocation2 + $0x60] sm:$0xff] %v1146
      %1206 = vst [vmem:[#allocation2 + $0x68] sm:$0xff] %v1148
      %1207 = vst [vmem:[#allocation2 + $0x70] sm:$0xff] %v1189
      %1208 = vst [vmem:[#allocation2 + $0x78] sm:$0xff] %v1191
      %v1209 = vld [vmem:[#allocation2] sm:$0x3]
      %v1210 = vld [vmem:[#allocation2 + $0x8] sm:$0x3]
      %v1211 = vld [vmem:[#allocation2 + $0x10] sm:$0x3]
      %v1212 = vld [vmem:[#allocation2 + $0x18] sm:$0x3]
      %v1213 = vld [vmem:[#allocation2 + $0x20] sm:$0x3]
      %v1214 = vld [vmem:[#allocation2 + $0x28] sm:$0x3]
      %v1215 = vld [vmem:[#allocation2 + $0x30] sm:$0x3]
      %v1216 = vld [vmem:[#allocation2 + $0x38] sm:$0x3]
      %v1217 = vld [vmem:[%s2] sm:$0xff]
      %v1218 = vld [vmem:[%s2 + $0x8] sm:$0xff]
      %v1219 = vld [vmem:[%s2 + $0x10] sm:$0xff]
      %v1220 = vld [vmem:[%s2 + $0x18] sm:$0xff]
      %v1221 = vld [vmem:[%s2 + $0x20] sm:$0xff]
      %v1222 = vld [vmem:[%s2 + $0x28] sm:$0xff]
      %v1223 = vld [vmem:[%s2 + $0x30] sm:$0xff]
      %v1224 = vld [vmem:[%s2 + $0x38] sm:$0xff]
      %v1225 = vld [vmem:[%s2 + $0x40] sm:$0xff]
      %v1226 = vld [vmem:[%s2 + $0x48] sm:$0xff]
      %v1227 = vld [vmem:[%s2 + $0x50] sm:$0xff]
      %v1228 = vld [vmem:[%s2 + $0x58] sm:$0xff]
      %v1229 = vld [vmem:[%s2 + $0x60] sm:$0xff]
      %v1230 = vld [vmem:[%s2 + $0x68] sm:$0xff]
      %v1231 = vld [vmem:[%s2 + $0x70] sm:$0xff]
      %v1232 = vld [vmem:[%s2 + $0x78] sm:$0xff]
      %v1233 = vld [vmem:[%s2 + $0x80] sm:$0xff]
      %v1234 = vld [vmem:[%s2 + $0x88] sm:$0xff]
      %v1235 = vld [vmem:[%s2 + $0x90] sm:$0xff]
      %v1236 = vld [vmem:[%s2 + $0x98] sm:$0xff]
      %v1237 = vld [vmem:[%s2 + $0xa0] sm:$0xff]
      %v1238 = vld [vmem:[%s2 + $0xa8] sm:$0xff]
      %v1239 = vld [vmem:[%s2 + $0xb0] sm:$0xff]
      %v1240 = vld [vmem:[%s2 + $0xb8] sm:$0xff]
      %v1241 = vld [vmem:[%s2 + $0xc0] sm:$0xff]
      %v1242 = vld [vmem:[%s2 + $0xc8] sm:$0xff]
      %v1243 = vld [vmem:[%s2 + $0xd0] sm:$0xff]
      %v1244 = vld [vmem:[%s2 + $0xd8] sm:$0xff]
      %v1245 = vld [vmem:[%s2 + $0xe0] sm:$0xff]
      %v1246 = vld [vmem:[%s2 + $0xe8] sm:$0xff]
      %v1247 = vld [vmem:[%s2 + $0xf0] sm:$0xff]
      %v1248 = vld [vmem:[%s2 + $0xf8] sm:$0xff]
      %v1249 = vld [vmem:[%s2 + $0x100] sm:$0xff]
      %v1250 = vld [vmem:[%s2 + $0x108] sm:$0xff]
      %v1251 = vld [vmem:[%s2 + $0x110] sm:$0xff]
      %v1252 = vld [vmem:[%s2 + $0x118] sm:$0xff]
      %v1253 = vld [vmem:[%s2 + $0x120] sm:$0xff]
      %v1254 = vld [vmem:[%s2 + $0x128] sm:$0xff]
      %v1255 = vld [vmem:[%s2 + $0x130] sm:$0xff]
      %v1256 = vld [vmem:[%s2 + $0x138] sm:$0xff]
      %v1257 = vld [vmem:[%s2 + $0x140] sm:$0xff]
      %v1258 = vld [vmem:[%s2 + $0x148] sm:$0xff]
      %v1259 = vld [vmem:[%s2 + $0x150] sm:$0xff]
      %v1260 = vld [vmem:[%s2 + $0x158] sm:$0xff]
      %v1261 = vld [vmem:[%s2 + $0x160] sm:$0xff]
      %v1262 = vld [vmem:[%s2 + $0x168] sm:$0xff]
      %v1263 = vld [vmem:[%s2 + $0x170] sm:$0xff]
      %v1264 = vld [vmem:[%s2 + $0x178] sm:$0xff]
      %v1265 = vld [vmem:[%s2 + $0x180] sm:$0xff]
      %v1266 = vld [vmem:[%s2 + $0x188] sm:$0xff]
      %v1267 = vld [vmem:[%s2 + $0x190] sm:$0xff]
      %v1268 = vld [vmem:[%s2 + $0x198] sm:$0xff]
      %v1269 = vld [vmem:[%s2 + $0x1a0] sm:$0xff]
      %v1270 = vld [vmem:[%s2 + $0x1a8] sm:$0xff]
      %v1271 = vld [vmem:[%s2 + $0x1b0] sm:$0xff]
      %v1272 = vld [vmem:[%s2 + $0x1b8] sm:$0xff]
      %v1273 = vld [vmem:[%s2 + $0x1c0] sm:$0xff]
      %v1274 = vld [vmem:[%s2 + $0x1c8] sm:$0xff]
      %v1275 = vld [vmem:[%s2 + $0x1d0] sm:$0xff]
      %v1276 = vld [vmem:[%s2 + $0x1d8] sm:$0xff]
      %v1277 = vld [vmem:[%s2 + $0x1e0] sm:$0xff]
      %v1278 = vld [vmem:[%s2 + $0x1e8] sm:$0xff]
      %v1279 = vld [vmem:[%s2 + $0x1f0] sm:$0xff]
      %v1280 = vld [vmem:[%s2 + $0x1f8] sm:$0xff]
      %v1281 = vld [vmem:[%s2 + $0x200] sm:$0xff]
      %v1282 = vld [vmem:[%s2 + $0x208] sm:$0xff]
      %v1283 = vld [vmem:[%s2 + $0x210] sm:$0xff]
      %v1284 = vld [vmem:[%s2 + $0x218] sm:$0xff]
      %v1285 = vld [vmem:[%s2 + $0x220] sm:$0xff]
      %v1286 = vld [vmem:[%s2 + $0x228] sm:$0xff]
      %v1287 = vld [vmem:[%s2 + $0x230] sm:$0xff]
      %v1288 = vld [vmem:[%s2 + $0x238] sm:$0xff]
      %v1289 = vld [vmem:[%s2 + $0x240] sm:$0xff]
      %v1290 = vld [vmem:[%s2 + $0x248] sm:$0xff]
      %v1291 = vld [vmem:[%s2 + $0x250] sm:$0xff]
      %v1292 = vld [vmem:[%s2 + $0x258] sm:$0xff]
      %v1293 = vld [vmem:[%s2 + $0x260] sm:$0xff]
      %v1294 = vld [vmem:[%s2 + $0x268] sm:$0xff]
      %v1295 = vld [vmem:[%s2 + $0x270] sm:$0xff]
      %v1296 = vld [vmem:[%s2 + $0x278] sm:$0xff]
      %v1297 = vld [vmem:[%s2 + $0x280] sm:$0xff]
      %v1298 = vld [vmem:[%s2 + $0x288] sm:$0xff]
      %v1299 = vld [vmem:[%s2 + $0x290] sm:$0xff]
      %v1300 = vld [vmem:[%s2 + $0x298] sm:$0xff]
      %v1301 = vld [vmem:[%s2 + $0x2a0] sm:$0xff]
      %v1302 = vld [vmem:[%s2 + $0x2a8] sm:$0xff]
      %v1303 = vld [vmem:[%s2 + $0x2b0] sm:$0xff]
      %v1304 = vld [vmem:[%s2 + $0x2b8] sm:$0xff]
      %v1305 = vld [vmem:[%s2 + $0x2c0] sm:$0xff]
      %v1306 = vld [vmem:[%s2 + $0x2c8] sm:$0xff]
      %v1307 = vld [vmem:[%s2 + $0x2d0] sm:$0xff]
      %v1308 = vld [vmem:[%s2 + $0x2d8] sm:$0xff]
      %v1309 = vld [vmem:[%s2 + $0x2e0] sm:$0xff]
      %v1310 = vld [vmem:[%s2 + $0x2e8] sm:$0xff]
      %v1311 = vld [vmem:[%s2 + $0x2f0] sm:$0xff]
      %v1312 = vld [vmem:[%s2 + $0x2f8] sm:$0xff]
      %v1313 = vld [vmem:[%s2 + $0x300] sm:$0xff]
      %v1314 = vld [vmem:[%s2 + $0x308] sm:$0xff]
      %v1315 = vld [vmem:[%s2 + $0x310] sm:$0xff]
      %v1316 = vld [vmem:[%s2 + $0x318] sm:$0xff]
      %v1317 = vld [vmem:[%s2 + $0x320] sm:$0xff]
      %v1318 = vld [vmem:[%s2 + $0x328] sm:$0xff]
      %v1319 = vld [vmem:[%s2 + $0x330] sm:$0xff]
      %v1320 = vld [vmem:[%s2 + $0x338] sm:$0xff]
      %v1321 = vld [vmem:[%s2 + $0x340] sm:$0xff]
      %v1322 = vld [vmem:[%s2 + $0x348] sm:$0xff]
      %v1323 = vld [vmem:[%s2 + $0x350] sm:$0xff]
      %v1324 = vld [vmem:[%s2 + $0x358] sm:$0xff]
      %v1325 = vld [vmem:[%s2 + $0x360] sm:$0xff]
      %v1326 = vld [vmem:[%s2 + $0x368] sm:$0xff]
      %v1327 = vld [vmem:[%s2 + $0x370] sm:$0xff]
      %v1328 = vld [vmem:[%s2 + $0x378] sm:$0xff]
      %v1329 = vld [vmem:[%s2 + $0x380] sm:$0xff]
      %v1330 = vld [vmem:[%s2 + $0x388] sm:$0xff]
      %v1331 = vld [vmem:[%s2 + $0x390] sm:$0xff]
      %v1332 = vld [vmem:[%s2 + $0x398] sm:$0xff]
      %v1333 = vld [vmem:[%s2 + $0x3a0] sm:$0xff]
      %v1334 = vld [vmem:[%s2 + $0x3a8] sm:$0xff]
      %v1335 = vld [vmem:[%s2 + $0x3b0] sm:$0xff]
      %v1336 = vld [vmem:[%s2 + $0x3b8] sm:$0xff]
      %v1337 = vld [vmem:[%s2 + $0x3c0] sm:$0xff]
      %v1338 = vld [vmem:[%s2 + $0x3c8] sm:$0xff]
      %v1339 = vld [vmem:[%s2 + $0x3d0] sm:$0xff]
      %v1340 = vld [vmem:[%s2 + $0x3d8] sm:$0xff]
      %v1341 = vld [vmem:[%s2 + $0x3e0] sm:$0xff]
      %v1342 = vld [vmem:[%s2 + $0x3e8] sm:$0xff]
      %v1343 = vld [vmem:[%s2 + $0x3f0] sm:$0xff]
      %v1344 = vld [vmem:[%s2 + $0x3f8] sm:$0xff]
      %v1473 = vunpack.c.l.b16 %v1217
      %v1474 = vunpack.c.h.b16 %v1217
      %v1475 = vunpack.c.l.b16 %v1218
      %v1476 = vunpack.c.h.b16 %v1218
      %v1477 = vunpack.c.l.b16 %v1219
      %v1478 = vunpack.c.h.b16 %v1219
      %v1479 = vunpack.c.l.b16 %v1220
      %v1480 = vunpack.c.h.b16 %v1220
      %v1481 = vunpack.c.l.b16 %v1221
      %v1482 = vunpack.c.h.b16 %v1221
      %v1483 = vunpack.c.l.b16 %v1222
      %v1484 = vunpack.c.h.b16 %v1222
      %v1485 = vunpack.c.l.b16 %v1223
      %v1486 = vunpack.c.h.b16 %v1223
      %v1487 = vunpack.c.l.b16 %v1224
      %v1488 = vunpack.c.h.b16 %v1224
      %v1489 = vunpack.c.l.b16 %v1225
      %v1490 = vunpack.c.h.b16 %v1225
      %v1491 = vunpack.c.l.b16 %v1226
      %v1492 = vunpack.c.h.b16 %v1226
      %v1493 = vunpack.c.l.b16 %v1227
      %v1494 = vunpack.c.h.b16 %v1227
      %v1495 = vunpack.c.l.b16 %v1228
      %v1496 = vunpack.c.h.b16 %v1228
      %v1497 = vunpack.c.l.b16 %v1229
      %v1498 = vunpack.c.h.b16 %v1229
      %v1499 = vunpack.c.l.b16 %v1230
      %v1500 = vunpack.c.h.b16 %v1230
      %v1501 = vunpack.c.l.b16 %v1231
      %v1502 = vunpack.c.h.b16 %v1231
      %v1503 = vunpack.c.l.b16 %v1232
      %v1504 = vunpack.c.h.b16 %v1232
      %v1505 = vunpack.c.l.b16 %v1233
      %v1506 = vunpack.c.h.b16 %v1233
      %v1507 = vunpack.c.l.b16 %v1234
      %v1508 = vunpack.c.h.b16 %v1234
      %v1509 = vunpack.c.l.b16 %v1235
      %v1510 = vunpack.c.h.b16 %v1235
      %v1511 = vunpack.c.l.b16 %v1236
      %v1512 = vunpack.c.h.b16 %v1236
      %v1513 = vunpack.c.l.b16 %v1237
      %v1514 = vunpack.c.h.b16 %v1237
      %v1515 = vunpack.c.l.b16 %v1238
      %v1516 = vunpack.c.h.b16 %v1238
      %v1517 = vunpack.c.l.b16 %v1239
      %v1518 = vunpack.c.h.b16 %v1239
      %v1519 = vunpack.c.l.b16 %v1240
      %v1520 = vunpack.c.h.b16 %v1240
      %v1521 = vunpack.c.l.b16 %v1241
      %v1522 = vunpack.c.h.b16 %v1241
      %v1523 = vunpack.c.l.b16 %v1242
      %v1524 = vunpack.c.h.b16 %v1242
      %v1525 = vunpack.c.l.b16 %v1243
      %v1526 = vunpack.c.h.b16 %v1243
      %v1527 = vunpack.c.l.b16 %v1244
      %v1528 = vunpack.c.h.b16 %v1244
      %v1529 = vunpack.c.l.b16 %v1245
      %v1530 = vunpack.c.h.b16 %v1245
      %v1531 = vunpack.c.l.b16 %v1246
      %v1532 = vunpack.c.h.b16 %v1246
      %v1533 = vunpack.c.l.b16 %v1247
      %v1534 = vunpack.c.h.b16 %v1247
      %v1535 = vunpack.c.l.b16 %v1248
      %v1536 = vunpack.c.h.b16 %v1248
      %v1537 = vunpack.c.l.b16 %v1249
      %v1538 = vunpack.c.h.b16 %v1249
      %v1539 = vunpack.c.l.b16 %v1250
      %v1540 = vunpack.c.h.b16 %v1250
      %v1541 = vunpack.c.l.b16 %v1251
      %v1542 = vunpack.c.h.b16 %v1251
      %v1543 = vunpack.c.l.b16 %v1252
      %v1544 = vunpack.c.h.b16 %v1252
      %v1545 = vunpack.c.l.b16 %v1253
      %v1546 = vunpack.c.h.b16 %v1253
      %v1547 = vunpack.c.l.b16 %v1254
      %v1548 = vunpack.c.h.b16 %v1254
      %v1549 = vunpack.c.l.b16 %v1255
      %v1550 = vunpack.c.h.b16 %v1255
      %v1551 = vunpack.c.l.b16 %v1256
      %v1552 = vunpack.c.h.b16 %v1256
      %v1553 = vunpack.c.l.b16 %v1257
      %v1554 = vunpack.c.h.b16 %v1257
      %v1555 = vunpack.c.l.b16 %v1258
      %v1556 = vunpack.c.h.b16 %v1258
      %v1557 = vunpack.c.l.b16 %v1259
      %v1558 = vunpack.c.h.b16 %v1259
      %v1559 = vunpack.c.l.b16 %v1260
      %v1560 = vunpack.c.h.b16 %v1260
      %v1561 = vunpack.c.l.b16 %v1261
      %v1562 = vunpack.c.h.b16 %v1261
      %v1563 = vunpack.c.l.b16 %v1262
      %v1564 = vunpack.c.h.b16 %v1262
      %v1565 = vunpack.c.l.b16 %v1263
      %v1566 = vunpack.c.h.b16 %v1263
      %v1567 = vunpack.c.l.b16 %v1264
      %v1568 = vunpack.c.h.b16 %v1264
      %v1569 = vunpack.c.l.b16 %v1265
      %v1570 = vunpack.c.h.b16 %v1265
      %v1571 = vunpack.c.l.b16 %v1266
      %v1572 = vunpack.c.h.b16 %v1266
      %v1573 = vunpack.c.l.b16 %v1267
      %v1574 = vunpack.c.h.b16 %v1267
      %v1575 = vunpack.c.l.b16 %v1268
      %v1576 = vunpack.c.h.b16 %v1268
      %v1577 = vunpack.c.l.b16 %v1269
      %v1578 = vunpack.c.h.b16 %v1269
      %v1579 = vunpack.c.l.b16 %v1270
      %v1580 = vunpack.c.h.b16 %v1270
      %v1581 = vunpack.c.l.b16 %v1271
      %v1582 = vunpack.c.h.b16 %v1271
      %v1583 = vunpack.c.l.b16 %v1272
      %v1584 = vunpack.c.h.b16 %v1272
      %v1585 = vunpack.c.l.b16 %v1273
      %v1586 = vunpack.c.h.b16 %v1273
      %v1587 = vunpack.c.l.b16 %v1274
      %v1588 = vunpack.c.h.b16 %v1274
      %v1589 = vunpack.c.l.b16 %v1275
      %v1590 = vunpack.c.h.b16 %v1275
      %v1591 = vunpack.c.l.b16 %v1276
      %v1592 = vunpack.c.h.b16 %v1276
      %v1593 = vunpack.c.l.b16 %v1277
      %v1594 = vunpack.c.h.b16 %v1277
      %v1595 = vunpack.c.l.b16 %v1278
      %v1596 = vunpack.c.h.b16 %v1278
      %v1597 = vunpack.c.l.b16 %v1279
      %v1598 = vunpack.c.h.b16 %v1279
      %v1599 = vunpack.c.l.b16 %v1280
      %v1600 = vunpack.c.h.b16 %v1280
      %v1601 = vunpack.c.l.b16 %v1281
      %v1602 = vunpack.c.h.b16 %v1281
      %v1603 = vunpack.c.l.b16 %v1282
      %v1604 = vunpack.c.h.b16 %v1282
      %v1605 = vunpack.c.l.b16 %v1283
      %v1606 = vunpack.c.h.b16 %v1283
      %v1607 = vunpack.c.l.b16 %v1284
      %v1608 = vunpack.c.h.b16 %v1284
      %v1609 = vunpack.c.l.b16 %v1285
      %v1610 = vunpack.c.h.b16 %v1285
      %v1611 = vunpack.c.l.b16 %v1286
      %v1612 = vunpack.c.h.b16 %v1286
      %v1613 = vunpack.c.l.b16 %v1287
      %v1614 = vunpack.c.h.b16 %v1287
      %v1615 = vunpack.c.l.b16 %v1288
      %v1616 = vunpack.c.h.b16 %v1288
      %v1617 = vunpack.c.l.b16 %v1289
      %v1618 = vunpack.c.h.b16 %v1289
      %v1619 = vunpack.c.l.b16 %v1290
      %v1620 = vunpack.c.h.b16 %v1290
      %v1621 = vunpack.c.l.b16 %v1291
      %v1622 = vunpack.c.h.b16 %v1291
      %v1623 = vunpack.c.l.b16 %v1292
      %v1624 = vunpack.c.h.b16 %v1292
      %v1625 = vunpack.c.l.b16 %v1293
      %v1626 = vunpack.c.h.b16 %v1293
      %v1627 = vunpack.c.l.b16 %v1294
      %v1628 = vunpack.c.h.b16 %v1294
      %v1629 = vunpack.c.l.b16 %v1295
      %v1630 = vunpack.c.h.b16 %v1295
      %v1631 = vunpack.c.l.b16 %v1296
      %v1632 = vunpack.c.h.b16 %v1296
      %v1633 = vunpack.c.l.b16 %v1297
      %v1634 = vunpack.c.h.b16 %v1297
      %v1635 = vunpack.c.l.b16 %v1298
      %v1636 = vunpack.c.h.b16 %v1298
      %v1637 = vunpack.c.l.b16 %v1299
      %v1638 = vunpack.c.h.b16 %v1299
      %v1639 = vunpack.c.l.b16 %v1300
      %v1640 = vunpack.c.h.b16 %v1300
      %v1641 = vunpack.c.l.b16 %v1301
      %v1642 = vunpack.c.h.b16 %v1301
      %v1643 = vunpack.c.l.b16 %v1302
      %v1644 = vunpack.c.h.b16 %v1302
      %v1645 = vunpack.c.l.b16 %v1303
      %v1646 = vunpack.c.h.b16 %v1303
      %v1647 = vunpack.c.l.b16 %v1304
      %v1648 = vunpack.c.h.b16 %v1304
      %v1649 = vunpack.c.l.b16 %v1305
      %v1650 = vunpack.c.h.b16 %v1305
      %v1651 = vunpack.c.l.b16 %v1306
      %v1652 = vunpack.c.h.b16 %v1306
      %v1653 = vunpack.c.l.b16 %v1307
      %v1654 = vunpack.c.h.b16 %v1307
      %v1655 = vunpack.c.l.b16 %v1308
      %v1656 = vunpack.c.h.b16 %v1308
      %v1657 = vunpack.c.l.b16 %v1309
      %v1658 = vunpack.c.h.b16 %v1309
      %v1659 = vunpack.c.l.b16 %v1310
      %v1660 = vunpack.c.h.b16 %v1310
      %v1661 = vunpack.c.l.b16 %v1311
      %v1662 = vunpack.c.h.b16 %v1311
      %v1663 = vunpack.c.l.b16 %v1312
      %v1664 = vunpack.c.h.b16 %v1312
      %v1665 = vunpack.c.l.b16 %v1313
      %v1666 = vunpack.c.h.b16 %v1313
      %v1667 = vunpack.c.l.b16 %v1314
      %v1668 = vunpack.c.h.b16 %v1314
      %v1669 = vunpack.c.l.b16 %v1315
      %v1670 = vunpack.c.h.b16 %v1315
      %v1671 = vunpack.c.l.b16 %v1316
      %v1672 = vunpack.c.h.b16 %v1316
      %v1673 = vunpack.c.l.b16 %v1317
      %v1674 = vunpack.c.h.b16 %v1317
      %v1675 = vunpack.c.l.b16 %v1318
      %v1676 = vunpack.c.h.b16 %v1318
      %v1677 = vunpack.c.l.b16 %v1319
      %v1678 = vunpack.c.h.b16 %v1319
      %v1679 = vunpack.c.l.b16 %v1320
      %v1680 = vunpack.c.h.b16 %v1320
      %v1681 = vunpack.c.l.b16 %v1321
      %v1682 = vunpack.c.h.b16 %v1321
      %v1683 = vunpack.c.l.b16 %v1322
      %v1684 = vunpack.c.h.b16 %v1322
      %v1685 = vunpack.c.l.b16 %v1323
      %v1686 = vunpack.c.h.b16 %v1323
      %v1687 = vunpack.c.l.b16 %v1324
      %v1688 = vunpack.c.h.b16 %v1324
      %v1689 = vunpack.c.l.b16 %v1325
      %v1690 = vunpack.c.h.b16 %v1325
      %v1691 = vunpack.c.l.b16 %v1326
      %v1692 = vunpack.c.h.b16 %v1326
      %v1693 = vunpack.c.l.b16 %v1327
      %v1694 = vunpack.c.h.b16 %v1327
      %v1695 = vunpack.c.l.b16 %v1328
      %v1696 = vunpack.c.h.b16 %v1328
      %v1697 = vunpack.c.l.b16 %v1329
      %v1698 = vunpack.c.h.b16 %v1329
      %v1699 = vunpack.c.l.b16 %v1330
      %v1700 = vunpack.c.h.b16 %v1330
      %v1701 = vunpack.c.l.b16 %v1331
      %v1702 = vunpack.c.h.b16 %v1331
      %v1703 = vunpack.c.l.b16 %v1332
      %v1704 = vunpack.c.h.b16 %v1332
      %v1705 = vunpack.c.l.b16 %v1333
      %v1706 = vunpack.c.h.b16 %v1333
      %v1707 = vunpack.c.l.b16 %v1334
      %v1708 = vunpack.c.h.b16 %v1334
      %v1709 = vunpack.c.l.b16 %v1335
      %v1710 = vunpack.c.h.b16 %v1335
      %v1711 = vunpack.c.l.b16 %v1336
      %v1712 = vunpack.c.h.b16 %v1336
      %v1713 = vunpack.c.l.b16 %v1337
      %v1714 = vunpack.c.h.b16 %v1337
      %v1715 = vunpack.c.l.b16 %v1338
      %v1716 = vunpack.c.h.b16 %v1338
      %v1717 = vunpack.c.l.b16 %v1339
      %v1718 = vunpack.c.h.b16 %v1339
      %v1719 = vunpack.c.l.b16 %v1340
      %v1720 = vunpack.c.h.b16 %v1340
      %v1721 = vunpack.c.l.b16 %v1341
      %v1722 = vunpack.c.h.b16 %v1341
      %v1723 = vunpack.c.l.b16 %v1342
      %v1724 = vunpack.c.h.b16 %v1342
      %v1725 = vunpack.c.l.b16 %v1343
      %v1726 = vunpack.c.h.b16 %v1343
      %v1727 = vunpack.c.l.b16 %v1344
      %v1728 = vunpack.c.h.b16 %v1344
      %v1729 = vpack.c.b16 %v1481, %v1473
      %v1730 = vpack.c.b16 %v1482, %v1474
      %v1731 = vpack.c.b16 %v1483, %v1475
      %v1732 = vpack.c.b16 %v1484, %v1476
      %v1733 = vpack.c.b16 %v1485, %v1477
      %v1734 = vpack.c.b16 %v1486, %v1478
      %v1735 = vpack.c.b16 %v1487, %v1479
      %v1736 = vpack.c.b16 %v1488, %v1480
      %v1737 = vpack.c.b16 %v1497, %v1489
      %v1738 = vpack.c.b16 %v1498, %v1490
      %v1739 = vpack.c.b16 %v1499, %v1491
      %v1740 = vpack.c.b16 %v1500, %v1492
      %v1741 = vpack.c.b16 %v1501, %v1493
      %v1742 = vpack.c.b16 %v1502, %v1494
      %v1743 = vpack.c.b16 %v1503, %v1495
      %v1744 = vpack.c.b16 %v1504, %v1496
      %v1745 = vpack.c.b16 %v1513, %v1505
      %v1746 = vpack.c.b16 %v1514, %v1506
      %v1747 = vpack.c.b16 %v1515, %v1507
      %v1748 = vpack.c.b16 %v1516, %v1508
      %v1749 = vpack.c.b16 %v1517, %v1509
      %v1750 = vpack.c.b16 %v1518, %v1510
      %v1751 = vpack.c.b16 %v1519, %v1511
      %v1752 = vpack.c.b16 %v1520, %v1512
      %v1753 = vpack.c.b16 %v1529, %v1521
      %v1754 = vpack.c.b16 %v1530, %v1522
      %v1755 = vpack.c.b16 %v1531, %v1523
      %v1756 = vpack.c.b16 %v1532, %v1524
      %v1757 = vpack.c.b16 %v1533, %v1525
      %v1758 = vpack.c.b16 %v1534, %v1526
      %v1759 = vpack.c.b16 %v1535, %v1527
      %v1760 = vpack.c.b16 %v1536, %v1528
      %v1761 = vpack.c.b16 %v1545, %v1537
      %v1762 = vpack.c.b16 %v1546, %v1538
      %v1763 = vpack.c.b16 %v1547, %v1539
      %v1764 = vpack.c.b16 %v1548, %v1540
      %v1765 = vpack.c.b16 %v1549, %v1541
      %v1766 = vpack.c.b16 %v1550, %v1542
      %v1767 = vpack.c.b16 %v1551, %v1543
      %v1768 = vpack.c.b16 %v1552, %v1544
      %v1769 = vpack.c.b16 %v1561, %v1553
      %v1770 = vpack.c.b16 %v1562, %v1554
      %v1771 = vpack.c.b16 %v1563, %v1555
      %v1772 = vpack.c.b16 %v1564, %v1556
      %v1773 = vpack.c.b16 %v1565, %v1557
      %v1774 = vpack.c.b16 %v1566, %v1558
      %v1775 = vpack.c.b16 %v1567, %v1559
      %v1776 = vpack.c.b16 %v1568, %v1560
      %v1777 = vpack.c.b16 %v1577, %v1569
      %v1778 = vpack.c.b16 %v1578, %v1570
      %v1779 = vpack.c.b16 %v1579, %v1571
      %v1780 = vpack.c.b16 %v1580, %v1572
      %v1781 = vpack.c.b16 %v1581, %v1573
      %v1782 = vpack.c.b16 %v1582, %v1574
      %v1783 = vpack.c.b16 %v1583, %v1575
      %v1784 = vpack.c.b16 %v1584, %v1576
      %v1785 = vpack.c.b16 %v1593, %v1585
      %v1786 = vpack.c.b16 %v1594, %v1586
      %v1787 = vpack.c.b16 %v1595, %v1587
      %v1788 = vpack.c.b16 %v1596, %v1588
      %v1789 = vpack.c.b16 %v1597, %v1589
      %v1790 = vpack.c.b16 %v1598, %v1590
      %v1791 = vpack.c.b16 %v1599, %v1591
      %v1792 = vpack.c.b16 %v1600, %v1592
      %v1793 = vpack.c.b16 %v1609, %v1601
      %v1794 = vpack.c.b16 %v1610, %v1602
      %v1795 = vpack.c.b16 %v1611, %v1603
      %v1796 = vpack.c.b16 %v1612, %v1604
      %v1797 = vpack.c.b16 %v1613, %v1605
      %v1798 = vpack.c.b16 %v1614, %v1606
      %v1799 = vpack.c.b16 %v1615, %v1607
      %v1800 = vpack.c.b16 %v1616, %v1608
      %v1801 = vpack.c.b16 %v1625, %v1617
      %v1802 = vpack.c.b16 %v1626, %v1618
      %v1803 = vpack.c.b16 %v1627, %v1619
      %v1804 = vpack.c.b16 %v1628, %v1620
      %v1805 = vpack.c.b16 %v1629, %v1621
      %v1806 = vpack.c.b16 %v1630, %v1622
      %v1807 = vpack.c.b16 %v1631, %v1623
      %v1808 = vpack.c.b16 %v1632, %v1624
      %v1809 = vpack.c.b16 %v1641, %v1633
      %v1810 = vpack.c.b16 %v1642, %v1634
      %v1811 = vpack.c.b16 %v1643, %v1635
      %v1812 = vpack.c.b16 %v1644, %v1636
      %v1813 = vpack.c.b16 %v1645, %v1637
      %v1814 = vpack.c.b16 %v1646, %v1638
      %v1815 = vpack.c.b16 %v1647, %v1639
      %v1816 = vpack.c.b16 %v1648, %v1640
      %v1817 = vpack.c.b16 %v1657, %v1649
      %v1818 = vpack.c.b16 %v1658, %v1650
      %v1819 = vpack.c.b16 %v1659, %v1651
      %v1820 = vpack.c.b16 %v1660, %v1652
      %v1821 = vpack.c.b16 %v1661, %v1653
      %v1822 = vpack.c.b16 %v1662, %v1654
      %v1823 = vpack.c.b16 %v1663, %v1655
      %v1824 = vpack.c.b16 %v1664, %v1656
      %v1825 = vpack.c.b16 %v1673, %v1665
      %v1826 = vpack.c.b16 %v1674, %v1666
      %v1827 = vpack.c.b16 %v1675, %v1667
      %v1828 = vpack.c.b16 %v1676, %v1668
      %v1829 = vpack.c.b16 %v1677, %v1669
      %v1830 = vpack.c.b16 %v1678, %v1670
      %v1831 = vpack.c.b16 %v1679, %v1671
      %v1832 = vpack.c.b16 %v1680, %v1672
      %v1833 = vpack.c.b16 %v1689, %v1681
      %v1834 = vpack.c.b16 %v1690, %v1682
      %v1835 = vpack.c.b16 %v1691, %v1683
      %v1836 = vpack.c.b16 %v1692, %v1684
      %v1837 = vpack.c.b16 %v1693, %v1685
      %v1838 = vpack.c.b16 %v1694, %v1686
      %v1839 = vpack.c.b16 %v1695, %v1687
      %v1840 = vpack.c.b16 %v1696, %v1688
      %v1841 = vpack.c.b16 %v1705, %v1697
      %v1842 = vpack.c.b16 %v1706, %v1698
      %v1843 = vpack.c.b16 %v1707, %v1699
      %v1844 = vpack.c.b16 %v1708, %v1700
      %v1845 = vpack.c.b16 %v1709, %v1701
      %v1846 = vpack.c.b16 %v1710, %v1702
      %v1847 = vpack.c.b16 %v1711, %v1703
      %v1848 = vpack.c.b16 %v1712, %v1704
      %v1849 = vpack.c.b16 %v1721, %v1713
      %v1850 = vpack.c.b16 %v1722, %v1714
      %v1851 = vpack.c.b16 %v1723, %v1715
      %v1852 = vpack.c.b16 %v1724, %v1716
      %v1853 = vpack.c.b16 %v1725, %v1717
      %v1854 = vpack.c.b16 %v1726, %v1718
      %v1855 = vpack.c.b16 %v1727, %v1719
      %v1856 = vpack.c.b16 %v1728, %v1720
      %1985 = vmatprep.subr.bf16.mxu0 %v1730
      %1986 = vmatpush1.bf16.msra.mxu0 %v1729
      %1987 = vmatprep.subr.bf16.mxu0 %v1738
      %1988 = vmatpush1.bf16.msra.mxu0 %v1737
      %1989 = vmatprep.subr.bf16.mxu0 %v1746
      %1990 = vmatpush1.bf16.msra.mxu0 %v1745
      %1991 = vmatprep.subr.bf16.mxu0 %v1754
      %1992 = vmatpush1.bf16.msra.mxu0 %v1753
      %1993 = vmatprep.subr.bf16.mxu0 %v1762
      %1994 = vmatpush1.bf16.msra.mxu0 %v1761
      %1995 = vmatprep.subr.bf16.mxu0 %v1770
      %1996 = vmatpush1.bf16.msra.mxu0 %v1769
      %1997 = vmatprep.subr.bf16.mxu0 %v1778
      %1998 = vmatpush1.bf16.msra.mxu0 %v1777
      %1999 = vmatprep.subr.bf16.mxu0 %v1786
      %2000 = vmatpush1.bf16.msra.mxu0 %v1785
      %2001 = vmatprep.subr.bf16.mxu0 %v1794
      %2002 = vmatpush1.bf16.msra.mxu0 %v1793
      %2003 = vmatprep.subr.bf16.mxu0 %v1802
      %2004 = vmatpush1.bf16.msra.mxu0 %v1801
      %2005 = vmatprep.subr.bf16.mxu0 %v1810
      %2006 = vmatpush1.bf16.msra.mxu0 %v1809
      %2007 = vmatprep.subr.bf16.mxu0 %v1818
      %2008 = vmatpush1.bf16.msra.mxu0 %v1817
      %2009 = vmatprep.subr.bf16.mxu0 %v1826
      %2010 = vmatpush1.bf16.msra.mxu0 %v1825
      %2011 = vmatprep.subr.bf16.mxu0 %v1834
      %2012 = vmatpush1.bf16.msra.mxu0 %v1833
      %2013 = vmatprep.subr.bf16.mxu0 %v1842
      %2014 = vmatpush1.bf16.msra.mxu0 %v1841
      %2015 = vmatprep.subr.bf16.mxu0 %v1850
      %2016 = vmatpush1.bf16.msra.mxu0 %v1849
      %2017 = vmatprep.mubr.bf16.mxu0 0
      %2018 = vmatmul.mubr.bf16.gmra.mrb[0].mxu0 0
      %v2019 = vpop.f32.mrb[0].mxu0
      %v2020 = vadd.f32 0.0, %v2019
      %v2021 = vpop.f32.mrb[0].mxu0
      %v2022 = vadd.f32 0.0, %v2021
      %v2023 = vpop.f32.mrb[0].mxu0
      %v2024 = vpop.f32.mrb[0].mxu0
      %2025 = vdwg.mxu0
      %2026 = vmatprep.subr.bf16.mxu0 %v1732
      %2027 = vmatpush1.bf16.msra.mxu0 %v1731
      %2028 = vmatprep.subr.bf16.mxu0 %v1740
      %2029 = vmatpush1.bf16.msra.mxu0 %v1739
      %2030 = vmatprep.subr.bf16.mxu0 %v1748
      %2031 = vmatpush1.bf16.msra.mxu0 %v1747
      %2032 = vmatprep.subr.bf16.mxu0 %v1756
      %2033 = vmatpush1.bf16.msra.mxu0 %v1755
      %2034 = vmatprep.subr.bf16.mxu0 %v1764
      %2035 = vmatpush1.bf16.msra.mxu0 %v1763
      %2036 = vmatprep.subr.bf16.mxu0 %v1772
      %2037 = vmatpush1.bf16.msra.mxu0 %v1771
      %2038 = vmatprep.subr.bf16.mxu0 %v1780
      %2039 = vmatpush1.bf16.msra.mxu0 %v1779
      %2040 = vmatprep.subr.bf16.mxu0 %v1788
      %2041 = vmatpush1.bf16.msra.mxu0 %v1787
      %2042 = vmatprep.subr.bf16.mxu0 %v1796
      %2043 = vmatpush1.bf16.msra.mxu0 %v1795
      %2044 = vmatprep.subr.bf16.mxu0 %v1804
      %2045 = vmatpush1.bf16.msra.mxu0 %v1803
      %2046 = vmatprep.subr.bf16.mxu0 %v1812
      %2047 = vmatpush1.bf16.msra.mxu0 %v1811
      %2048 = vmatprep.subr.bf16.mxu0 %v1820
      %2049 = vmatpush1.bf16.msra.mxu0 %v1819
      %2050 = vmatprep.subr.bf16.mxu0 %v1828
      %2051 = vmatpush1.bf16.msra.mxu0 %v1827
      %2052 = vmatprep.subr.bf16.mxu0 %v1836
      %2053 = vmatpush1.bf16.msra.mxu0 %v1835
      %2054 = vmatprep.subr.bf16.mxu0 %v1844
      %2055 = vmatpush1.bf16.msra.mxu0 %v1843
      %2056 = vmatprep.subr.bf16.mxu0 %v1852
      %2057 = vmatpush1.bf16.msra.mxu0 %v1851
      %2058 = vmatprep.mubr.bf16.mxu0 0
      %2059 = vmatmul.mubr.bf16.gmra.mrb[0].mxu0 0
      %v2060 = vpop.f32.mrb[0].mxu0
      %v2061 = vadd.f32 0.0, %v2060
      %v2062 = vpop.f32.mrb[0].mxu0
      %v2063 = vadd.f32 0.0, %v2062
      %v2064 = vpop.f32.mrb[0].mxu0
      %v2065 = vpop.f32.mrb[0].mxu0
      %2066 = vdwg.mxu0
      %2067 = vmatprep.subr.bf16.mxu0 %v1734
      %2068 = vmatpush1.bf16.msra.mxu0 %v1733
      %2069 = vmatprep.subr.bf16.mxu0 %v1742
      %2070 = vmatpush1.bf16.msra.mxu0 %v1741
      %2071 = vmatprep.subr.bf16.mxu0 %v1750
      %2072 = vmatpush1.bf16.msra.mxu0 %v1749
      %2073 = vmatprep.subr.bf16.mxu0 %v1758
      %2074 = vmatpush1.bf16.msra.mxu0 %v1757
      %2075 = vmatprep.subr.bf16.mxu0 %v1766
      %2076 = vmatpush1.bf16.msra.mxu0 %v1765
      %2077 = vmatprep.subr.bf16.mxu0 %v1774
      %2078 = vmatpush1.bf16.msra.mxu0 %v1773
      %2079 = vmatprep.subr.bf16.mxu0 %v1782
      %2080 = vmatpush1.bf16.msra.mxu0 %v1781
      %2081 = vmatprep.subr.bf16.mxu0 %v1790
      %2082 = vmatpush1.bf16.msra.mxu0 %v1789
      %2083 = vmatprep.subr.bf16.mxu0 %v1798
      %2084 = vmatpush1.bf16.msra.mxu0 %v1797
      %2085 = vmatprep.subr.bf16.mxu0 %v1806
      %2086 = vmatpush1.bf16.msra.mxu0 %v1805
      %2087 = vmatprep.subr.bf16.mxu0 %v1814
      %2088 = vmatpush1.bf16.msra.mxu0 %v1813
      %2089 = vmatprep.subr.bf16.mxu0 %v1822
      %2090 = vmatpush1.bf16.msra.mxu0 %v1821
      %2091 = vmatprep.subr.bf16.mxu0 %v1830
      %2092 = vmatpush1.bf16.msra.mxu0 %v1829
      %2093 = vmatprep.subr.bf16.mxu0 %v1838
      %2094 = vmatpush1.bf16.msra.mxu0 %v1837
      %2095 = vmatprep.subr.bf16.mxu0 %v1846
      %2096 = vmatpush1.bf16.msra.mxu0 %v1845
      %2097 = vmatprep.subr.bf16.mxu0 %v1854
      %2098 = vmatpush1.bf16.msra.mxu0 %v1853
      %2099 = vmatprep.mubr.bf16.mxu0 0
      %2100 = vmatmul.mubr.bf16.gmra.mrb[0].mxu0 0
      %v2101 = vpop.f32.mrb[0].mxu0
      %v2102 = vadd.f32 0.0, %v2101
      %v2103 = vpop.f32.mrb[0].mxu0
      %v2104 = vadd.f32 0.0, %v2103
      %v2105 = vpop.f32.mrb[0].mxu0
      %v2106 = vpop.f32.mrb[0].mxu0
      %2107 = vdwg.mxu0
      %2108 = vmatprep.subr.bf16.mxu0 %v1736
      %2109 = vmatpush1.bf16.msra.mxu0 %v1735
      %2110 = vmatprep.subr.bf16.mxu0 %v1744
      %2111 = vmatpush1.bf16.msra.mxu0 %v1743
      %2112 = vmatprep.subr.bf16.mxu0 %v1752
      %2113 = vmatpush1.bf16.msra.mxu0 %v1751
      %2114 = vmatprep.subr.bf16.mxu0 %v1760
      %2115 = vmatpush1.bf16.msra.mxu0 %v1759
      %2116 = vmatprep.subr.bf16.mxu0 %v1768
      %2117 = vmatpush1.bf16.msra.mxu0 %v1767
      %2118 = vmatprep.subr.bf16.mxu0 %v1776
      %2119 = vmatpush1.bf16.msra.mxu0 %v1775
      %2120 = vmatprep.subr.bf16.mxu0 %v1784
      %2121 = vmatpush1.bf16.msra.mxu0 %v1783
      %2122 = vmatprep.subr.bf16.mxu0 %v1792
      %2123 = vmatpush1.bf16.msra.mxu0 %v1791
      %2124 = vmatprep.subr.bf16.mxu0 %v1800
      %2125 = vmatpush1.bf16.msra.mxu0 %v1799
      %2126 = vmatprep.subr.bf16.mxu0 %v1808
      %2127 = vmatpush1.bf16.msra.mxu0 %v1807
      %2128 = vmatprep.subr.bf16.mxu0 %v1816
      %2129 = vmatpush1.bf16.msra.mxu0 %v1815
      %2130 = vmatprep.subr.bf16.mxu0 %v1824
      %2131 = vmatpush1.bf16.msra.mxu0 %v1823
      %2132 = vmatprep.subr.bf16.mxu0 %v1832
      %2133 = vmatpush1.bf16.msra.mxu0 %v1831
      %2134 = vmatprep.subr.bf16.mxu0 %v1840
      %2135 = vmatpush1.bf16.msra.mxu0 %v1839
      %2136 = vmatprep.subr.bf16.mxu0 %v1848
      %2137 = vmatpush1.bf16.msra.mxu0 %v1847
      %2138 = vmatprep.subr.bf16.mxu0 %v1856
      %2139 = vmatpush1.bf16.msra.mxu0 %v1855
      %2140 = vmatprep.mubr.bf16.mxu0 0
      %2141 = vmatmul.mubr.bf16.gmra.mrb[0].mxu0 0
      %v2142 = vpop.f32.mrb[0].mxu0
      %v2143 = vadd.f32 0.0, %v2142
      %v2144 = vpop.f32.mrb[0].mxu0
      %v2145 = vadd.f32 0.0, %v2144
      %v2146 = vpop.f32.mrb[0].mxu0
      %v2147 = vpop.f32.mrb[0].mxu0
      %2148 = vdwg.mxu0
      %v2149 = vadd.f32 %v1209, %v2020
      %v2150 = vadd.f32 %v1210, %v2022
      %v2151 = vadd.f32 %v1211, %v2061
      %v2152 = vadd.f32 %v1212, %v2063
      %v2153 = vadd.f32 %v1213, %v2102
      %v2154 = vadd.f32 %v1214, %v2104
      %v2155 = vadd.f32 %v1215, %v2143
      %v2156 = vadd.f32 %v1216, %v2145
      %v2157 = vxor.u32 %v2149, 2147483648
      %v2158 = vxor.u32 %v2150, 2147483648
      %v2159 = vmul.f32 %v2157, 1.442695
      %v2160 = vpow.pop %v2159
      %v2161 = vmul.f32 %v2158, 1.442695
      %v2162 = vpow.pop %v2161
      %v2163 = vadd.f32 %v2160, 1.0
      %v2164 = vadd.f32 %v2162, 1.0
      %v2165 = vrcp.pop %v2163
      %v2166 = vmul.f32 1.0, %v2165
      %v2167 = vrcp.pop %v2164
      %v2168 = vmul.f32 1.0, %v2167
      %v2169 = vxor.u32 %v2151, 2147483648
      %v2170 = vxor.u32 %v2152, 2147483648
      %v2171 = vmul.f32 %v2169, 1.442695
      %v2172 = vpow.pop %v2171
      %v2173 = vmul.f32 %v2170, 1.442695
      %v2174 = vpow.pop %v2173
      %v2175 = vadd.f32 %v2172, 1.0
      %v2176 = vadd.f32 %v2174, 1.0
      %v2177 = vrcp.pop %v2175
      %v2178 = vmul.f32 1.0, %v2177
      %v2179 = vrcp.pop %v2176
      %v2180 = vmul.f32 1.0, %v2179
      %v2181 = vtanh.pop %v2153
      %v2182 = vtanh.pop %v2154
      %v2183 = vxor.u32 %v2155, 2147483648
      %v2184 = vxor.u32 %v2156, 2147483648
      %v2185 = vmul.f32 %v2183, 1.442695
      %v2186 = vpow.pop %v2185
      %v2187 = vmul.f32 %v2184, 1.442695
      %v2188 = vpow.pop %v2187
      %v2189 = vadd.f32 %v2186, 1.0
      %v2190 = vadd.f32 %v2188, 1.0
      %v2191 = vrcp.pop %v2189
      %v2192 = vmul.f32 1.0, %v2191
      %v2193 = vrcp.pop %v2190
      %v2194 = vmul.f32 1.0, %v2193
      %v2195 = vmul.f32 %v2178, 0.0
      %v2196 = vmul.f32 %v2180, 0.0
      %v2197 = vmul.f32 %v2166, %v2181
      %v2198 = vmul.f32 %v2168, %v2182
      %v2199 = vadd.f32 %v2195, %v2197
      %v2200 = vadd.f32 %v2196, %v2198
      %v2201 = vtanh.pop %v2199
      %v2202 = vtanh.pop %v2200
      %v2203 = vmul.f32 %v2192, %v2201
      %v2204 = vmul.f32 %v2194, %v2202
      %v2205 = vmax.f32 %v2203, 0.0
      %v2206 = vmax.f32 %v2204, 0.0
      %v2207 = vld [vmem:[#allocation2] sm:$0xc]
      %v2208 = vld [vmem:[#allocation2 + $0x8] sm:$0xc]
      %v2209 = vld [vmem:[#allocation2 + $0x10] sm:$0xc]
      %v2210 = vld [vmem:[#allocation2 + $0x18] sm:$0xc]
      %v2211 = vld [vmem:[#allocation2 + $0x20] sm:$0xc]
      %v2212 = vld [vmem:[#allocation2 + $0x28] sm:$0xc]
      %v2213 = vld [vmem:[#allocation2 + $0x30] sm:$0xc]
      %v2214 = vld [vmem:[#allocation2 + $0x38] sm:$0xc]
      %v2215 = vpack.c.bf16 %v2203, %v2203
      %v2216 = vpack.c.bf16 %v2204, %v2204
      %2217 = vmatprep.subr.bf16.mxu0 %v1730
      %2218 = vmatpush1.bf16.msra.mxu0 %v1729
      %2219 = vmatprep.subr.bf16.mxu0 %v1738
      %2220 = vmatpush1.bf16.msra.mxu0 %v1737
      %2221 = vmatprep.subr.bf16.mxu0 %v1746
      %2222 = vmatpush1.bf16.msra.mxu0 %v1745
      %2223 = vmatprep.subr.bf16.mxu0 %v1754
      %2224 = vmatpush1.bf16.msra.mxu0 %v1753
      %2225 = vmatprep.subr.bf16.mxu0 %v1762
      %2226 = vmatpush1.bf16.msra.mxu0 %v1761
      %2227 = vmatprep.subr.bf16.mxu0 %v1770
      %2228 = vmatpush1.bf16.msra.mxu0 %v1769
      %2229 = vmatprep.subr.bf16.mxu0 %v1778
      %2230 = vmatpush1.bf16.msra.mxu0 %v1777
      %2231 = vmatprep.subr.bf16.mxu0 %v1786
      %2232 = vmatpush1.bf16.msra.mxu0 %v1785
      %2233 = vmatprep.subr.bf16.mxu0 %v1794
      %2234 = vmatpush1.bf16.msra.mxu0 %v1793
      %2235 = vmatprep.subr.bf16.mxu0 %v1802
      %2236 = vmatpush1.bf16.msra.mxu0 %v1801
      %2237 = vmatprep.subr.bf16.mxu0 %v1810
      %2238 = vmatpush1.bf16.msra.mxu0 %v1809
      %2239 = vmatprep.subr.bf16.mxu0 %v1818
      %2240 = vmatpush1.bf16.msra.mxu0 %v1817
      %2241 = vmatprep.subr.bf16.mxu0 %v1826
      %2242 = vmatpush1.bf16.msra.mxu0 %v1825
      %2243 = vmatprep.subr.bf16.mxu0 %v1834
      %2244 = vmatpush1.bf16.msra.mxu0 %v1833
      %2245 = vmatprep.subr.bf16.mxu0 %v1842
      %2246 = vmatpush1.bf16.msra.mxu0 %v1841
      %2247 = vmatprep.subr.bf16.mxu0 %v1850
      %2248 = vmatpush1.bf16.msra.mxu0 %v1849
      %2249 = vmatprep.mubr.bf16.mxu0 %v2216
      %2250 = vmatmul.mubr.bf16.gmra.mrb[0].mxu0 %v2215
      %v2251 = vpop.f32.mrb[0].mxu0
      %v2252 = vadd.f32 0.0, %v2251
      %v2253 = vpop.f32.mrb[0].mxu0
      %v2254 = vadd.f32 0.0, %v2253
      %v2255 = vpop.f32.mrb[0].mxu0
      %v2256 = vpop.f32.mrb[0].mxu0
      %2257 = vdwg.mxu0
      %2258 = vmatprep.subr.bf16.mxu0 %v1732
      %2259 = vmatpush1.bf16.msra.mxu0 %v1731
      %2260 = vmatprep.subr.bf16.mxu0 %v1740
      %2261 = vmatpush1.bf16.msra.mxu0 %v1739
      %2262 = vmatprep.subr.bf16.mxu0 %v1748
      %2263 = vmatpush1.bf16.msra.mxu0 %v1747
      %2264 = vmatprep.subr.bf16.mxu0 %v1756
      %2265 = vmatpush1.bf16.msra.mxu0 %v1755
      %2266 = vmatprep.subr.bf16.mxu0 %v1764
      %2267 = vmatpush1.bf16.msra.mxu0 %v1763
      %2268 = vmatprep.subr.bf16.mxu0 %v1772
      %2269 = vmatpush1.bf16.msra.mxu0 %v1771
      %2270 = vmatprep.subr.bf16.mxu0 %v1780
      %2271 = vmatpush1.bf16.msra.mxu0 %v1779
      %2272 = vmatprep.subr.bf16.mxu0 %v1788
      %2273 = vmatpush1.bf16.msra.mxu0 %v1787
      %2274 = vmatprep.subr.bf16.mxu0 %v1796
      %2275 = vmatpush1.bf16.msra.mxu0 %v1795
      %2276 = vmatprep.subr.bf16.mxu0 %v1804
      %2277 = vmatpush1.bf16.msra.mxu0 %v1803
      %2278 = vmatprep.subr.bf16.mxu0 %v1812
      %2279 = vmatpush1.bf16.msra.mxu0 %v1811
      %2280 = vmatprep.subr.bf16.mxu0 %v1820
      %2281 = vmatpush1.bf16.msra.mxu0 %v1819
      %2282 = vmatprep.subr.bf16.mxu0 %v1828
      %2283 = vmatpush1.bf16.msra.mxu0 %v1827
      %2284 = vmatprep.subr.bf16.mxu0 %v1836
      %2285 = vmatpush1.bf16.msra.mxu0 %v1835
      %2286 = vmatprep.subr.bf16.mxu0 %v1844
      %2287 = vmatpush1.bf16.msra.mxu0 %v1843
      %2288 = vmatprep.subr.bf16.mxu0 %v1852
      %2289 = vmatpush1.bf16.msra.mxu0 %v1851
      %2290 = vmatprep.mubr.bf16.mxu0 %v2216
      %2291 = vmatmul.mubr.bf16.gmra.mrb[0].mxu0 %v2215
      %v2292 = vpop.f32.mrb[0].mxu0
      %v2293 = vadd.f32 0.0, %v2292
      %v2294 = vpop.f32.mrb[0].mxu0
      %v2295 = vadd.f32 0.0, %v2294
      %v2296 = vpop.f32.mrb[0].mxu0
      %v2297 = vpop.f32.mrb[0].mxu0
      %2298 = vdwg.mxu0
      %2299 = vmatprep.subr.bf16.mxu0 %v1734
      %2300 = vmatpush1.bf16.msra.mxu0 %v1733
      %2301 = vmatprep.subr.bf16.mxu0 %v1742
      %2302 = vmatpush1.bf16.msra.mxu0 %v1741
      %2303 = vmatprep.subr.bf16.mxu0 %v1750
      %2304 = vmatpush1.bf16.msra.mxu0 %v1749
      %2305 = vmatprep.subr.bf16.mxu0 %v1758
      %2306 = vmatpush1.bf16.msra.mxu0 %v1757
      %2307 = vmatprep.subr.bf16.mxu0 %v1766
      %2308 = vmatpush1.bf16.msra.mxu0 %v1765
      %2309 = vmatprep.subr.bf16.mxu0 %v1774
      %2310 = vmatpush1.bf16.msra.mxu0 %v1773
      %2311 = vmatprep.subr.bf16.mxu0 %v1782
      %2312 = vmatpush1.bf16.msra.mxu0 %v1781
      %2313 = vmatprep.subr.bf16.mxu0 %v1790
      %2314 = vmatpush1.bf16.msra.mxu0 %v1789
      %2315 = vmatprep.subr.bf16.mxu0 %v1798
      %2316 = vmatpush1.bf16.msra.mxu0 %v1797
      %2317 = vmatprep.subr.bf16.mxu0 %v1806
      %2318 = vmatpush1.bf16.msra.mxu0 %v1805
      %2319 = vmatprep.subr.bf16.mxu0 %v1814
      %2320 = vmatpush1.bf16.msra.mxu0 %v1813
      %2321 = vmatprep.subr.bf16.mxu0 %v1822
      %2322 = vmatpush1.bf16.msra.mxu0 %v1821
      %2323 = vmatprep.subr.bf16.mxu0 %v1830
      %2324 = vmatpush1.bf16.msra.mxu0 %v1829
      %2325 = vmatprep.subr.bf16.mxu0 %v1838
      %2326 = vmatpush1.bf16.msra.mxu0 %v1837
      %2327 = vmatprep.subr.bf16.mxu0 %v1846
      %2328 = vmatpush1.bf16.msra.mxu0 %v1845
      %2329 = vmatprep.subr.bf16.mxu0 %v1854
      %2330 = vmatpush1.bf16.msra.mxu0 %v1853
      %2331 = vmatprep.mubr.bf16.mxu0 %v2216
      %2332 = vmatmul.mubr.bf16.gmra.mrb[0].mxu0 %v2215
      %v2333 = vpop.f32.mrb[0].mxu0
      %v2334 = vadd.f32 0.0, %v2333
      %v2335 = vpop.f32.mrb[0].mxu0
      %v2336 = vadd.f32 0.0, %v2335
      %v2337 = vpop.f32.mrb[0].mxu0
      %v2338 = vpop.f32.mrb[0].mxu0
      %2339 = vdwg.mxu0
      %2340 = vmatprep.subr.bf16.mxu0 %v1736
      %2341 = vmatpush1.bf16.msra.mxu0 %v1735
      %2342 = vmatprep.subr.bf16.mxu0 %v1744
      %2343 = vmatpush1.bf16.msra.mxu0 %v1743
      %2344 = vmatprep.subr.bf16.mxu0 %v1752
      %2345 = vmatpush1.bf16.msra.mxu0 %v1751
      %2346 = vmatprep.subr.bf16.mxu0 %v1760
      %2347 = vmatpush1.bf16.msra.mxu0 %v1759
      %2348 = vmatprep.subr.bf16.mxu0 %v1768
      %2349 = vmatpush1.bf16.msra.mxu0 %v1767
      %2350 = vmatprep.subr.bf16.mxu0 %v1776
      %2351 = vmatpush1.bf16.msra.mxu0 %v1775
      %2352 = vmatprep.subr.bf16.mxu0 %v1784
      %2353 = vmatpush1.bf16.msra.mxu0 %v1783
      %2354 = vmatprep.subr.bf16.mxu0 %v1792
      %2355 = vmatpush1.bf16.msra.mxu0 %v1791
      %2356 = vmatprep.subr.bf16.mxu0 %v1800
      %2357 = vmatpush1.bf16.msra.mxu0 %v1799
      %2358 = vmatprep.subr.bf16.mxu0 %v1808
      %2359 = vmatpush1.bf16.msra.mxu0 %v1807
      %2360 = vmatprep.subr.bf16.mxu0 %v1816
      %2361 = vmatpush1.bf16.msra.mxu0 %v1815
      %2362 = vmatprep.subr.bf16.mxu0 %v1824
      %2363 = vmatpush1.bf16.msra.mxu0 %v1823
      %2364 = vmatprep.subr.bf16.mxu0 %v1832
      %2365 = vmatpush1.bf16.msra.mxu0 %v1831
      %2366 = vmatprep.subr.bf16.mxu0 %v1840
      %2367 = vmatpush1.bf16.msra.mxu0 %v1839
      %2368 = vmatprep.subr.bf16.mxu0 %v1848
      %2369 = vmatpush1.bf16.msra.mxu0 %v1847
      %2370 = vmatprep.subr.bf16.mxu0 %v1856
      %2371 = vmatpush1.bf16.msra.mxu0 %v1855
      %2372 = vmatprep.mubr.bf16.mxu0 %v2216
      %2373 = vmatmul.mubr.bf16.gmra.mrb[0].mxu0 %v2215
      %v2374 = vpop.f32.mrb[0].mxu0
      %v2375 = vadd.f32 0.0, %v2374
      %v2376 = vpop.f32.mrb[0].mxu0
      %v2377 = vadd.f32 0.0, %v2376
      %v2378 = vpop.f32.mrb[0].mxu0
      %v2379 = vpop.f32.mrb[0].mxu0
      %2380 = vdwg.mxu0
      %v2389 = vrot.slane %v2252, 6
      %v2390 = vrot.slane %v2254, 6
      %v2391 = vrot.slane %v2293, 6
      %v2392 = vrot.slane %v2295, 6
      %v2393 = vrot.slane %v2334, 6
      %v2394 = vrot.slane %v2336, 6
      %v2395 = vrot.slane %v2375, 6
      %v2396 = vrot.slane %v2377, 6
      %v2405 = vadd.f32 %v2207, %v2389
      %v2406 = vadd.f32 %v2208, %v2390
      %v2407 = vadd.f32 %v2209, %v2391
      %v2408 = vadd.f32 %v2210, %v2392
      %v2409 = vadd.f32 %v2211, %v2393
      %v2410 = vadd.f32 %v2212, %v2394
      %v2411 = vadd.f32 %v2213, %v2395
      %v2412 = vadd.f32 %v2214, %v2396
      %v2413 = vxor.u32 %v2405, 2147483648
      %v2414 = vxor.u32 %v2406, 2147483648
      %v2415 = vmul.f32 %v2413, 1.442695
      %v2416 = vpow.pop %v2415
      %v2417 = vmul.f32 %v2414, 1.442695
      %v2418 = vpow.pop %v2417
      %v2419 = vadd.f32 %v2416, 1.0
      %v2420 = vadd.f32 %v2418, 1.0
      %v2421 = vrcp.pop %v2419
      %v2422 = vmul.f32 1.0, %v2421
      %v2423 = vrcp.pop %v2420
      %v2424 = vmul.f32 1.0, %v2423
      %v2425 = vxor.u32 %v2407, 2147483648
      %v2426 = vxor.u32 %v2408, 2147483648
      %v2427 = vmul.f32 %v2425, 1.442695
      %v2428 = vpow.pop %v2427
      %v2429 = vmul.f32 %v2426, 1.442695
      %v2430 = vpow.pop %v2429
      %v2431 = vadd.f32 %v2428, 1.0
      %v2432 = vadd.f32 %v2430, 1.0
      %v2433 = vrcp.pop %v2431
      %v2434 = vmul.f32 1.0, %v2433
      %v2435 = vrcp.pop %v2432
      %v2436 = vmul.f32 1.0, %v2435
      %v2437 = vtanh.pop %v2409
      %v2438 = vtanh.pop %v2410
      %v2439 = vxor.u32 %v2411, 2147483648
      %v2440 = vxor.u32 %v2412, 2147483648
      %v2441 = vmul.f32 %v2439, 1.442695
      %v2442 = vpow.pop %v2441
      %v2443 = vmul.f32 %v2440, 1.442695
      %v2444 = vpow.pop %v2443
      %v2445 = vadd.f32 %v2442, 1.0
      %v2446 = vadd.f32 %v2444, 1.0
      %v2447 = vrcp.pop %v2445
      %v2448 = vmul.f32 1.0, %v2447
      %v2449 = vrcp.pop %v2446
      %v2450 = vmul.f32 1.0, %v2449
      %v2453 = vrot.slane %v2199, 6
      %v2454 = vrot.slane %v2200, 6
      %v2457 = vmul.f32 %v2434, %v2453
      %v2458 = vmul.f32 %v2436, %v2454
      %v2459 = vmul.f32 %v2422, %v2437
      %v2460 = vmul.f32 %v2424, %v2438
      %v2461 = vadd.f32 %v2457, %v2459
      %v2462 = vadd.f32 %v2458, %v2460
      %v2463 = vtanh.pop %v2461
      %v2464 = vtanh.pop %v2462
      %v2465 = vmul.f32 %v2448, %v2463
      %v2466 = vmul.f32 %v2450, %v2464
      %v2469 = vrot.slane %v2465, 2
      %v2470 = vrot.slane %v2466, 2
      %v2473 = vmax.f32 %v2205, %v2469
      %v2474 = vmax.f32 %v2206, %v2470
      %v2475 = vld [vmem:[#allocation2] sm:$0x30]
      %v2476 = vld [vmem:[#allocation2 + $0x8] sm:$0x30]
      %v2477 = vld [vmem:[#allocation2 + $0x10] sm:$0x30]
      %v2478 = vld [vmem:[#allocation2 + $0x18] sm:$0x30]
      %v2479 = vld [vmem:[#allocation2 + $0x20] sm:$0x30]
      %v2480 = vld [vmem:[#allocation2 + $0x28] sm:$0x30]
      %v2481 = vld [vmem:[#allocation2 + $0x30] sm:$0x30]
      %v2482 = vld [vmem:[#allocation2 + $0x38] sm:$0x30]
      %v2483 = vpack.c.bf16 %v2465, %v2465
      %v2484 = vpack.c.bf16 %v2466, %v2466
      %v2487 = vrot.slane %v2483, 1
      %v2488 = vrot.slane %v2484, 1
      %2491 = vmatprep.subr.bf16.mxu0 %v1730
      %2492 = vmatpush1.bf16.msra.mxu0 %v1729
      %2493 = vmatprep.subr.bf16.mxu0 %v1738
      %2494 = vmatpush1.bf16.msra.mxu0 %v1737
      %2495 = vmatprep.subr.bf16.mxu0 %v1746
      %2496 = vmatpush1.bf16.msra.mxu0 %v1745
      %2497 = vmatprep.subr.bf16.mxu0 %v1754
      %2498 = vmatpush1.bf16.msra.mxu0 %v1753
      %2499 = vmatprep.subr.bf16.mxu0 %v1762
      %2500 = vmatpush1.bf16.msra.mxu0 %v1761
      %2501 = vmatprep.subr.bf16.mxu0 %v1770
      %2502 = vmatpush1.bf16.msra.mxu0 %v1769
      %2503 = vmatprep.subr.bf16.mxu0 %v1778
      %2504 = vmatpush1.bf16.msra.mxu0 %v1777
      %2505 = vmatprep.subr.bf16.mxu0 %v1786
      %2506 = vmatpush1.bf16.msra.mxu0 %v1785
      %2507 = vmatprep.subr.bf16.mxu0 %v1794
      %2508 = vmatpush1.bf16.msra.mxu0 %v1793
      %2509 = vmatprep.subr.bf16.mxu0 %v1802
      %2510 = vmatpush1.bf16.msra.mxu0 %v1801
      %2511 = vmatprep.subr.bf16.mxu0 %v1810
      %2512 = vmatpush1.bf16.msra.mxu0 %v1809
      %2513 = vmatprep.subr.bf16.mxu0 %v1818
      %2514 = vmatpush1.bf16.msra.mxu0 %v1817
      %2515 = vmatprep.subr.bf16.mxu0 %v1826
      %2516 = vmatpush1.bf16.msra.mxu0 %v1825
      %2517 = vmatprep.subr.bf16.mxu0 %v1834
      %2518 = vmatpush1.bf16.msra.mxu0 %v1833
      %2519 = vmatprep.subr.bf16.mxu0 %v1842
      %2520 = vmatpush1.bf16.msra.mxu0 %v1841
      %2521 = vmatprep.subr.bf16.mxu0 %v1850
      %2522 = vmatpush1.bf16.msra.mxu0 %v1849
      %2523 = vmatprep.mubr.bf16.mxu0 %v2488
      %2524 = vmatmul.mubr.bf16.gmra.mrb[0].mxu0 %v2487
      %v2525 = vpop.f32.mrb[0].mxu0
      %v2526 = vadd.f32 0.0, %v2525
      %v2527 = vpop.f32.mrb[0].mxu0
      %v2528 = vadd.f32 0.0, %v2527
      %v2529 = vpop.f32.mrb[0].mxu0
      %v2530 = vpop.f32.mrb[0].mxu0
      %2531 = vdwg.mxu0
      %2532 = vmatprep.subr.bf16.mxu0 %v1732
      %2533 = vmatpush1.bf16.msra.mxu0 %v1731
      %2534 = vmatprep.subr.bf16.mxu0 %v1740
      %2535 = vmatpush1.bf16.msra.mxu0 %v1739
      %2536 = vmatprep.subr.bf16.mxu0 %v1748
      %2537 = vmatpush1.bf16.msra.mxu0 %v1747
      %2538 = vmatprep.subr.bf16.mxu0 %v1756
      %2539 = vmatpush1.bf16.msra.mxu0 %v1755
      %2540 = vmatprep.subr.bf16.mxu0 %v1764
      %2541 = vmatpush1.bf16.msra.mxu0 %v1763
      %2542 = vmatprep.subr.bf16.mxu0 %v1772
      %2543 = vmatpush1.bf16.msra.mxu0 %v1771
      %2544 = vmatprep.subr.bf16.mxu0 %v1780
      %2545 = vmatpush1.bf16.msra.mxu0 %v1779
      %2546 = vmatprep.subr.bf16.mxu0 %v1788
      %2547 = vmatpush1.bf16.msra.mxu0 %v1787
      %2548 = vmatprep.subr.bf16.mxu0 %v1796
      %2549 = vmatpush1.bf16.msra.mxu0 %v1795
      %2550 = vmatprep.subr.bf16.mxu0 %v1804
      %2551 = vmatpush1.bf16.msra.mxu0 %v1803
      %2552 = vmatprep.subr.bf16.mxu0 %v1812
      %2553 = vmatpush1.bf16.msra.mxu0 %v1811
      %2554 = vmatprep.subr.bf16.mxu0 %v1820
      %2555 = vmatpush1.bf16.msra.mxu0 %v1819
      %2556 = vmatprep.subr.bf16.mxu0 %v1828
      %2557 = vmatpush1.bf16.msra.mxu0 %v1827
      %2558 = vmatprep.subr.bf16.mxu0 %v1836
      %2559 = vmatpush1.bf16.msra.mxu0 %v1835
      %2560 = vmatprep.subr.bf16.mxu0 %v1844
      %2561 = vmatpush1.bf16.msra.mxu0 %v1843
      %2562 = vmatprep.subr.bf16.mxu0 %v1852
      %2563 = vmatpush1.bf16.msra.mxu0 %v1851
      %2564 = vmatprep.mubr.bf16.mxu0 %v2488
      %2565 = vmatmul.mubr.bf16.gmra.mrb[0].mxu0 %v2487
      %v2566 = vpop.f32.mrb[0].mxu0
      %v2567 = vadd.f32 0.0, %v2566
      %v2568 = vpop.f32.mrb[0].mxu0
      %v2569 = vadd.f32 0.0, %v2568
      %v2570 = vpop.f32.mrb[0].mxu0
      %v2571 = vpop.f32.mrb[0].mxu0
      %2572 = vdwg.mxu0
      %2573 = vmatprep.subr.bf16.mxu0 %v1734
      %2574 = vmatpush1.bf16.msra.mxu0 %v1733
      %2575 = vmatprep.subr.bf16.mxu0 %v1742
      %2576 = vmatpush1.bf16.msra.mxu0 %v1741
      %2577 = vmatprep.subr.bf16.mxu0 %v1750
      %2578 = vmatpush1.bf16.msra.mxu0 %v1749
      %2579 = vmatprep.subr.bf16.mxu0 %v1758
      %2580 = vmatpush1.bf16.msra.mxu0 %v1757
      %2581 = vmatprep.subr.bf16.mxu0 %v1766
      %2582 = vmatpush1.bf16.msra.mxu0 %v1765
      %2583 = vmatprep.subr.bf16.mxu0 %v1774
      %2584 = vmatpush1.bf16.msra.mxu0 %v1773
      %2585 = vmatprep.subr.bf16.mxu0 %v1782
      %2586 = vmatpush1.bf16.msra.mxu0 %v1781
      %2587 = vmatprep.subr.bf16.mxu0 %v1790
      %2588 = vmatpush1.bf16.msra.mxu0 %v1789
      %2589 = vmatprep.subr.bf16.mxu0 %v1798
      %2590 = vmatpush1.bf16.msra.mxu0 %v1797
      %2591 = vmatprep.subr.bf16.mxu0 %v1806
      %2592 = vmatpush1.bf16.msra.mxu0 %v1805
      %2593 = vmatprep.subr.bf16.mxu0 %v1814
      %2594 = vmatpush1.bf16.msra.mxu0 %v1813
      %2595 = vmatprep.subr.bf16.mxu0 %v1822
      %2596 = vmatpush1.bf16.msra.mxu0 %v1821
      %2597 = vmatprep.subr.bf16.mxu0 %v1830
      %2598 = vmatpush1.bf16.msra.mxu0 %v1829
      %2599 = vmatprep.subr.bf16.mxu0 %v1838
      %2600 = vmatpush1.bf16.msra.mxu0 %v1837
      %2601 = vmatprep.subr.bf16.mxu0 %v1846
      %2602 = vmatpush1.bf16.msra.mxu0 %v1845
      %2603 = vmatprep.subr.bf16.mxu0 %v1854
      %2604 = vmatpush1.bf16.msra.mxu0 %v1853
      %2605 = vmatprep.mubr.bf16.mxu0 %v2488
      %2606 = vmatmul.mubr.bf16.gmra.mrb[0].mxu0 %v2487
      %v2607 = vpop.f32.mrb[0].mxu0
      %v2608 = vadd.f32 0.0, %v2607
      %v2609 = vpop.f32.mrb[0].mxu0
      %v2610 = vadd.f32 0.0, %v2609
      %v2611 = vpop.f32.mrb[0].mxu0
      %v2612 = vpop.f32.mrb[0].mxu0
      %2613 = vdwg.mxu0
      %2614 = vmatprep.subr.bf16.mxu0 %v1736
      %2615 = vmatpush1.bf16.msra.mxu0 %v1735
      %2616 = vmatprep.subr.bf16.mxu0 %v1744
      %2617 = vmatpush1.bf16.msra.mxu0 %v1743
      %2618 = vmatprep.subr.bf16.mxu0 %v1752
      %2619 = vmatpush1.bf16.msra.mxu0 %v1751
      %2620 = vmatprep.subr.bf16.mxu0 %v1760
      %2621 = vmatpush1.bf16.msra.mxu0 %v1759
      %2622 = vmatprep.subr.bf16.mxu0 %v1768
      %2623 = vmatpush1.bf16.msra.mxu0 %v1767
      %2624 = vmatprep.subr.bf16.mxu0 %v1776
      %2625 = vmatpush1.bf16.msra.mxu0 %v1775
      %2626 = vmatprep.subr.bf16.mxu0 %v1784
      %2627 = vmatpush1.bf16.msra.mxu0 %v1783
      %2628 = vmatprep.subr.bf16.mxu0 %v1792
      %2629 = vmatpush1.bf16.msra.mxu0 %v1791
      %2630 = vmatprep.subr.bf16.mxu0 %v1800
      %2631 = vmatpush1.bf16.msra.mxu0 %v1799
      %2632 = vmatprep.subr.bf16.mxu0 %v1808
      %2633 = vmatpush1.bf16.msra.mxu0 %v1807
      %2634 = vmatprep.subr.bf16.mxu0 %v1816
      %2635 = vmatpush1.bf16.msra.mxu0 %v1815
      %2636 = vmatprep.subr.bf16.mxu0 %v1824
      %2637 = vmatpush1.bf16.msra.mxu0 %v1823
      %2638 = vmatprep.subr.bf16.mxu0 %v1832
      %2639 = vmatpush1.bf16.msra.mxu0 %v1831
      %2640 = vmatprep.subr.bf16.mxu0 %v1840
      %2641 = vmatpush1.bf16.msra.mxu0 %v1839
      %2642 = vmatprep.subr.bf16.mxu0 %v1848
      %2643 = vmatpush1.bf16.msra.mxu0 %v1847
      %2644 = vmatprep.subr.bf16.mxu0 %v1856
      %2645 = vmatpush1.bf16.msra.mxu0 %v1855
      %2646 = vmatprep.mubr.bf16.mxu0 %v2488
      %2647 = vmatmul.mubr.bf16.gmra.mrb[0].mxu0 %v2487
      %v2648 = vpop.f32.mrb[0].mxu0
      %v2649 = vadd.f32 0.0, %v2648
      %v2650 = vpop.f32.mrb[0].mxu0
      %v2651 = vadd.f32 0.0, %v2650
      %v2652 = vpop.f32.mrb[0].mxu0
      %v2653 = vpop.f32.mrb[0].mxu0
      %2654 = vdwg.mxu0
      %v2663 = vrot.slane %v2526, 4
      %v2664 = vrot.slane %v2528, 4
      %v2665 = vrot.slane %v2567, 4
      %v2666 = vrot.slane %v2569, 4
      %v2667 = vrot.slane %v2608, 4
      %v2668 = vrot.slane %v2610, 4
      %v2669 = vrot.slane %v2649, 4
      %v2670 = vrot.slane %v2651, 4
      %v2679 = vadd.f32 %v2475, %v2663
      %v2680 = vadd.f32 %v2476, %v2664
      %v2681 = vadd.f32 %v2477, %v2665
      %v2682 = vadd.f32 %v2478, %v2666
      %v2683 = vadd.f32 %v2479, %v2667
      %v2684 = vadd.f32 %v2480, %v2668
      %v2685 = vadd.f32 %v2481, %v2669
      %v2686 = vadd.f32 %v2482, %v2670
      %v2687 = vxor.u32 %v2679, 2147483648
      %v2688 = vxor.u32 %v2680, 2147483648
      %v2689 = vmul.f32 %v2687, 1.442695
      %v2690 = vpow.pop %v2689
      %v2691 = vmul.f32 %v2688, 1.442695
      %v2692 = vpow.pop %v2691
      %v2693 = vadd.f32 %v2690, 1.0
      %v2694 = vadd.f32 %v2692, 1.0
      %v2695 = vrcp.pop %v2693
      %v2696 = vmul.f32 1.0, %v2695
      %v2697 = vrcp.pop %v2694
      %v2698 = vmul.f32 1.0, %v2697
      %v2699 = vxor.u32 %v2681, 2147483648
      %v2700 = vxor.u32 %v2682, 2147483648
      %v2701 = vmul.f32 %v2699, 1.442695
      %v2702 = vpow.pop %v2701
      %v2703 = vmul.f32 %v2700, 1.442695
      %v2704 = vpow.pop %v2703
      %v2705 = vadd.f32 %v2702, 1.0
      %v2706 = vadd.f32 %v2704, 1.0
      %v2707 = vrcp.pop %v2705
      %v2708 = vmul.f32 1.0, %v2707
      %v2709 = vrcp.pop %v2706
      %v2710 = vmul.f32 1.0, %v2709
      %v2711 = vtanh.pop %v2683
      %v2712 = vtanh.pop %v2684
      %v2713 = vxor.u32 %v2685, 2147483648
      %v2714 = vxor.u32 %v2686, 2147483648
      %v2715 = vmul.f32 %v2713, 1.442695
      %v2716 = vpow.pop %v2715
      %v2717 = vmul.f32 %v2714, 1.442695
      %v2718 = vpow.pop %v2717
      %v2719 = vadd.f32 %v2716, 1.0
      %v2720 = vadd.f32 %v2718, 1.0
      %v2721 = vrcp.pop %v2719
      %v2722 = vmul.f32 1.0, %v2721
      %v2723 = vrcp.pop %v2720
      %v2724 = vmul.f32 1.0, %v2723
      %v2727 = vrot.slane %v2461, 6
      %v2728 = vrot.slane %v2462, 6
      %v2731 = vmul.f32 %v2708, %v2727
      %v2732 = vmul.f32 %v2710, %v2728
      %v2733 = vmul.f32 %v2696, %v2711
      %v2734 = vmul.f32 %v2698, %v2712
      %v2735 = vadd.f32 %v2731, %v2733
      %v2736 = vadd.f32 %v2732, %v2734
      %v2737 = vtanh.pop %v2735
      %v2738 = vtanh.pop %v2736
      %v2739 = vmul.f32 %v2722, %v2737
      %v2740 = vmul.f32 %v2724, %v2738
      %v2743 = vrot.slane %v2739, 4
      %v2744 = vrot.slane %v2740, 4
      %v2747 = vmax.f32 %v2473, %v2743
      %v2748 = vmax.f32 %v2474, %v2744
      %v2749 = vld [vmem:[#allocation2] sm:$0xc0]
      %v2750 = vld [vmem:[#allocation2 + $0x8] sm:$0xc0]
      %v2751 = vld [vmem:[#allocation2 + $0x10] sm:$0xc0]
      %v2752 = vld [vmem:[#allocation2 + $0x18] sm:$0xc0]
      %v2753 = vld [vmem:[#allocation2 + $0x20] sm:$0xc0]
      %v2754 = vld [vmem:[#allocation2 + $0x28] sm:$0xc0]
      %v2755 = vld [vmem:[#allocation2 + $0x30] sm:$0xc0]
      %v2756 = vld [vmem:[#allocation2 + $0x38] sm:$0xc0]
      %v2757 = vpack.c.bf16 %v2739, %v2739
      %v2758 = vpack.c.bf16 %v2740, %v2740
      %v2761 = vrot.slane %v2757, 2
      %v2762 = vrot.slane %v2758, 2
      %2765 = vmatprep.subr.bf16.mxu0 %v1730
      %2766 = vmatpush1.bf16.msra.mxu0 %v1729
      %2767 = vmatprep.subr.bf16.mxu0 %v1738
      %2768 = vmatpush1.bf16.msra.mxu0 %v1737
      %2769 = vmatprep.subr.bf16.mxu0 %v1746
      %2770 = vmatpush1.bf16.msra.mxu0 %v1745
      %2771 = vmatprep.subr.bf16.mxu0 %v1754
      %2772 = vmatpush1.bf16.msra.mxu0 %v1753
      %2773 = vmatprep.subr.bf16.mxu0 %v1762
      %2774 = vmatpush1.bf16.msra.mxu0 %v1761
      %2775 = vmatprep.subr.bf16.mxu0 %v1770
      %2776 = vmatpush1.bf16.msra.mxu0 %v1769
      %2777 = vmatprep.subr.bf16.mxu0 %v1778
      %2778 = vmatpush1.bf16.msra.mxu0 %v1777
      %2779 = vmatprep.subr.bf16.mxu0 %v1786
      %2780 = vmatpush1.bf16.msra.mxu0 %v1785
      %2781 = vmatprep.subr.bf16.mxu0 %v1794
      %2782 = vmatpush1.bf16.msra.mxu0 %v1793
      %2783 = vmatprep.subr.bf16.mxu0 %v1802
      %2784 = vmatpush1.bf16.msra.mxu0 %v1801
      %2785 = vmatprep.subr.bf16.mxu0 %v1810
      %2786 = vmatpush1.bf16.msra.mxu0 %v1809
      %2787 = vmatprep.subr.bf16.mxu0 %v1818
      %2788 = vmatpush1.bf16.msra.mxu0 %v1817
      %2789 = vmatprep.subr.bf16.mxu0 %v1826
      %2790 = vmatpush1.bf16.msra.mxu0 %v1825
      %2791 = vmatprep.subr.bf16.mxu0 %v1834
      %2792 = vmatpush1.bf16.msra.mxu0 %v1833
      %2793 = vmatprep.subr.bf16.mxu0 %v1842
      %2794 = vmatpush1.bf16.msra.mxu0 %v1841
      %2795 = vmatprep.subr.bf16.mxu0 %v1850
      %2796 = vmatpush1.bf16.msra.mxu0 %v1849
      %2797 = vmatprep.mubr.bf16.mxu0 %v2762
      %2798 = vmatmul.mubr.bf16.gmra.mrb[0].mxu0 %v2761
      %v2799 = vpop.f32.mrb[0].mxu0
      %v2800 = vadd.f32 0.0, %v2799
      %v2801 = vpop.f32.mrb[0].mxu0
      %v2802 = vadd.f32 0.0, %v2801
      %v2803 = vpop.f32.mrb[0].mxu0
      %v2804 = vpop.f32.mrb[0].mxu0
      %2805 = vdwg.mxu0
      %2806 = vmatprep.subr.bf16.mxu0 %v1732
      %2807 = vmatpush1.bf16.msra.mxu0 %v1731
      %2808 = vmatprep.subr.bf16.mxu0 %v1740
      %2809 = vmatpush1.bf16.msra.mxu0 %v1739
      %2810 = vmatprep.subr.bf16.mxu0 %v1748
      %2811 = vmatpush1.bf16.msra.mxu0 %v1747
      %2812 = vmatprep.subr.bf16.mxu0 %v1756
      %2813 = vmatpush1.bf16.msra.mxu0 %v1755
      %2814 = vmatprep.subr.bf16.mxu0 %v1764
      %2815 = vmatpush1.bf16.msra.mxu0 %v1763
      %2816 = vmatprep.subr.bf16.mxu0 %v1772
      %2817 = vmatpush1.bf16.msra.mxu0 %v1771
      %2818 = vmatprep.subr.bf16.mxu0 %v1780
      %2819 = vmatpush1.bf16.msra.mxu0 %v1779
      %2820 = vmatprep.subr.bf16.mxu0 %v1788
      %2821 = vmatpush1.bf16.msra.mxu0 %v1787
      %2822 = vmatprep.subr.bf16.mxu0 %v1796
      %2823 = vmatpush1.bf16.msra.mxu0 %v1795
      %2824 = vmatprep.subr.bf16.mxu0 %v1804
      %2825 = vmatpush1.bf16.msra.mxu0 %v1803
      %2826 = vmatprep.subr.bf16.mxu0 %v1812
      %2827 = vmatpush1.bf16.msra.mxu0 %v1811
      %2828 = vmatprep.subr.bf16.mxu0 %v1820
      %2829 = vmatpush1.bf16.msra.mxu0 %v1819
      %2830 = vmatprep.subr.bf16.mxu0 %v1828
      %2831 = vmatpush1.bf16.msra.mxu0 %v1827
      %2832 = vmatprep.subr.bf16.mxu0 %v1836
      %2833 = vmatpush1.bf16.msra.mxu0 %v1835
      %2834 = vmatprep.subr.bf16.mxu0 %v1844
      %2835 = vmatpush1.bf16.msra.mxu0 %v1843
      %2836 = vmatprep.subr.bf16.mxu0 %v1852
      %2837 = vmatpush1.bf16.msra.mxu0 %v1851
      %2838 = vmatprep.mubr.bf16.mxu0 %v2762
      %2839 = vmatmul.mubr.bf16.gmra.mrb[0].mxu0 %v2761
      %v2840 = vpop.f32.mrb[0].mxu0
      %v2841 = vadd.f32 0.0, %v2840
      %v2842 = vpop.f32.mrb[0].mxu0
      %v2843 = vadd.f32 0.0, %v2842
      %v2844 = vpop.f32.mrb[0].mxu0
      %v2845 = vpop.f32.mrb[0].mxu0
      %2846 = vdwg.mxu0
      %2847 = vmatprep.subr.bf16.mxu0 %v1734
      %2848 = vmatpush1.bf16.msra.mxu0 %v1733
      %2849 = vmatprep.subr.bf16.mxu0 %v1742
      %2850 = vmatpush1.bf16.msra.mxu0 %v1741
      %2851 = vmatprep.subr.bf16.mxu0 %v1750
      %2852 = vmatpush1.bf16.msra.mxu0 %v1749
      %2853 = vmatprep.subr.bf16.mxu0 %v1758
      %2854 = vmatpush1.bf16.msra.mxu0 %v1757
      %2855 = vmatprep.subr.bf16.mxu0 %v1766
      %2856 = vmatpush1.bf16.msra.mxu0 %v1765
      %2857 = vmatprep.subr.bf16.mxu0 %v1774
      %2858 = vmatpush1.bf16.msra.mxu0 %v1773
      %2859 = vmatprep.subr.bf16.mxu0 %v1782
      %2860 = vmatpush1.bf16.msra.mxu0 %v1781
      %2861 = vmatprep.subr.bf16.mxu0 %v1790
      %2862 = vmatpush1.bf16.msra.mxu0 %v1789
      %2863 = vmatprep.subr.bf16.mxu0 %v1798
      %2864 = vmatpush1.bf16.msra.mxu0 %v1797
      %2865 = vmatprep.subr.bf16.mxu0 %v1806
      %2866 = vmatpush1.bf16.msra.mxu0 %v1805
      %2867 = vmatprep.subr.bf16.mxu0 %v1814
      %2868 = vmatpush1.bf16.msra.mxu0 %v1813
      %2869 = vmatprep.subr.bf16.mxu0 %v1822
      %2870 = vmatpush1.bf16.msra.mxu0 %v1821
      %2871 = vmatprep.subr.bf16.mxu0 %v1830
      %2872 = vmatpush1.bf16.msra.mxu0 %v1829
      %2873 = vmatprep.subr.bf16.mxu0 %v1838
      %2874 = vmatpush1.bf16.msra.mxu0 %v1837
      %2875 = vmatprep.subr.bf16.mxu0 %v1846
      %2876 = vmatpush1.bf16.msra.mxu0 %v1845
      %2877 = vmatprep.subr.bf16.mxu0 %v1854
      %2878 = vmatpush1.bf16.msra.mxu0 %v1853
      %2879 = vmatprep.mubr.bf16.mxu0 %v2762
      %2880 = vmatmul.mubr.bf16.gmra.mrb[0].mxu0 %v2761
      %v2881 = vpop.f32.mrb[0].mxu0
      %v2882 = vadd.f32 0.0, %v2881
      %v2883 = vpop.f32.mrb[0].mxu0
      %v2884 = vadd.f32 0.0, %v2883
      %v2885 = vpop.f32.mrb[0].mxu0
      %v2886 = vpop.f32.mrb[0].mxu0
      %2887 = vdwg.mxu0
      %2888 = vmatprep.subr.bf16.mxu0 %v1736
      %2889 = vmatpush1.bf16.msra.mxu0 %v1735
      %2890 = vmatprep.subr.bf16.mxu0 %v1744
      %2891 = vmatpush1.bf16.msra.mxu0 %v1743
      %2892 = vmatprep.subr.bf16.mxu0 %v1752
      %2893 = vmatpush1.bf16.msra.mxu0 %v1751
      %2894 = vmatprep.subr.bf16.mxu0 %v1760
      %2895 = vmatpush1.bf16.msra.mxu0 %v1759
      %2896 = vmatprep.subr.bf16.mxu0 %v1768
      %2897 = vmatpush1.bf16.msra.mxu0 %v1767
      %2898 = vmatprep.subr.bf16.mxu0 %v1776
      %2899 = vmatpush1.bf16.msra.mxu0 %v1775
      %2900 = vmatprep.subr.bf16.mxu0 %v1784
      %2901 = vmatpush1.bf16.msra.mxu0 %v1783
      %2902 = vmatprep.subr.bf16.mxu0 %v1792
      %2903 = vmatpush1.bf16.msra.mxu0 %v1791
      %2904 = vmatprep.subr.bf16.mxu0 %v1800
      %2905 = vmatpush1.bf16.msra.mxu0 %v1799
      %2906 = vmatprep.subr.bf16.mxu0 %v1808
      %2907 = vmatpush1.bf16.msra.mxu0 %v1807
      %2908 = vmatprep.subr.bf16.mxu0 %v1816
      %2909 = vmatpush1.bf16.msra.mxu0 %v1815
      %2910 = vmatprep.subr.bf16.mxu0 %v1824
      %2911 = vmatpush1.bf16.msra.mxu0 %v1823
      %2912 = vmatprep.subr.bf16.mxu0 %v1832
      %2913 = vmatpush1.bf16.msra.mxu0 %v1831
      %2914 = vmatprep.subr.bf16.mxu0 %v1840
      %2915 = vmatpush1.bf16.msra.mxu0 %v1839
      %2916 = vmatprep.subr.bf16.mxu0 %v1848
      %2917 = vmatpush1.bf16.msra.mxu0 %v1847
      %2918 = vmatprep.subr.bf16.mxu0 %v1856
      %2919 = vmatpush1.bf16.msra.mxu0 %v1855
      %2920 = vmatprep.mubr.bf16.mxu0 %v2762
      %2921 = vmatmul.mubr.bf16.gmra.mrb[0].mxu0 %v2761
      %v2922 = vpop.f32.mrb[0].mxu0
      %v2923 = vadd.f32 0.0, %v2922
      %v2924 = vpop.f32.mrb[0].mxu0
      %v2925 = vadd.f32 0.0, %v2924
      %v2926 = vpop.f32.mrb[0].mxu0
      %v2927 = vpop.f32.mrb[0].mxu0
      %2928 = vdwg.mxu0
      %v2937 = vrot.slane %v2800, 2
      %v2938 = vrot.slane %v2802, 2
      %v2939 = vrot.slane %v2841, 2
      %v2940 = vrot.slane %v2843, 2
      %v2941 = vrot.slane %v2882, 2
      %v2942 = vrot.slane %v2884, 2
      %v2943 = vrot.slane %v2923, 2
      %v2944 = vrot.slane %v2925, 2
      %v2953 = vadd.f32 %v2749, %v2937
      %v2954 = vadd.f32 %v2750, %v2938
      %v2955 = vadd.f32 %v2751, %v2939
      %v2956 = vadd.f32 %v2752, %v2940
      %v2957 = vadd.f32 %v2753, %v2941
      %v2958 = vadd.f32 %v2754, %v2942
      %v2959 = vadd.f32 %v2755, %v2943
      %v2960 = vadd.f32 %v2756, %v2944
      %v2961 = vxor.u32 %v2953, 2147483648
      %v2962 = vxor.u32 %v2954, 2147483648
      %v2963 = vmul.f32 %v2961, 1.442695
      %v2964 = vpow.pop %v2963
      %v2965 = vmul.f32 %v2962, 1.442695
      %v2966 = vpow.pop %v2965
      %v2967 = vadd.f32 %v2964, 1.0
      %v2968 = vadd.f32 %v2966, 1.0
      %v2969 = vrcp.pop %v2967
      %v2970 = vmul.f32 1.0, %v2969
      %v2971 = vrcp.pop %v2968
      %v2972 = vmul.f32 1.0, %v2971
      %v2973 = vxor.u32 %v2955, 2147483648
      %v2974 = vxor.u32 %v2956, 2147483648
      %v2975 = vmul.f32 %v2973, 1.442695
      %v2976 = vpow.pop %v2975
      %v2977 = vmul.f32 %v2974, 1.442695
      %v2978 = vpow.pop %v2977
      %v2979 = vadd.f32 %v2976, 1.0
      %v2980 = vadd.f32 %v2978, 1.0
      %v2981 = vrcp.pop %v2979
      %v2982 = vmul.f32 1.0, %v2981
      %v2983 = vrcp.pop %v2980
      %v2984 = vmul.f32 1.0, %v2983
      %v2985 = vtanh.pop %v2957
      %v2986 = vtanh.pop %v2958
      %v2987 = vxor.u32 %v2959, 2147483648
      %v2988 = vxor.u32 %v2960, 2147483648
      %v2989 = vmul.f32 %v2987, 1.442695
      %v2990 = vpow.pop %v2989
      %v2991 = vmul.f32 %v2988, 1.442695
      %v2992 = vpow.pop %v2991
      %v2993 = vadd.f32 %v2990, 1.0
      %v2994 = vadd.f32 %v2992, 1.0
      %v2995 = vrcp.pop %v2993
      %v2996 = vmul.f32 1.0, %v2995
      %v2997 = vrcp.pop %v2994
      %v2998 = vmul.f32 1.0, %v2997
      %v3001 = vrot.slane %v2735, 6
      %v3002 = vrot.slane %v2736, 6
      %v3005 = vmul.f32 %v2982, %v3001
      %v3006 = vmul.f32 %v2984, %v3002
      %v3007 = vmul.f32 %v2970, %v2985
      %v3008 = vmul.f32 %v2972, %v2986
      %v3009 = vadd.f32 %v3005, %v3007
      %v3010 = vadd.f32 %v3006, %v3008
      %v3011 = vtanh.pop %v3009
      %v3012 = vtanh.pop %v3010
      %v3013 = vmul.f32 %v2996, %v3011
      %v3014 = vmul.f32 %v2998, %v3012
      %v3017 = vrot.slane %v3013, 6
      %v3018 = vrot.slane %v3014, 6
      %v3021 = vmax.f32 %v2747, %v3017
      %v3022 = vmax.f32 %v2748, %v3018
      %v3023 = vld [vmem:[#allocation2 + $0x40] sm:$0x3]
      %v3024 = vld [vmem:[#allocation2 + $0x48] sm:$0x3]
      %v3025 = vld [vmem:[#allocation2 + $0x50] sm:$0x3]
      %v3026 = vld [vmem:[#allocation2 + $0x58] sm:$0x3]
      %v3027 = vld [vmem:[#allocation2 + $0x60] sm:$0x3]
      %v3028 = vld [vmem:[#allocation2 + $0x68] sm:$0x3]
      %v3029 = vld [vmem:[#allocation2 + $0x70] sm:$0x3]
      %v3030 = vld [vmem:[#allocation2 + $0x78] sm:$0x3]
      %v3031 = vpack.c.bf16 %v3013, %v3013
      %v3032 = vpack.c.bf16 %v3014, %v3014
      %v3035 = vrot.slane %v3031, 3
      %v3036 = vrot.slane %v3032, 3
      %3039 = vmatprep.subr.bf16.mxu0 %v1730
      %3040 = vmatpush1.bf16.msra.mxu0 %v1729
      %3041 = vmatprep.subr.bf16.mxu0 %v1738
      %3042 = vmatpush1.bf16.msra.mxu0 %v1737
      %3043 = vmatprep.subr.bf16.mxu0 %v1746
      %3044 = vmatpush1.bf16.msra.mxu0 %v1745
      %3045 = vmatprep.subr.bf16.mxu0 %v1754
      %3046 = vmatpush1.bf16.msra.mxu0 %v1753
      %3047 = vmatprep.subr.bf16.mxu0 %v1762
      %3048 = vmatpush1.bf16.msra.mxu0 %v1761
      %3049 = vmatprep.subr.bf16.mxu0 %v1770
      %3050 = vmatpush1.bf16.msra.mxu0 %v1769
      %3051 = vmatprep.subr.bf16.mxu0 %v1778
      %3052 = vmatpush1.bf16.msra.mxu0 %v1777
      %3053 = vmatprep.subr.bf16.mxu0 %v1786
      %3054 = vmatpush1.bf16.msra.mxu0 %v1785
      %3055 = vmatprep.subr.bf16.mxu0 %v1794
      %3056 = vmatpush1.bf16.msra.mxu0 %v1793
      %3057 = vmatprep.subr.bf16.mxu0 %v1802
      %3058 = vmatpush1.bf16.msra.mxu0 %v1801
      %3059 = vmatprep.subr.bf16.mxu0 %v1810
      %3060 = vmatpush1.bf16.msra.mxu0 %v1809
      %3061 = vmatprep.subr.bf16.mxu0 %v1818
      %3062 = vmatpush1.bf16.msra.mxu0 %v1817
      %3063 = vmatprep.subr.bf16.mxu0 %v1826
      %3064 = vmatpush1.bf16.msra.mxu0 %v1825
      %3065 = vmatprep.subr.bf16.mxu0 %v1834
      %3066 = vmatpush1.bf16.msra.mxu0 %v1833
      %3067 = vmatprep.subr.bf16.mxu0 %v1842
      %3068 = vmatpush1.bf16.msra.mxu0 %v1841
      %3069 = vmatprep.subr.bf16.mxu0 %v1850
      %3070 = vmatpush1.bf16.msra.mxu0 %v1849
      %3071 = vmatprep.mubr.bf16.mxu0 %v3036
      %3072 = vmatmul.mubr.bf16.gmra.mrb[0].mxu0 %v3035
      %v3073 = vpop.f32.mrb[0].mxu0
      %v3074 = vadd.f32 0.0, %v3073
      %v3075 = vpop.f32.mrb[0].mxu0
      %v3076 = vadd.f32 0.0, %v3075
      %v3077 = vpop.f32.mrb[0].mxu0
      %v3078 = vpop.f32.mrb[0].mxu0
      %3079 = vdwg.mxu0
      %3080 = vmatprep.subr.bf16.mxu0 %v1732
      %3081 = vmatpush1.bf16.msra.mxu0 %v1731
      %3082 = vmatprep.subr.bf16.mxu0 %v1740
      %3083 = vmatpush1.bf16.msra.mxu0 %v1739
      %3084 = vmatprep.subr.bf16.mxu0 %v1748
      %3085 = vmatpush1.bf16.msra.mxu0 %v1747
      %3086 = vmatprep.subr.bf16.mxu0 %v1756
      %3087 = vmatpush1.bf16.msra.mxu0 %v1755
      %3088 = vmatprep.subr.bf16.mxu0 %v1764
      %3089 = vmatpush1.bf16.msra.mxu0 %v1763
      %3090 = vmatprep.subr.bf16.mxu0 %v1772
      %3091 = vmatpush1.bf16.msra.mxu0 %v1771
      %3092 = vmatprep.subr.bf16.mxu0 %v1780
      %3093 = vmatpush1.bf16.msra.mxu0 %v1779
      %3094 = vmatprep.subr.bf16.mxu0 %v1788
      %3095 = vmatpush1.bf16.msra.mxu0 %v1787
      %3096 = vmatprep.subr.bf16.mxu0 %v1796
      %3097 = vmatpush1.bf16.msra.mxu0 %v1795
      %3098 = vmatprep.subr.bf16.mxu0 %v1804
      %3099 = vmatpush1.bf16.msra.mxu0 %v1803
      %3100 = vmatprep.subr.bf16.mxu0 %v1812
      %3101 = vmatpush1.bf16.msra.mxu0 %v1811
      %3102 = vmatprep.subr.bf16.mxu0 %v1820
      %3103 = vmatpush1.bf16.msra.mxu0 %v1819
      %3104 = vmatprep.subr.bf16.mxu0 %v1828
      %3105 = vmatpush1.bf16.msra.mxu0 %v1827
      %3106 = vmatprep.subr.bf16.mxu0 %v1836
      %3107 = vmatpush1.bf16.msra.mxu0 %v1835
      %3108 = vmatprep.subr.bf16.mxu0 %v1844
      %3109 = vmatpush1.bf16.msra.mxu0 %v1843
      %3110 = vmatprep.subr.bf16.mxu0 %v1852
      %3111 = vmatpush1.bf16.msra.mxu0 %v1851
      %3112 = vmatprep.mubr.bf16.mxu0 %v3036
      %3113 = vmatmul.mubr.bf16.gmra.mrb[0].mxu0 %v3035
      %v3114 = vpop.f32.mrb[0].mxu0
      %v3115 = vadd.f32 0.0, %v3114
      %v3116 = vpop.f32.mrb[0].mxu0
      %v3117 = vadd.f32 0.0, %v3116
      %v3118 = vpop.f32.mrb[0].mxu0
      %v3119 = vpop.f32.mrb[0].mxu0
      %3120 = vdwg.mxu0
      %3121 = vmatprep.subr.bf16.mxu0 %v1734
      %3122 = vmatpush1.bf16.msra.mxu0 %v1733
      %3123 = vmatprep.subr.bf16.mxu0 %v1742
      %3124 = vmatpush1.bf16.msra.mxu0 %v1741
      %3125 = vmatprep.subr.bf16.mxu0 %v1750
      %3126 = vmatpush1.bf16.msra.mxu0 %v1749
      %3127 = vmatprep.subr.bf16.mxu0 %v1758
      %3128 = vmatpush1.bf16.msra.mxu0 %v1757
      %3129 = vmatprep.subr.bf16.mxu0 %v1766
      %3130 = vmatpush1.bf16.msra.mxu0 %v1765
      %3131 = vmatprep.subr.bf16.mxu0 %v1774
      %3132 = vmatpush1.bf16.msra.mxu0 %v1773
      %3133 = vmatprep.subr.bf16.mxu0 %v1782
      %3134 = vmatpush1.bf16.msra.mxu0 %v1781
      %3135 = vmatprep.subr.bf16.mxu0 %v1790
      %3136 = vmatpush1.bf16.msra.mxu0 %v1789
      %3137 = vmatprep.subr.bf16.mxu0 %v1798
      %3138 = vmatpush1.bf16.msra.mxu0 %v1797
      %3139 = vmatprep.subr.bf16.mxu0 %v1806
      %3140 = vmatpush1.bf16.msra.mxu0 %v1805
      %3141 = vmatprep.subr.bf16.mxu0 %v1814
      %3142 = vmatpush1.bf16.msra.mxu0 %v1813
      %3143 = vmatprep.subr.bf16.mxu0 %v1822
      %3144 = vmatpush1.bf16.msra.mxu0 %v1821
      %3145 = vmatprep.subr.bf16.mxu0 %v1830
      %3146 = vmatpush1.bf16.msra.mxu0 %v1829
      %3147 = vmatprep.subr.bf16.mxu0 %v1838
      %3148 = vmatpush1.bf16.msra.mxu0 %v1837
      %3149 = vmatprep.subr.bf16.mxu0 %v1846
      %3150 = vmatpush1.bf16.msra.mxu0 %v1845
      %3151 = vmatprep.subr.bf16.mxu0 %v1854
      %3152 = vmatpush1.bf16.msra.mxu0 %v1853
      %3153 = vmatprep.mubr.bf16.mxu0 %v3036
      %3154 = vmatmul.mubr.bf16.gmra.mrb[0].mxu0 %v3035
      %v3155 = vpop.f32.mrb[0].mxu0
      %v3156 = vadd.f32 0.0, %v3155
      %v3157 = vpop.f32.mrb[0].mxu0
      %v3158 = vadd.f32 0.0, %v3157
      %v3159 = vpop.f32.mrb[0].mxu0
      %v3160 = vpop.f32.mrb[0].mxu0
      %3161 = vdwg.mxu0
      %3162 = vmatprep.subr.bf16.mxu0 %v1736
      %3163 = vmatpush1.bf16.msra.mxu0 %v1735
      %3164 = vmatprep.subr.bf16.mxu0 %v1744
      %3165 = vmatpush1.bf16.msra.mxu0 %v1743
      %3166 = vmatprep.subr.bf16.mxu0 %v1752
      %3167 = vmatpush1.bf16.msra.mxu0 %v1751
      %3168 = vmatprep.subr.bf16.mxu0 %v1760
      %3169 = vmatpush1.bf16.msra.mxu0 %v1759
      %3170 = vmatprep.subr.bf16.mxu0 %v1768
      %3171 = vmatpush1.bf16.msra.mxu0 %v1767
      %3172 = vmatprep.subr.bf16.mxu0 %v1776
      %3173 = vmatpush1.bf16.msra.mxu0 %v1775
      %3174 = vmatprep.subr.bf16.mxu0 %v1784
      %3175 = vmatpush1.bf16.msra.mxu0 %v1783
      %3176 = vmatprep.subr.bf16.mxu0 %v1792
      %3177 = vmatpush1.bf16.msra.mxu0 %v1791
      %3178 = vmatprep.subr.bf16.mxu0 %v1800
      %3179 = vmatpush1.bf16.msra.mxu0 %v1799
      %3180 = vmatprep.subr.bf16.mxu0 %v1808
      %3181 = vmatpush1.bf16.msra.mxu0 %v1807
      %3182 = vmatprep.subr.bf16.mxu0 %v1816
      %3183 = vmatpush1.bf16.msra.mxu0 %v1815
      %3184 = vmatprep.subr.bf16.mxu0 %v1824
      %3185 = vmatpush1.bf16.msra.mxu0 %v1823
      %3186 = vmatprep.subr.bf16.mxu0 %v1832
      %3187 = vmatpush1.bf16.msra.mxu0 %v1831
      %3188 = vmatprep.subr.bf16.mxu0 %v1840
      %3189 = vmatpush1.bf16.msra.mxu0 %v1839
      %3190 = vmatprep.subr.bf16.mxu0 %v1848
      %3191 = vmatpush1.bf16.msra.mxu0 %v1847
      %3192 = vmatprep.subr.bf16.mxu0 %v1856
      %3193 = vmatpush1.bf16.msra.mxu0 %v1855
      %3194 = vmatprep.mubr.bf16.mxu0 %v3036
      %3195 = vmatmul.mubr.bf16.gmra.mrb[0].mxu0 %v3035
      %v3196 = vpop.f32.mrb[0].mxu0
      %v3197 = vadd.f32 0.0, %v3196
      %v3198 = vpop.f32.mrb[0].mxu0
      %v3199 = vadd.f32 0.0, %v3198
      %v3200 = vpop.f32.mrb[0].mxu0
      %v3201 = vpop.f32.mrb[0].mxu0
      %3202 = vdwg.mxu0
      %v3203 = vadd.f32 %v3023, %v3074
      %v3204 = vadd.f32 %v3024, %v3076
      %v3205 = vadd.f32 %v3025, %v3115
      %v3206 = vadd.f32 %v3026, %v3117
      %v3207 = vadd.f32 %v3027, %v3156
      %v3208 = vadd.f32 %v3028, %v3158
      %v3209 = vadd.f32 %v3029, %v3197
      %v3210 = vadd.f32 %v3030, %v3199
      %v3211 = vxor.u32 %v3203, 2147483648
      %v3212 = vxor.u32 %v3204, 2147483648
      %v3213 = vmul.f32 %v3211, 1.442695
      %v3214 = vpow.pop %v3213
      %v3215 = vmul.f32 %v3212, 1.442695
      %v3216 = vpow.pop %v3215
      %v3217 = vadd.f32 %v3214, 1.0
      %v3218 = vadd.f32 %v3216, 1.0
      %v3219 = vrcp.pop %v3217
      %v3220 = vmul.f32 1.0, %v3219
      %v3221 = vrcp.pop %v3218
      %v3222 = vmul.f32 1.0, %v3221
      %v3223 = vxor.u32 %v3205, 2147483648
      %v3224 = vxor.u32 %v3206, 2147483648
      %v3225 = vmul.f32 %v3223, 1.442695
      %v3226 = vpow.pop %v3225
      %v3227 = vmul.f32 %v3224, 1.442695
      %v3228 = vpow.pop %v3227
      %v3229 = vadd.f32 %v3226, 1.0
      %v3230 = vadd.f32 %v3228, 1.0
      %v3231 = vrcp.pop %v3229
      %v3232 = vmul.f32 1.0, %v3231
      %v3233 = vrcp.pop %v3230
      %v3234 = vmul.f32 1.0, %v3233
      %v3235 = vtanh.pop %v3207
      %v3236 = vtanh.pop %v3208
      %v3237 = vxor.u32 %v3209, 2147483648
      %v3238 = vxor.u32 %v3210, 2147483648
      %v3239 = vmul.f32 %v3237, 1.442695
      %v3240 = vpow.pop %v3239
      %v3241 = vmul.f32 %v3238, 1.442695
      %v3242 = vpow.pop %v3241
      %v3243 = vadd.f32 %v3240, 1.0
      %v3244 = vadd.f32 %v3242, 1.0
      %v3245 = vrcp.pop %v3243
      %v3246 = vmul.f32 1.0, %v3245
      %v3247 = vrcp.pop %v3244
      %v3248 = vmul.f32 1.0, %v3247
      %v3251 = vrot.slane %v3009, 6
      %v3252 = vrot.slane %v3010, 6
      %v3255 = vmul.f32 %v3232, %v3251
      %v3256 = vmul.f32 %v3234, %v3252
      %v3257 = vmul.f32 %v3220, %v3235
      %v3258 = vmul.f32 %v3222, %v3236
      %v3259 = vadd.f32 %v3255, %v3257
      %v3260 = vadd.f32 %v3256, %v3258
      %v3261 = vtanh.pop %v3259
      %v3262 = vtanh.pop %v3260
      %v3263 = vmul.f32 %v3246, %v3261
      %v3264 = vmul.f32 %v3248, %v3262
      %v3265 = vmax.f32 %v3021, %v3263
      %v3266 = vmax.f32 %v3022, %v3264
      %v3267 = vld [vmem:[#allocation2 + $0x40] sm:$0xc]
      %v3268 = vld [vmem:[#allocation2 + $0x48] sm:$0xc]
      %v3269 = vld [vmem:[#allocation2 + $0x50] sm:$0xc]
      %v3270 = vld [vmem:[#allocation2 + $0x58] sm:$0xc]
      %v3271 = vld [vmem:[#allocation2 + $0x60] sm:$0xc]
      %v3272 = vld [vmem:[#allocation2 + $0x68] sm:$0xc]
      %v3273 = vld [vmem:[#allocation2 + $0x70] sm:$0xc]
      %v3274 = vld [vmem:[#allocation2 + $0x78] sm:$0xc]
      %v3275 = vpack.c.bf16 %v3263, %v3263
      %v3276 = vpack.c.bf16 %v3264, %v3264
      %3277 = vmatprep.subr.bf16.mxu0 %v1730
      %3278 = vmatpush1.bf16.msra.mxu0 %v1729
      %3279 = vmatprep.subr.bf16.mxu0 %v1738
      %3280 = vmatpush1.bf16.msra.mxu0 %v1737
      %3281 = vmatprep.subr.bf16.mxu0 %v1746
      %3282 = vmatpush1.bf16.msra.mxu0 %v1745
      %3283 = vmatprep.subr.bf16.mxu0 %v1754
      %3284 = vmatpush1.bf16.msra.mxu0 %v1753
      %3285 = vmatprep.subr.bf16.mxu0 %v1762
      %3286 = vmatpush1.bf16.msra.mxu0 %v1761
      %3287 = vmatprep.subr.bf16.mxu0 %v1770
      %3288 = vmatpush1.bf16.msra.mxu0 %v1769
      %3289 = vmatprep.subr.bf16.mxu0 %v1778
      %3290 = vmatpush1.bf16.msra.mxu0 %v1777
      %3291 = vmatprep.subr.bf16.mxu0 %v1786
      %3292 = vmatpush1.bf16.msra.mxu0 %v1785
      %3293 = vmatprep.subr.bf16.mxu0 %v1794
      %3294 = vmatpush1.bf16.msra.mxu0 %v1793
      %3295 = vmatprep.subr.bf16.mxu0 %v1802
      %3296 = vmatpush1.bf16.msra.mxu0 %v1801
      %3297 = vmatprep.subr.bf16.mxu0 %v1810
      %3298 = vmatpush1.bf16.msra.mxu0 %v1809
      %3299 = vmatprep.subr.bf16.mxu0 %v1818
      %3300 = vmatpush1.bf16.msra.mxu0 %v1817
      %3301 = vmatprep.subr.bf16.mxu0 %v1826
      %3302 = vmatpush1.bf16.msra.mxu0 %v1825
      %3303 = vmatprep.subr.bf16.mxu0 %v1834
      %3304 = vmatpush1.bf16.msra.mxu0 %v1833
      %3305 = vmatprep.subr.bf16.mxu0 %v1842
      %3306 = vmatpush1.bf16.msra.mxu0 %v1841
      %3307 = vmatprep.subr.bf16.mxu0 %v1850
      %3308 = vmatpush1.bf16.msra.mxu0 %v1849
      %3309 = vmatprep.mubr.bf16.mxu0 %v3276
      %3310 = vmatmul.mubr.bf16.gmra.mrb[0].mxu0 %v3275
      %v3311 = vpop.f32.mrb[0].mxu0
      %v3312 = vadd.f32 0.0, %v3311
      %v3313 = vpop.f32.mrb[0].mxu0
      %v3314 = vadd.f32 0.0, %v3313
      %v3315 = vpop.f32.mrb[0].mxu0
      %v3316 = vpop.f32.mrb[0].mxu0
      %3317 = vdwg.mxu0
      %3318 = vmatprep.subr.bf16.mxu0 %v1732
      %3319 = vmatpush1.bf16.msra.mxu0 %v1731
      %3320 = vmatprep.subr.bf16.mxu0 %v1740
      %3321 = vmatpush1.bf16.msra.mxu0 %v1739
      %3322 = vmatprep.subr.bf16.mxu0 %v1748
      %3323 = vmatpush1.bf16.msra.mxu0 %v1747
      %3324 = vmatprep.subr.bf16.mxu0 %v1756
      %3325 = vmatpush1.bf16.msra.mxu0 %v1755
      %3326 = vmatprep.subr.bf16.mxu0 %v1764
      %3327 = vmatpush1.bf16.msra.mxu0 %v1763
      %3328 = vmatprep.subr.bf16.mxu0 %v1772
      %3329 = vmatpush1.bf16.msra.mxu0 %v1771
      %3330 = vmatprep.subr.bf16.mxu0 %v1780
      %3331 = vmatpush1.bf16.msra.mxu0 %v1779
      %3332 = vmatprep.subr.bf16.mxu0 %v1788
      %3333 = vmatpush1.bf16.msra.mxu0 %v1787
      %3334 = vmatprep.subr.bf16.mxu0 %v1796
      %3335 = vmatpush1.bf16.msra.mxu0 %v1795
      %3336 = vmatprep.subr.bf16.mxu0 %v1804
      %3337 = vmatpush1.bf16.msra.mxu0 %v1803
      %3338 = vmatprep.subr.bf16.mxu0 %v1812
      %3339 = vmatpush1.bf16.msra.mxu0 %v1811
      %3340 = vmatprep.subr.bf16.mxu0 %v1820
      %3341 = vmatpush1.bf16.msra.mxu0 %v1819
      %3342 = vmatprep.subr.bf16.mxu0 %v1828
      %3343 = vmatpush1.bf16.msra.mxu0 %v1827
      %3344 = vmatprep.subr.bf16.mxu0 %v1836
      %3345 = vmatpush1.bf16.msra.mxu0 %v1835
      %3346 = vmatprep.subr.bf16.mxu0 %v1844
      %3347 = vmatpush1.bf16.msra.mxu0 %v1843
      %3348 = vmatprep.subr.bf16.mxu0 %v1852
      %3349 = vmatpush1.bf16.msra.mxu0 %v1851
      %3350 = vmatprep.mubr.bf16.mxu0 %v3276
      %3351 = vmatmul.mubr.bf16.gmra.mrb[0].mxu0 %v3275
      %v3352 = vpop.f32.mrb[0].mxu0
      %v3353 = vadd.f32 0.0, %v3352
      %v3354 = vpop.f32.mrb[0].mxu0
      %v3355 = vadd.f32 0.0, %v3354
      %v3356 = vpop.f32.mrb[0].mxu0
      %v3357 = vpop.f32.mrb[0].mxu0
      %3358 = vdwg.mxu0
      %3359 = vmatprep.subr.bf16.mxu0 %v1734
      %3360 = vmatpush1.bf16.msra.mxu0 %v1733
      %3361 = vmatprep.subr.bf16.mxu0 %v1742
      %3362 = vmatpush1.bf16.msra.mxu0 %v1741
      %3363 = vmatprep.subr.bf16.mxu0 %v1750
      %3364 = vmatpush1.bf16.msra.mxu0 %v1749
      %3365 = vmatprep.subr.bf16.mxu0 %v1758
      %3366 = vmatpush1.bf16.msra.mxu0 %v1757
      %3367 = vmatprep.subr.bf16.mxu0 %v1766
      %3368 = vmatpush1.bf16.msra.mxu0 %v1765
      %3369 = vmatprep.subr.bf16.mxu0 %v1774
      %3370 = vmatpush1.bf16.msra.mxu0 %v1773
      %3371 = vmatprep.subr.bf16.mxu0 %v1782
      %3372 = vmatpush1.bf16.msra.mxu0 %v1781
      %3373 = vmatprep.subr.bf16.mxu0 %v1790
      %3374 = vmatpush1.bf16.msra.mxu0 %v1789
      %3375 = vmatprep.subr.bf16.mxu0 %v1798
      %3376 = vmatpush1.bf16.msra.mxu0 %v1797
      %3377 = vmatprep.subr.bf16.mxu0 %v1806
      %3378 = vmatpush1.bf16.msra.mxu0 %v1805
      %3379 = vmatprep.subr.bf16.mxu0 %v1814
      %3380 = vmatpush1.bf16.msra.mxu0 %v1813
      %3381 = vmatprep.subr.bf16.mxu0 %v1822
      %3382 = vmatpush1.bf16.msra.mxu0 %v1821
      %3383 = vmatprep.subr.bf16.mxu0 %v1830
      %3384 = vmatpush1.bf16.msra.mxu0 %v1829
      %3385 = vmatprep.subr.bf16.mxu0 %v1838
      %3386 = vmatpush1.bf16.msra.mxu0 %v1837
      %3387 = vmatprep.subr.bf16.mxu0 %v1846
      %3388 = vmatpush1.bf16.msra.mxu0 %v1845
      %3389 = vmatprep.subr.bf16.mxu0 %v1854
      %3390 = vmatpush1.bf16.msra.mxu0 %v1853
      %3391 = vmatprep.mubr.bf16.mxu0 %v3276
      %3392 = vmatmul.mubr.bf16.gmra.mrb[0].mxu0 %v3275
      %v3393 = vpop.f32.mrb[0].mxu0
      %v3394 = vadd.f32 0.0, %v3393
      %v3395 = vpop.f32.mrb[0].mxu0
      %v3396 = vadd.f32 0.0, %v3395
      %v3397 = vpop.f32.mrb[0].mxu0
      %v3398 = vpop.f32.mrb[0].mxu0
      %3399 = vdwg.mxu0
      %3400 = vmatprep.subr.bf16.mxu0 %v1736
      %3401 = vmatpush1.bf16.msra.mxu0 %v1735
      %3402 = vmatprep.subr.bf16.mxu0 %v1744
      %3403 = vmatpush1.bf16.msra.mxu0 %v1743
      %3404 = vmatprep.subr.bf16.mxu0 %v1752
      %3405 = vmatpush1.bf16.msra.mxu0 %v1751
      %3406 = vmatprep.subr.bf16.mxu0 %v1760
      %3407 = vmatpush1.bf16.msra.mxu0 %v1759
      %3408 = vmatprep.subr.bf16.mxu0 %v1768
      %3409 = vmatpush1.bf16.msra.mxu0 %v1767
      %3410 = vmatprep.subr.bf16.mxu0 %v1776
      %3411 = vmatpush1.bf16.msra.mxu0 %v1775
      %3412 = vmatprep.subr.bf16.mxu0 %v1784
      %3413 = vmatpush1.bf16.msra.mxu0 %v1783
      %3414 = vmatprep.subr.bf16.mxu0 %v1792
      %3415 = vmatpush1.bf16.msra.mxu0 %v1791
      %3416 = vmatprep.subr.bf16.mxu0 %v1800
      %3417 = vmatpush1.bf16.msra.mxu0 %v1799
      %3418 = vmatprep.subr.bf16.mxu0 %v1808
      %3419 = vmatpush1.bf16.msra.mxu0 %v1807
      %3420 = vmatprep.subr.bf16.mxu0 %v1816
      %3421 = vmatpush1.bf16.msra.mxu0 %v1815
      %3422 = vmatprep.subr.bf16.mxu0 %v1824
      %3423 = vmatpush1.bf16.msra.mxu0 %v1823
      %3424 = vmatprep.subr.bf16.mxu0 %v1832
      %3425 = vmatpush1.bf16.msra.mxu0 %v1831
      %3426 = vmatprep.subr.bf16.mxu0 %v1840
      %3427 = vmatpush1.bf16.msra.mxu0 %v1839
      %3428 = vmatprep.subr.bf16.mxu0 %v1848
      %3429 = vmatpush1.bf16.msra.mxu0 %v1847
      %3430 = vmatprep.subr.bf16.mxu0 %v1856
      %3431 = vmatpush1.bf16.msra.mxu0 %v1855
      %3432 = vmatprep.mubr.bf16.mxu0 %v3276
      %3433 = vmatmul.mubr.bf16.gmra.mrb[0].mxu0 %v3275
      %v3434 = vpop.f32.mrb[0].mxu0
      %v3435 = vadd.f32 0.0, %v3434
      %v3436 = vpop.f32.mrb[0].mxu0
      %v3437 = vadd.f32 0.0, %v3436
      %v3438 = vpop.f32.mrb[0].mxu0
      %v3439 = vpop.f32.mrb[0].mxu0
      %3440 = vdwg.mxu0
      %v3449 = vrot.slane %v3312, 6
      %v3450 = vrot.slane %v3314, 6
      %v3451 = vrot.slane %v3353, 6
      %v3452 = vrot.slane %v3355, 6
      %v3453 = vrot.slane %v3394, 6
      %v3454 = vrot.slane %v3396, 6
      %v3455 = vrot.slane %v3435, 6
      %v3456 = vrot.slane %v3437, 6
      %v3465 = vadd.f32 %v3267, %v3449
      %v3466 = vadd.f32 %v3268, %v3450
      %v3467 = vadd.f32 %v3269, %v3451
      %v3468 = vadd.f32 %v3270, %v3452
      %v3469 = vadd.f32 %v3271, %v3453
      %v3470 = vadd.f32 %v3272, %v3454
      %v3471 = vadd.f32 %v3273, %v3455
      %v3472 = vadd.f32 %v3274, %v3456
      %v3473 = vxor.u32 %v3465, 2147483648
      %v3474 = vxor.u32 %v3466, 2147483648
      %v3475 = vmul.f32 %v3473, 1.442695
      %v3476 = vpow.pop %v3475
      %v3477 = vmul.f32 %v3474, 1.442695
      %v3478 = vpow.pop %v3477
      %v3479 = vadd.f32 %v3476, 1.0
      %v3480 = vadd.f32 %v3478, 1.0
      %v3481 = vrcp.pop %v3479
      %v3482 = vmul.f32 1.0, %v3481
      %v3483 = vrcp.pop %v3480
      %v3484 = vmul.f32 1.0, %v3483
      %v3485 = vxor.u32 %v3467, 2147483648
      %v3486 = vxor.u32 %v3468, 2147483648
      %v3487 = vmul.f32 %v3485, 1.442695
      %v3488 = vpow.pop %v3487
      %v3489 = vmul.f32 %v3486, 1.442695
      %v3490 = vpow.pop %v3489
      %v3491 = vadd.f32 %v3488, 1.0
      %v3492 = vadd.f32 %v3490, 1.0
      %v3493 = vrcp.pop %v3491
      %v3494 = vmul.f32 1.0, %v3493
      %v3495 = vrcp.pop %v3492
      %v3496 = vmul.f32 1.0, %v3495
      %v3497 = vtanh.pop %v3469
      %v3498 = vtanh.pop %v3470
      %v3499 = vxor.u32 %v3471, 2147483648
      %v3500 = vxor.u32 %v3472, 2147483648
      %v3501 = vmul.f32 %v3499, 1.442695
      %v3502 = vpow.pop %v3501
      %v3503 = vmul.f32 %v3500, 1.442695
      %v3504 = vpow.pop %v3503
      %v3505 = vadd.f32 %v3502, 1.0
      %v3506 = vadd.f32 %v3504, 1.0
      %v3507 = vrcp.pop %v3505
      %v3508 = vmul.f32 1.0, %v3507
      %v3509 = vrcp.pop %v3506
      %v3510 = vmul.f32 1.0, %v3509
      %v3513 = vrot.slane %v3259, 6
      %v3514 = vrot.slane %v3260, 6
      %v3517 = vmul.f32 %v3494, %v3513
      %v3518 = vmul.f32 %v3496, %v3514
      %v3519 = vmul.f32 %v3482, %v3497
      %v3520 = vmul.f32 %v3484, %v3498
      %v3521 = vadd.f32 %v3517, %v3519
      %v3522 = vadd.f32 %v3518, %v3520
      %v3523 = vtanh.pop %v3521
      %v3524 = vtanh.pop %v3522
      %v3525 = vmul.f32 %v3508, %v3523
      %v3526 = vmul.f32 %v3510, %v3524
      %v3529 = vrot.slane %v3525, 2
      %v3530 = vrot.slane %v3526, 2
      %v3533 = vmax.f32 %v3265, %v3529
      %v3534 = vmax.f32 %v3266, %v3530
      %v3535 = vld [vmem:[#allocation2 + $0x40] sm:$0x30]
      %v3536 = vld [vmem:[#allocation2 + $0x48] sm:$0x30]
      %v3537 = vld [vmem:[#allocation2 + $0x50] sm:$0x30]
      %v3538 = vld [vmem:[#allocation2 + $0x58] sm:$0x30]
      %v3539 = vld [vmem:[#allocation2 + $0x60] sm:$0x30]
      %v3540 = vld [vmem:[#allocation2 + $0x68] sm:$0x30]
      %v3541 = vld [vmem:[#allocation2 + $0x70] sm:$0x30]
      %v3542 = vld [vmem:[#allocation2 + $0x78] sm:$0x30]
      %v3543 = vpack.c.bf16 %v3525, %v3525
      %v3544 = vpack.c.bf16 %v3526, %v3526
      %v3547 = vrot.slane %v3543, 1
      %v3548 = vrot.slane %v3544, 1
      %3551 = vmatprep.subr.bf16.mxu0 %v1730
      %3552 = vmatpush1.bf16.msra.mxu0 %v1729
      %3553 = vmatprep.subr.bf16.mxu0 %v1738
      %3554 = vmatpush1.bf16.msra.mxu0 %v1737
      %3555 = vmatprep.subr.bf16.mxu0 %v1746
      %3556 = vmatpush1.bf16.msra.mxu0 %v1745
      %3557 = vmatprep.subr.bf16.mxu0 %v1754
      %3558 = vmatpush1.bf16.msra.mxu0 %v1753
      %3559 = vmatprep.subr.bf16.mxu0 %v1762
      %3560 = vmatpush1.bf16.msra.mxu0 %v1761
      %3561 = vmatprep.subr.bf16.mxu0 %v1770
      %3562 = vmatpush1.bf16.msra.mxu0 %v1769
      %3563 = vmatprep.subr.bf16.mxu0 %v1778
      %3564 = vmatpush1.bf16.msra.mxu0 %v1777
      %3565 = vmatprep.subr.bf16.mxu0 %v1786
      %3566 = vmatpush1.bf16.msra.mxu0 %v1785
      %3567 = vmatprep.subr.bf16.mxu0 %v1794
      %3568 = vmatpush1.bf16.msra.mxu0 %v1793
      %3569 = vmatprep.subr.bf16.mxu0 %v1802
      %3570 = vmatpush1.bf16.msra.mxu0 %v1801
      %3571 = vmatprep.subr.bf16.mxu0 %v1810
      %3572 = vmatpush1.bf16.msra.mxu0 %v1809
      %3573 = vmatprep.subr.bf16.mxu0 %v1818
      %3574 = vmatpush1.bf16.msra.mxu0 %v1817
      %3575 = vmatprep.subr.bf16.mxu0 %v1826
      %3576 = vmatpush1.bf16.msra.mxu0 %v1825
      %3577 = vmatprep.subr.bf16.mxu0 %v1834
      %3578 = vmatpush1.bf16.msra.mxu0 %v1833
      %3579 = vmatprep.subr.bf16.mxu0 %v1842
      %3580 = vmatpush1.bf16.msra.mxu0 %v1841
      %3581 = vmatprep.subr.bf16.mxu0 %v1850
      %3582 = vmatpush1.bf16.msra.mxu0 %v1849
      %3583 = vmatprep.mubr.bf16.mxu0 %v3548
      %3584 = vmatmul.mubr.bf16.gmra.mrb[0].mxu0 %v3547
      %v3585 = vpop.f32.mrb[0].mxu0
      %v3586 = vadd.f32 0.0, %v3585
      %v3587 = vpop.f32.mrb[0].mxu0
      %v3588 = vadd.f32 0.0, %v3587
      %v3589 = vpop.f32.mrb[0].mxu0
      %v3590 = vpop.f32.mrb[0].mxu0
      %3591 = vdwg.mxu0
      %3592 = vmatprep.subr.bf16.mxu0 %v1732
      %3593 = vmatpush1.bf16.msra.mxu0 %v1731
      %3594 = vmatprep.subr.bf16.mxu0 %v1740
      %3595 = vmatpush1.bf16.msra.mxu0 %v1739
      %3596 = vmatprep.subr.bf16.mxu0 %v1748
      %3597 = vmatpush1.bf16.msra.mxu0 %v1747
      %3598 = vmatprep.subr.bf16.mxu0 %v1756
      %3599 = vmatpush1.bf16.msra.mxu0 %v1755
      %3600 = vmatprep.subr.bf16.mxu0 %v1764
      %3601 = vmatpush1.bf16.msra.mxu0 %v1763
      %3602 = vmatprep.subr.bf16.mxu0 %v1772
      %3603 = vmatpush1.bf16.msra.mxu0 %v1771
      %3604 = vmatprep.subr.bf16.mxu0 %v1780
      %3605 = vmatpush1.bf16.msra.mxu0 %v1779
      %3606 = vmatprep.subr.bf16.mxu0 %v1788
      %3607 = vmatpush1.bf16.msra.mxu0 %v1787
      %3608 = vmatprep.subr.bf16.mxu0 %v1796
      %3609 = vmatpush1.bf16.msra.mxu0 %v1795
      %3610 = vmatprep.subr.bf16.mxu0 %v1804
      %3611 = vmatpush1.bf16.msra.mxu0 %v1803
      %3612 = vmatprep.subr.bf16.mxu0 %v1812
      %3613 = vmatpush1.bf16.msra.mxu0 %v1811
      %3614 = vmatprep.subr.bf16.mxu0 %v1820
      %3615 = vmatpush1.bf16.msra.mxu0 %v1819
      %3616 = vmatprep.subr.bf16.mxu0 %v1828
      %3617 = vmatpush1.bf16.msra.mxu0 %v1827
      %3618 = vmatprep.subr.bf16.mxu0 %v1836
      %3619 = vmatpush1.bf16.msra.mxu0 %v1835
      %3620 = vmatprep.subr.bf16.mxu0 %v1844
      %3621 = vmatpush1.bf16.msra.mxu0 %v1843
      %3622 = vmatprep.subr.bf16.mxu0 %v1852
      %3623 = vmatpush1.bf16.msra.mxu0 %v1851
      %3624 = vmatprep.mubr.bf16.mxu0 %v3548
      %3625 = vmatmul.mubr.bf16.gmra.mrb[0].mxu0 %v3547
      %v3626 = vpop.f32.mrb[0].mxu0
      %v3627 = vadd.f32 0.0, %v3626
      %v3628 = vpop.f32.mrb[0].mxu0
      %v3629 = vadd.f32 0.0, %v3628
      %v3630 = vpop.f32.mrb[0].mxu0
      %v3631 = vpop.f32.mrb[0].mxu0
      %3632 = vdwg.mxu0
      %3633 = vmatprep.subr.bf16.mxu0 %v1734
      %3634 = vmatpush1.bf16.msra.mxu0 %v1733
      %3635 = vmatprep.subr.bf16.mxu0 %v1742
      %3636 = vmatpush1.bf16.msra.mxu0 %v1741
      %3637 = vmatprep.subr.bf16.mxu0 %v1750
      %3638 = vmatpush1.bf16.msra.mxu0 %v1749
      %3639 = vmatprep.subr.bf16.mxu0 %v1758
      %3640 = vmatpush1.bf16.msra.mxu0 %v1757
      %3641 = vmatprep.subr.bf16.mxu0 %v1766
      %3642 = vmatpush1.bf16.msra.mxu0 %v1765
      %3643 = vmatprep.subr.bf16.mxu0 %v1774
      %3644 = vmatpush1.bf16.msra.mxu0 %v1773
      %3645 = vmatprep.subr.bf16.mxu0 %v1782
      %3646 = vmatpush1.bf16.msra.mxu0 %v1781
      %3647 = vmatprep.subr.bf16.mxu0 %v1790
      %3648 = vmatpush1.bf16.msra.mxu0 %v1789
      %3649 = vmatprep.subr.bf16.mxu0 %v1798
      %3650 = vmatpush1.bf16.msra.mxu0 %v1797
      %3651 = vmatprep.subr.bf16.mxu0 %v1806
      %3652 = vmatpush1.bf16.msra.mxu0 %v1805
      %3653 = vmatprep.subr.bf16.mxu0 %v1814
      %3654 = vmatpush1.bf16.msra.mxu0 %v1813
      %3655 = vmatprep.subr.bf16.mxu0 %v1822
      %3656 = vmatpush1.bf16.msra.mxu0 %v1821
      %3657 = vmatprep.subr.bf16.mxu0 %v1830
      %3658 = vmatpush1.bf16.msra.mxu0 %v1829
      %3659 = vmatprep.subr.bf16.mxu0 %v1838
      %3660 = vmatpush1.bf16.msra.mxu0 %v1837
      %3661 = vmatprep.subr.bf16.mxu0 %v1846
      %3662 = vmatpush1.bf16.msra.mxu0 %v1845
      %3663 = vmatprep.subr.bf16.mxu0 %v1854
      %3664 = vmatpush1.bf16.msra.mxu0 %v1853
      %3665 = vmatprep.mubr.bf16.mxu0 %v3548
      %3666 = vmatmul.mubr.bf16.gmra.mrb[0].mxu0 %v3547
      %v3667 = vpop.f32.mrb[0].mxu0
      %v3668 = vadd.f32 0.0, %v3667
      %v3669 = vpop.f32.mrb[0].mxu0
      %v3670 = vadd.f32 0.0, %v3669
      %v3671 = vpop.f32.mrb[0].mxu0
      %v3672 = vpop.f32.mrb[0].mxu0
      %3673 = vdwg.mxu0
      %3674 = vmatprep.subr.bf16.mxu0 %v1736
      %3675 = vmatpush1.bf16.msra.mxu0 %v1735
      %3676 = vmatprep.subr.bf16.mxu0 %v1744
      %3677 = vmatpush1.bf16.msra.mxu0 %v1743
      %3678 = vmatprep.subr.bf16.mxu0 %v1752
      %3679 = vmatpush1.bf16.msra.mxu0 %v1751
      %3680 = vmatprep.subr.bf16.mxu0 %v1760
      %3681 = vmatpush1.bf16.msra.mxu0 %v1759
      %3682 = vmatprep.subr.bf16.mxu0 %v1768
      %3683 = vmatpush1.bf16.msra.mxu0 %v1767
      %3684 = vmatprep.subr.bf16.mxu0 %v1776
      %3685 = vmatpush1.bf16.msra.mxu0 %v1775
      %3686 = vmatprep.subr.bf16.mxu0 %v1784
      %3687 = vmatpush1.bf16.msra.mxu0 %v1783
      %3688 = vmatprep.subr.bf16.mxu0 %v1792
      %3689 = vmatpush1.bf16.msra.mxu0 %v1791
      %3690 = vmatprep.subr.bf16.mxu0 %v1800
      %3691 = vmatpush1.bf16.msra.mxu0 %v1799
      %3692 = vmatprep.subr.bf16.mxu0 %v1808
      %3693 = vmatpush1.bf16.msra.mxu0 %v1807
      %3694 = vmatprep.subr.bf16.mxu0 %v1816
      %3695 = vmatpush1.bf16.msra.mxu0 %v1815
      %3696 = vmatprep.subr.bf16.mxu0 %v1824
      %3697 = vmatpush1.bf16.msra.mxu0 %v1823
      %3698 = vmatprep.subr.bf16.mxu0 %v1832
      %3699 = vmatpush1.bf16.msra.mxu0 %v1831
      %3700 = vmatprep.subr.bf16.mxu0 %v1840
      %3701 = vmatpush1.bf16.msra.mxu0 %v1839
      %3702 = vmatprep.subr.bf16.mxu0 %v1848
      %3703 = vmatpush1.bf16.msra.mxu0 %v1847
      %3704 = vmatprep.subr.bf16.mxu0 %v1856
      %3705 = vmatpush1.bf16.msra.mxu0 %v1855
      %3706 = vmatprep.mubr.bf16.mxu0 %v3548
      %3707 = vmatmul.mubr.bf16.gmra.mrb[0].mxu0 %v3547
      %v3708 = vpop.f32.mrb[0].mxu0
      %v3709 = vadd.f32 0.0, %v3708
      %v3710 = vpop.f32.mrb[0].mxu0
      %v3711 = vadd.f32 0.0, %v3710
      %v3712 = vpop.f32.mrb[0].mxu0
      %v3713 = vpop.f32.mrb[0].mxu0
      %3714 = vdwg.mxu0
      %v3723 = vrot.slane %v3586, 4
      %v3724 = vrot.slane %v3588, 4
      %v3725 = vrot.slane %v3627, 4
      %v3726 = vrot.slane %v3629, 4
      %v3727 = vrot.slane %v3668, 4
      %v3728 = vrot.slane %v3670, 4
      %v3729 = vrot.slane %v3709, 4
      %v3730 = vrot.slane %v3711, 4
      %v3739 = vadd.f32 %v3535, %v3723
      %v3740 = vadd.f32 %v3536, %v3724
      %v3741 = vadd.f32 %v3537, %v3725
      %v3742 = vadd.f32 %v3538, %v3726
      %v3743 = vadd.f32 %v3539, %v3727
      %v3744 = vadd.f32 %v3540, %v3728
      %v3745 = vadd.f32 %v3541, %v3729
      %v3746 = vadd.f32 %v3542, %v3730
      %v3747 = vxor.u32 %v3739, 2147483648
      %v3748 = vxor.u32 %v3740, 2147483648
      %v3749 = vmul.f32 %v3747, 1.442695
      %v3750 = vpow.pop %v3749
      %v3751 = vmul.f32 %v3748, 1.442695
      %v3752 = vpow.pop %v3751
      %v3753 = vadd.f32 %v3750, 1.0
      %v3754 = vadd.f32 %v3752, 1.0
      %v3755 = vrcp.pop %v3753
      %v3756 = vmul.f32 1.0, %v3755
      %v3757 = vrcp.pop %v3754
      %v3758 = vmul.f32 1.0, %v3757
      %v3759 = vxor.u32 %v3741, 2147483648
      %v3760 = vxor.u32 %v3742, 2147483648
      %v3761 = vmul.f32 %v3759, 1.442695
      %v3762 = vpow.pop %v3761
      %v3763 = vmul.f32 %v3760, 1.442695
      %v3764 = vpow.pop %v3763
      %v3765 = vadd.f32 %v3762, 1.0
      %v3766 = vadd.f32 %v3764, 1.0
      %v3767 = vrcp.pop %v3765
      %v3768 = vmul.f32 1.0, %v3767
      %v3769 = vrcp.pop %v3766
      %v3770 = vmul.f32 1.0, %v3769
      %v3771 = vtanh.pop %v3743
      %v3772 = vtanh.pop %v3744
      %v3773 = vxor.u32 %v3745, 2147483648
      %v3774 = vxor.u32 %v3746, 2147483648
      %v3775 = vmul.f32 %v3773, 1.442695
      %v3776 = vpow.pop %v3775
      %v3777 = vmul.f32 %v3774, 1.442695
      %v3778 = vpow.pop %v3777
      %v3779 = vadd.f32 %v3776, 1.0
      %v3780 = vadd.f32 %v3778, 1.0
      %v3781 = vrcp.pop %v3779
      %v3782 = vmul.f32 1.0, %v3781
      %v3783 = vrcp.pop %v3780
      %v3784 = vmul.f32 1.0, %v3783
      %v3787 = vrot.slane %v3521, 6
      %v3788 = vrot.slane %v3522, 6
      %v3791 = vmul.f32 %v3768, %v3787
      %v3792 = vmul.f32 %v3770, %v3788
      %v3793 = vmul.f32 %v3756, %v3771
      %v3794 = vmul.f32 %v3758, %v3772
      %v3795 = vadd.f32 %v3791, %v3793
      %v3796 = vadd.f32 %v3792, %v3794
      %v3797 = vtanh.pop %v3795
      %v3798 = vtanh.pop %v3796
      %v3799 = vmul.f32 %v3782, %v3797
      %v3800 = vmul.f32 %v3784, %v3798
      %v3803 = vrot.slane %v3799, 4
      %v3804 = vrot.slane %v3800, 4
      %v3807 = vmax.f32 %v3533, %v3803
      %v3808 = vmax.f32 %v3534, %v3804
      %v3809 = vld [vmem:[#allocation2 + $0x40] sm:$0xc0]
      %v3810 = vld [vmem:[#allocation2 + $0x48] sm:$0xc0]
      %v3811 = vld [vmem:[#allocation2 + $0x50] sm:$0xc0]
      %v3812 = vld [vmem:[#allocation2 + $0x58] sm:$0xc0]
      %v3813 = vld [vmem:[#allocation2 + $0x60] sm:$0xc0]
      %v3814 = vld [vmem:[#allocation2 + $0x68] sm:$0xc0]
      %v3815 = vld [vmem:[#allocation2 + $0x70] sm:$0xc0]
      %v3816 = vld [vmem:[#allocation2 + $0x78] sm:$0xc0]
      %v3817 = vpack.c.bf16 %v3799, %v3799
      %v3818 = vpack.c.bf16 %v3800, %v3800
      %v3821 = vrot.slane %v3817, 2
      %v3822 = vrot.slane %v3818, 2
      %3825 = vmatprep.subr.bf16.mxu0 %v1730
      %3826 = vmatpush1.bf16.msra.mxu0 %v1729
      %3827 = vmatprep.subr.bf16.mxu0 %v1738
      %3828 = vmatpush1.bf16.msra.mxu0 %v1737
      %3829 = vmatprep.subr.bf16.mxu0 %v1746
      %3830 = vmatpush1.bf16.msra.mxu0 %v1745
      %3831 = vmatprep.subr.bf16.mxu0 %v1754
      %3832 = vmatpush1.bf16.msra.mxu0 %v1753
      %3833 = vmatprep.subr.bf16.mxu0 %v1762
      %3834 = vmatpush1.bf16.msra.mxu0 %v1761
      %3835 = vmatprep.subr.bf16.mxu0 %v1770
      %3836 = vmatpush1.bf16.msra.mxu0 %v1769
      %3837 = vmatprep.subr.bf16.mxu0 %v1778
      %3838 = vmatpush1.bf16.msra.mxu0 %v1777
      %3839 = vmatprep.subr.bf16.mxu0 %v1786
      %3840 = vmatpush1.bf16.msra.mxu0 %v1785
      %3841 = vmatprep.subr.bf16.mxu0 %v1794
      %3842 = vmatpush1.bf16.msra.mxu0 %v1793
      %3843 = vmatprep.subr.bf16.mxu0 %v1802
      %3844 = vmatpush1.bf16.msra.mxu0 %v1801
      %3845 = vmatprep.subr.bf16.mxu0 %v1810
      %3846 = vmatpush1.bf16.msra.mxu0 %v1809
      %3847 = vmatprep.subr.bf16.mxu0 %v1818
      %3848 = vmatpush1.bf16.msra.mxu0 %v1817
      %3849 = vmatprep.subr.bf16.mxu0 %v1826
      %3850 = vmatpush1.bf16.msra.mxu0 %v1825
      %3851 = vmatprep.subr.bf16.mxu0 %v1834
      %3852 = vmatpush1.bf16.msra.mxu0 %v1833
      %3853 = vmatprep.subr.bf16.mxu0 %v1842
      %3854 = vmatpush1.bf16.msra.mxu0 %v1841
      %3855 = vmatprep.subr.bf16.mxu0 %v1850
      %3856 = vmatpush1.bf16.msra.mxu0 %v1849
      %3857 = vmatprep.mubr.bf16.mxu0 %v3822
      %3858 = vmatmul.mubr.bf16.gmra.mrb[0].mxu0 %v3821
      %v3859 = vpop.f32.mrb[0].mxu0
      %v3860 = vadd.f32 0.0, %v3859
      %v3861 = vpop.f32.mrb[0].mxu0
      %v3862 = vadd.f32 0.0, %v3861
      %v3863 = vpop.f32.mrb[0].mxu0
      %v3864 = vpop.f32.mrb[0].mxu0
      %3865 = vdwg.mxu0
      %3866 = vmatprep.subr.bf16.mxu0 %v1732
      %3867 = vmatpush1.bf16.msra.mxu0 %v1731
      %3868 = vmatprep.subr.bf16.mxu0 %v1740
      %3869 = vmatpush1.bf16.msra.mxu0 %v1739
      %3870 = vmatprep.subr.bf16.mxu0 %v1748
      %3871 = vmatpush1.bf16.msra.mxu0 %v1747
      %3872 = vmatprep.subr.bf16.mxu0 %v1756
      %3873 = vmatpush1.bf16.msra.mxu0 %v1755
      %3874 = vmatprep.subr.bf16.mxu0 %v1764
      %3875 = vmatpush1.bf16.msra.mxu0 %v1763
      %3876 = vmatprep.subr.bf16.mxu0 %v1772
      %3877 = vmatpush1.bf16.msra.mxu0 %v1771
      %3878 = vmatprep.subr.bf16.mxu0 %v1780
      %3879 = vmatpush1.bf16.msra.mxu0 %v1779
      %3880 = vmatprep.subr.bf16.mxu0 %v1788
      %3881 = vmatpush1.bf16.msra.mxu0 %v1787
      %3882 = vmatprep.subr.bf16.mxu0 %v1796
      %3883 = vmatpush1.bf16.msra.mxu0 %v1795
      %3884 = vmatprep.subr.bf16.mxu0 %v1804
      %3885 = vmatpush1.bf16.msra.mxu0 %v1803
      %3886 = vmatprep.subr.bf16.mxu0 %v1812
      %3887 = vmatpush1.bf16.msra.mxu0 %v1811
      %3888 = vmatprep.subr.bf16.mxu0 %v1820
      %3889 = vmatpush1.bf16.msra.mxu0 %v1819
      %3890 = vmatprep.subr.bf16.mxu0 %v1828
      %3891 = vmatpush1.bf16.msra.mxu0 %v1827
      %3892 = vmatprep.subr.bf16.mxu0 %v1836
      %3893 = vmatpush1.bf16.msra.mxu0 %v1835
      %3894 = vmatprep.subr.bf16.mxu0 %v1844
      %3895 = vmatpush1.bf16.msra.mxu0 %v1843
      %3896 = vmatprep.subr.bf16.mxu0 %v1852
      %3897 = vmatpush1.bf16.msra.mxu0 %v1851
      %3898 = vmatprep.mubr.bf16.mxu0 %v3822
      %3899 = vmatmul.mubr.bf16.gmra.mrb[0].mxu0 %v3821
      %v3900 = vpop.f32.mrb[0].mxu0
      %v3901 = vadd.f32 0.0, %v3900
      %v3902 = vpop.f32.mrb[0].mxu0
      %v3903 = vadd.f32 0.0, %v3902
      %v3904 = vpop.f32.mrb[0].mxu0
      %v3905 = vpop.f32.mrb[0].mxu0
      %3906 = vdwg.mxu0
      %3907 = vmatprep.subr.bf16.mxu0 %v1734
      %3908 = vmatpush1.bf16.msra.mxu0 %v1733
      %3909 = vmatprep.subr.bf16.mxu0 %v1742
      %3910 = vmatpush1.bf16.msra.mxu0 %v1741
      %3911 = vmatprep.subr.bf16.mxu0 %v1750
      %3912 = vmatpush1.bf16.msra.mxu0 %v1749
      %3913 = vmatprep.subr.bf16.mxu0 %v1758
      %3914 = vmatpush1.bf16.msra.mxu0 %v1757
      %3915 = vmatprep.subr.bf16.mxu0 %v1766
      %3916 = vmatpush1.bf16.msra.mxu0 %v1765
      %3917 = vmatprep.subr.bf16.mxu0 %v1774
      %3918 = vmatpush1.bf16.msra.mxu0 %v1773
      %3919 = vmatprep.subr.bf16.mxu0 %v1782
      %3920 = vmatpush1.bf16.msra.mxu0 %v1781
      %3921 = vmatprep.subr.bf16.mxu0 %v1790
      %3922 = vmatpush1.bf16.msra.mxu0 %v1789
      %3923 = vmatprep.subr.bf16.mxu0 %v1798
      %3924 = vmatpush1.bf16.msra.mxu0 %v1797
      %3925 = vmatprep.subr.bf16.mxu0 %v1806
      %3926 = vmatpush1.bf16.msra.mxu0 %v1805
      %3927 = vmatprep.subr.bf16.mxu0 %v1814
      %3928 = vmatpush1.bf16.msra.mxu0 %v1813
      %3929 = vmatprep.subr.bf16.mxu0 %v1822
      %3930 = vmatpush1.bf16.msra.mxu0 %v1821
      %3931 = vmatprep.subr.bf16.mxu0 %v1830
      %3932 = vmatpush1.bf16.msra.mxu0 %v1829
      %3933 = vmatprep.subr.bf16.mxu0 %v1838
      %3934 = vmatpush1.bf16.msra.mxu0 %v1837
      %3935 = vmatprep.subr.bf16.mxu0 %v1846
      %3936 = vmatpush1.bf16.msra.mxu0 %v1845
      %3937 = vmatprep.subr.bf16.mxu0 %v1854
      %3938 = vmatpush1.bf16.msra.mxu0 %v1853
      %3939 = vmatprep.mubr.bf16.mxu0 %v3822
      %3940 = vmatmul.mubr.bf16.gmra.mrb[0].mxu0 %v3821
      %v3941 = vpop.f32.mrb[0].mxu0
      %v3942 = vadd.f32 0.0, %v3941
      %v3943 = vpop.f32.mrb[0].mxu0
      %v3944 = vadd.f32 0.0, %v3943
      %v3945 = vpop.f32.mrb[0].mxu0
      %v3946 = vpop.f32.mrb[0].mxu0
      %3947 = vdwg.mxu0
      %3948 = vmatprep.subr.bf16.mxu0 %v1736
      %3949 = vmatpush1.bf16.msra.mxu0 %v1735
      %3950 = vmatprep.subr.bf16.mxu0 %v1744
      %3951 = vmatpush1.bf16.msra.mxu0 %v1743
      %3952 = vmatprep.subr.bf16.mxu0 %v1752
      %3953 = vmatpush1.bf16.msra.mxu0 %v1751
      %3954 = vmatprep.subr.bf16.mxu0 %v1760
      %3955 = vmatpush1.bf16.msra.mxu0 %v1759
      %3956 = vmatprep.subr.bf16.mxu0 %v1768
      %3957 = vmatpush1.bf16.msra.mxu0 %v1767
      %3958 = vmatprep.subr.bf16.mxu0 %v1776
      %3959 = vmatpush1.bf16.msra.mxu0 %v1775
      %3960 = vmatprep.subr.bf16.mxu0 %v1784
      %3961 = vmatpush1.bf16.msra.mxu0 %v1783
      %3962 = vmatprep.subr.bf16.mxu0 %v1792
      %3963 = vmatpush1.bf16.msra.mxu0 %v1791
      %3964 = vmatprep.subr.bf16.mxu0 %v1800
      %3965 = vmatpush1.bf16.msra.mxu0 %v1799
      %3966 = vmatprep.subr.bf16.mxu0 %v1808
      %3967 = vmatpush1.bf16.msra.mxu0 %v1807
      %3968 = vmatprep.subr.bf16.mxu0 %v1816
      %3969 = vmatpush1.bf16.msra.mxu0 %v1815
      %3970 = vmatprep.subr.bf16.mxu0 %v1824
      %3971 = vmatpush1.bf16.msra.mxu0 %v1823
      %3972 = vmatprep.subr.bf16.mxu0 %v1832
      %3973 = vmatpush1.bf16.msra.mxu0 %v1831
      %3974 = vmatprep.subr.bf16.mxu0 %v1840
      %3975 = vmatpush1.bf16.msra.mxu0 %v1839
      %3976 = vmatprep.subr.bf16.mxu0 %v1848
      %3977 = vmatpush1.bf16.msra.mxu0 %v1847
      %3978 = vmatprep.subr.bf16.mxu0 %v1856
      %3979 = vmatpush1.bf16.msra.mxu0 %v1855
      %3980 = vmatprep.mubr.bf16.mxu0 %v3822
      %3981 = vmatmul.mubr.bf16.gmra.mrb[0].mxu0 %v3821
      %v3982 = vpop.f32.mrb[0].mxu0
      %v3983 = vadd.f32 0.0, %v3982
      %v3984 = vpop.f32.mrb[0].mxu0
      %v3985 = vadd.f32 0.0, %v3984
      %v3986 = vpop.f32.mrb[0].mxu0
      %v3987 = vpop.f32.mrb[0].mxu0
      %3988 = vdwg.mxu0
      %v3997 = vrot.slane %v3860, 2
      %v3998 = vrot.slane %v3862, 2
      %v3999 = vrot.slane %v3901, 2
      %v4000 = vrot.slane %v3903, 2
      %v4001 = vrot.slane %v3942, 2
      %v4002 = vrot.slane %v3944, 2
      %v4003 = vrot.slane %v3983, 2
      %v4004 = vrot.slane %v3985, 2
      %v4013 = vadd.f32 %v3809, %v3997
      %v4014 = vadd.f32 %v3810, %v3998
      %v4015 = vadd.f32 %v3811, %v3999
      %v4016 = vadd.f32 %v3812, %v4000
      %v4017 = vadd.f32 %v3813, %v4001
      %v4018 = vadd.f32 %v3814, %v4002
      %v4019 = vadd.f32 %v3815, %v4003
      %v4020 = vadd.f32 %v3816, %v4004
      %v4021 = vxor.u32 %v4013, 2147483648
      %v4022 = vxor.u32 %v4014, 2147483648
      %v4023 = vmul.f32 %v4021, 1.442695
      %v4024 = vpow.pop %v4023
      %v4025 = vmul.f32 %v4022, 1.442695
      %v4026 = vpow.pop %v4025
      %v4027 = vadd.f32 %v4024, 1.0
      %v4028 = vadd.f32 %v4026, 1.0
      %v4029 = vrcp.pop %v4027
      %v4030 = vmul.f32 1.0, %v4029
      %v4031 = vrcp.pop %v4028
      %v4032 = vmul.f32 1.0, %v4031
      %v4033 = vxor.u32 %v4015, 2147483648
      %v4034 = vxor.u32 %v4016, 2147483648
      %v4035 = vmul.f32 %v4033, 1.442695
      %v4036 = vpow.pop %v4035
      %v4037 = vmul.f32 %v4034, 1.442695
      %v4038 = vpow.pop %v4037
      %v4039 = vadd.f32 %v4036, 1.0
      %v4040 = vadd.f32 %v4038, 1.0
      %v4041 = vrcp.pop %v4039
      %v4042 = vmul.f32 1.0, %v4041
      %v4043 = vrcp.pop %v4040
      %v4044 = vmul.f32 1.0, %v4043
      %v4045 = vtanh.pop %v4017
      %v4046 = vtanh.pop %v4018
      %v4047 = vxor.u32 %v4019, 2147483648
      %v4048 = vxor.u32 %v4020, 2147483648
      %v4049 = vmul.f32 %v4047, 1.442695
      %v4050 = vpow.pop %v4049
      %v4051 = vmul.f32 %v4048, 1.442695
      %v4052 = vpow.pop %v4051
      %v4053 = vadd.f32 %v4050, 1.0
      %v4054 = vadd.f32 %v4052, 1.0
      %v4055 = vrcp.pop %v4053
      %v4056 = vmul.f32 1.0, %v4055
      %v4057 = vrcp.pop %v4054
      %v4058 = vmul.f32 1.0, %v4057
      %v4061 = vrot.slane %v3795, 6
      %v4062 = vrot.slane %v3796, 6
      %v4065 = vmul.f32 %v4042, %v4061
      %v4066 = vmul.f32 %v4044, %v4062
      %v4067 = vmul.f32 %v4030, %v4045
      %v4068 = vmul.f32 %v4032, %v4046
      %v4069 = vadd.f32 %v4065, %v4067
      %v4070 = vadd.f32 %v4066, %v4068
      %v4071 = vtanh.pop %v4069
      %v4072 = vtanh.pop %v4070
      %v4073 = vmul.f32 %v4056, %v4071
      %v4074 = vmul.f32 %v4058, %v4072
      %v4077 = vrot.slane %v4073, 6
      %v4078 = vrot.slane %v4074, 6
      %v4081 = vmax.f32 %v3807, %v4077
      %v4082 = vmax.f32 %v3808, %v4078
      %v4085 = vcombine.low %v4081, %v4082
      %v4087 = vunpack.c.l.s4 1983009808
      %v4088 = vunpack.c.0.s8 %v4087
      %v4089 = vlaneseq
      %v4090 = vshrl.u32 %v4089, 7
      %v4091 = vsub.s32 %v4088, %v4090
      %v4092 = vrot.slane %v4085, %v4091
      %4094 = vst [vmem:[%s197] sm:$0xf] %v4092
      %p4095 = scmp.lt.s32.totalorder %s15, 1
      %s4096 = scalar_select %p4095, %s15, 1
      %s4097 = smul.addr %s4096, 2
      %s4098 = smul.addr %s4097, 2
      %s4099 = scalar_lea.vmem %s4, %s4098
      // Predicated region
      $region37: #{siamese_forward.2} parent=35 // pred_check
        %p4100 = pneg %p122
      $region38: #{siamese_forward.2} parent=35 // pred_check_branch
        %4102 = sbr.rel (%p4100) target = $region40
      $region39: #{siamese_forward.2} parent=35 // pred_region
        _
      $region40: #{siamese_forward.2} parent=35 // pred_fallthru
        _
    $region36: #{siamese_forward.2} parent=5 // pred_fallthru
      _
    %p4103 = scmp.le.s32.totalorder 2, %s10
    // Predicated region
    $region41: #{siamese_forward.2} parent=5 // pred_check
      %p4104 = pneg %p4103
    $region42: #{siamese_forward.2} parent=5 // pred_check_branch
      %4106 = sbr.rel (%p4104) target = $region44
    $region43: #{siamese_forward.2} parent=5 // pred_region
      %s4107 = ssub.s32 %s10, 2
      // Predicated region
      $region45: #{siamese_forward.2} parent=43 // pred_check
        %p4108 = pneg %p128
      $region46: #{siamese_forward.2} parent=43 // pred_check_branch
        %4110 = sbr.rel (%p4108) target = $region48
      $region47: #{siamese_forward.2} parent=43 // pred_region
        %p4111 = scmp.lt.s32.totalorder %s16, 1
        %s4112 = scalar_select %p4111, %s16, 1
        %s4113 = smul.addr %s4112, 2
        %s4114 = smul.addr %s4113, 2
        %s4115 = scalar_lea.vmem %s4, %s4114
      $region48: #{siamese_forward.2} parent=43 // pred_fallthru
        _
    $region44: #{siamese_forward.2} parent=5 // pred_fallthru
      _
  $region6: #{siamese_forward.2} parent=0 // loop_footer
    %s14 = sadd.s32 1, %s10
  $region7: #{siamese_forward.2} parent=0 // loop_footer_branch
    %9 = sbr.rel target = $region3
  $region8: #{siamese_forward.2} parent=0 // loop_exit
    _

</llo_original>
